<compile_context>
chip_gen: v7x
topology: tpu7x:2x2x1
jax: 0.10.0
libtpu: 0.0.40
codegen_flags: <defaults>
</compile_context>

<pallas_src>
import functools

import jax
import jax.numpy as jnp
import numpy as np
from jax.experimental import pallas as pl
from jax.experimental.pallas import tpu as pltpu


# ----------------------------------------------------------------------------
# Parameter packing (done ONCE, outside the hot forward path).
# ----------------------------------------------------------------------------
def _band_weights(w_hwio, width):
    """(3,3,Cin,Cout) HWIO conv weights -> (3, (width+1)*Cin, width*Cout) bands.

    Activations are stored row-major as (rows, width*Cin) with one shared zero
    lane-group of Cin lanes at the tail.  band[dy][w_in*Cin+ci, w_out*Cout+co]
    = w[dy, dx, ci, co] with w_in = w_out + dx - 1; taps falling outside
    [0, width) are dropped (they would read the zero border).  A SAME-padded
    3x3 conv then becomes
        y[r] = sum_dy  rows[r + dy - 1] @ band[dy]
    i.e. three lane-dense 2D MXU matmuls per conv.
    """
    _, _, cin, cout = w_hwio.shape
    bands = []
    for dy in range(3):
        m = jnp.zeros(((width + 1) * cin, width * cout), jnp.float32)
        for dx in range(3):
            e = jnp.concatenate(
                [jnp.eye(width, width, k=1 - dx, dtype=jnp.float32),
                 jnp.zeros((1, width), jnp.float32)], axis=0)
            m = m + jnp.kron(e, w_hwio[dy, dx])
        bands.append(m)
    return jnp.stack(bands)  # (3, (width+1)*Cin, width*Cout)


def pack_params(params, width):
    """Pack BasicBlock params into the banded / lane-tiled kernel layout.

    Call once and reuse across forward calls (the kron packing costs more than
    the kernel itself at small shapes).  Weights go to bf16 (halves the
    dominant weight DMA, doubles the MXU rate on v6e/v7x); biases and PReLU
    slopes stay f32 for an f32 epilogue.
    """
    w_post, b_post, a_post = params["post"]
    cin = params["main"][0][0].shape[2]
    wmain = jnp.stack([_band_weights(w, width) for (w, _, _) in params["main"]])
    bmain = jnp.stack([jnp.tile(b, width)[None, :] for (_, b, _) in params["main"]])
    amain = jnp.stack([jnp.tile(a, width)[None, :] for (_, _, a) in params["main"]])
    wpost = jnp.stack([
        _band_weights(w_post[:, :, s * cin:(s + 1) * cin, :], width)
        for s in range(4)
    ])
    return {
        "wmain": wmain.astype(jnp.bfloat16),
        "bmain": bmain,
        "amain": amain,
        "wpost": wpost.astype(jnp.bfloat16),
        "bpost": jnp.tile(b_post, width)[None, :],
        "apost": jnp.tile(a_post, width)[None, :],
    }


# ----------------------------------------------------------------------------
# Fused kernel: B images per grid step, everything resident in VMEM.
# ----------------------------------------------------------------------------
def _basic_block_kernel(x_ref, wm_ref, bm_ref, am_ref, wp_ref, bp_ref, ap_ref,
                        o_ref, buf_ref, acc_ref, *, B, H, W, Cin):
    """
    x_ref  : (B*H, W*Cin)              bf16   stacked row-major image slabs
    wm_ref : (3, 3, (W+1)*Cin, W*Cin)  bf16   banded main-layer weights
    bm_ref : (3, 1, W*Cin)             f32    main biases (tiled across W)
    am_ref : (3, 1, W*Cin)             f32    main PReLU slopes (tiled)
    wp_ref : (4, 3, (W+1)*Cin, W*Cout) bf16   banded post weights per concat src
    bp_ref : (1, W*Cout)               f32
    ap_ref : (1, W*Cout)               f32
    o_ref  : (B*H, W*Cout)             f32    lane-dense output
    buf_ref: (B*H+16, (W+1)*Cin)       bf16   zero-bordered activation scratch
    acc_ref: (B*H, W*Cout)             f32    post-conv accumulator
    """
    M = B * H
    WCin = W * Cin
    Kb = buf_ref.shape[1]

    # --- Zero only the pad border; the interior is always overwritten. ------
    buf_ref[0:8, :] = jnp.zeros((8, Kb), buf_ref.dtype)                 # top
    buf_ref[8 + M:16 + M, :] = jnp.zeros((8, Kb), buf_ref.dtype)        # bottom
    buf_ref[8:8 + M, WCin:Kb] = jnp.zeros((M, Kb - WCin), buf_ref.dtype)  # lane pad
    # Interior write: sublane start 8, lane start 0 -> (8,128)-aligned store.
    buf_ref[8:8 + M, 0:WCin] = x_ref[...]

    # Row masks: kill the vertical taps that would leak across stacked images
    # (an image's first row has no "up" neighbour, its last row no "down").
    row = jax.lax.broadcasted_iota(jnp.int32, (M, 1), 0)
    mask_up = jnp.ones((M, 1), jnp.float32)
    mask_dn = jnp.ones((M, 1), jnp.float32)
    for b in range(B):
        mask_up = mask_up * (row != b * H).astype(jnp.float32)
        mask_dn = mask_dn * (row != b * H + H - 1).astype(jnp.float32)

    def band_conv(get_w):
        # SAME 3x3 conv == 3 banded MXU matmuls over dy-shifted row windows.
        up = jnp.dot(buf_ref[7:7 + M, :], get_w(0),
                     preferred_element_type=jnp.float32)
        mid = jnp.dot(buf_ref[8:8 + M, :], get_w(1),
                      preferred_element_type=jnp.float32)
        dn = jnp.dot(buf_ref[9:9 + M, :], get_w(2),
                     preferred_element_type=jnp.float32)
        return mask_up * up + mid + mask_dn * dn

    # Post-layer contribution of concat source 0 (= x itself).
    acc_ref[...] = band_conv(lambda dy: wp_ref[0, dy])

    # Three conv+PReLU layers.  Each new activation overwrites the scratch
    # interior and immediately adds its post contribution, so the channel
    # concat is never materialised.
    for l in range(3):
        h = band_conv(lambda dy, l=l: wm_ref[l, dy])
        h = h + bm_ref[l]                               # f32 epilogue
        h = jnp.where(h >= 0.0, h, am_ref[l] * h)       # per-channel PReLU
        buf_ref[8:8 + M, 0:WCin] = h.astype(buf_ref.dtype)
        acc_ref[...] = acc_ref[...] + band_conv(lambda dy, l=l: wp_ref[l + 1, dy])

    y = acc_ref[...] + bp_ref[...]
    y = jnp.where(y >= 0.0, y, ap_ref[...] * y)
    o_ref[...] = y.astype(o_ref.dtype)                  # lane-dense, aligned


# ----------------------------------------------------------------------------
# Wrapper: NCHW in / NCHW out, single pallas_call for the whole block.
# ----------------------------------------------------------------------------
def _pick_images_per_step(n, h, target_rows=128):
    """Largest divisor B of n with B*h <= max(target_rows, h) (fills MXU M)."""
    best = 1
    for b in range(1, n + 1):
        if n % b == 0 and b * h <= max(target_rows, h):
            best = b
    return best


def basic_block_forward(x_nchw, packed):
    N, Cin, H, W = x_nchw.shape
    wmain, bmain, amain = packed["wmain"], packed["bmain"], packed["amain"]
    wpost, bpost, apost = packed["wpost"], packed["bpost"], packed["apost"]
    WCin = W * Cin
    WCout = bpost.shape[-1]
    Cout = WCout // W

    B = _pick_images_per_step(N, H)   # images folded into the matmul M dim
    M = B * H

    # NCHW -> (N*H, W*Cin) row-major activation slabs, bf16 on the wire.
    # TODO(synk): carry the (N*H, W*C) layout through the surrounding model to
    # drop this HBM transpose (and the inverse one below).
    x_rows = jnp.transpose(x_nchw, (0, 2, 3, 1)).reshape(N * H, WCin)
    x_rows = x_rows.astype(jnp.bfloat16)

    kernel = functools.partial(_basic_block_kernel, B=B, H=H, W=W, Cin=Cin)
    out = pl.pallas_call(
        kernel,
        out_shape=jax.ShapeDtypeStruct((N * H, WCout), jnp.float32),
        grid_spec=pltpu.PrefetchScalarGridSpec(
            num_scalar_prefetch=0,
            grid=(N // B,),
            in_specs=[
                pl.BlockSpec((M, WCin), lambda n: (n, 0)),
                # Constant-index parameter blocks (whole array every step).
                pl.BlockSpec(wmain.shape, lambda n: (0, 0, 0, 0)),
                pl.BlockSpec(bmain.shape, lambda n: (0, 0, 0)),
                pl.BlockSpec(amain.shape, lambda n: (0, 0, 0)),
                pl.BlockSpec(wpost.shape, lambda n: (0, 0, 0, 0)),
                pl.BlockSpec(bpost.shape, lambda n: (0, 0)),
                pl.BlockSpec(apost.shape, lambda n: (0, 0)),
            ],
            out_specs=pl.BlockSpec((M, WCout), lambda n: (n, 0)),
            scratch_shapes=[
                pltpu.VMEM((M + 16, (W + 1) * Cin), jnp.bfloat16),  # padded acts
                pltpu.VMEM((M, WCout), jnp.float32),                # post accum
            ],
        ),
        compiler_params=pltpu.CompilerParams(
            dimension_semantics=("parallel",)),
    )(x_rows, wmain, bmain, amain, wpost, bpost, apost)

    # (N*H, W*Cout) -> NCHW
    out = out.reshape(N, H, W, Cout)
    return jnp.transpose(out, (0, 3, 1, 2)).astype(x_nchw.dtype)


# ----------------------------------------------------------------------------
# Parameters and pure-JAX reference.
# ----------------------------------------------------------------------------
def init_params(key, in_channels, out_channels):
    """Deterministic synthetic parameters (PReLU slope = 0.25 as in PyTorch)."""
    params = {"main": [], "post": None}
    for _ in range(3):
        key, kw, kb = jax.random.split(key, 3)
        w = 0.1 * jax.random.normal(kw, (3, 3, in_channels, in_channels), jnp.float32)
        b = 0.05 * jax.random.normal(kb, (in_channels,), jnp.float32)
        a = jnp.full((in_channels,), 0.25, jnp.float32)
        params["main"].append((w, b, a))
    key, kw, kb = jax.random.split(key, 3)
    w = 0.1 * jax.random.normal(kw, (3, 3, 4 * in_channels, out_channels), jnp.float32)
    b = 0.05 * jax.random.normal(kb, (out_channels,), jnp.float32)
    a = jnp.full((out_channels,), 0.25, jnp.float32)
    params["post"] = (w, b, a)
    return params


def _reference_forward(x_nchw, params):
    """Pure-JAX f32 reference (lax conv) for the correctness check."""
    def conv_prelu(x, w, b, a):
        y = jax.lax.conv_general_dilated(
            x, w, window_strides=(1, 1), padding="SAME",
            dimension_numbers=("NHWC", "HWIO", "NHWC"))
        y = y + b.reshape(1, 1, 1, -1)
        return jnp.where(y >= 0.0, y, a.reshape(1, 1, 1, -1) * y)

    x = jnp.transpose(x_nchw, (0, 2, 3, 1))
    outs = [x]
    h = x
    for (w, b, a) in params["main"]:
        h = conv_prelu(h, w, b, a)
        outs.append(h)
    cat = jnp.concatenate(outs, axis=-1)
    w, b, a = params["post"]
    y = conv_prelu(cat, w, b, a)
    return jnp.transpose(y, (0, 3, 1, 2))


if __name__ == "__main__":
    N, Cin, H, W = 2, 4, 16, 16
    Cout = 8

    key = jax.random.PRNGKey(0)
    key, kx = jax.random.split(key)
    x = jax.random.normal(kx, (N, Cin, H, W), jnp.float32)  # NCHW like PyTorch

    params = init_params(key, Cin, Cout)
    packed = pack_params(params, W)          # packed ONCE, reused every call

    fwd = jax.jit(basic_block_forward)
    out = jax.block_until_ready(fwd(x, packed))

    assert out.shape == (N, Cout, H, W), out.shape

    ref = _reference_forward(x, params)
    # bf16 weights/activations with f32 accumulation -> loosened tolerance.
    np.testing.assert_allclose(np.asarray(out), np.asarray(ref),
                               rtol=5e-2, atol=5e-2)

    print("KERNEL_OK")
</pallas_src>

<mosaic_0001>
module attributes {stable_mosaic.version = 11 : i64} {
  func.func @_basic_block_kernel(%arg0: i32, %arg1: memref<32x64xbf16, #tpu.memory_space<vmem>>, %arg2: memref<3x3x68x64xbf16, #tpu.memory_space<vmem>>, %arg3: memref<3x1x64xf32, #tpu.memory_space<vmem>>, %arg4: memref<3x1x64xf32, #tpu.memory_space<vmem>>, %arg5: memref<4x3x68x128xbf16, #tpu.memory_space<vmem>>, %arg6: memref<1x128xf32, #tpu.memory_space<vmem>>, %arg7: memref<1x128xf32, #tpu.memory_space<vmem>>, %arg8: memref<32x128xf32, #tpu.memory_space<vmem>>, %arg9: memref<48x68xbf16, #tpu.memory_space<vmem>>, %arg10: memref<32x128xf32, #tpu.memory_space<vmem>>) attributes {dimension_semantics = [#tpu.dimension_semantics<parallel>], iteration_bounds = array<i64: 1>, scalar_prefetch = 0 : i64, scratch_operands = 2 : i64, tpu.core_type = #tpu.core_type<tc>, window_params = [{transform_indices = @transform_0, window_bounds = array<i64: 32, 64>}, {pipeline_mode = #tpu.pipeline_mode<synchronous>, transform_indices = @transform_1, window_bounds = array<i64: 3, 3, 68, 64>}, {pipeline_mode = #tpu.pipeline_mode<synchronous>, transform_indices = @transform_2, window_bounds = array<i64: 3, 1, 64>}, {pipeline_mode = #tpu.pipeline_mode<synchronous>, transform_indices = @transform_3, window_bounds = array<i64: 3, 1, 64>}, {pipeline_mode = #tpu.pipeline_mode<synchronous>, transform_indices = @transform_4, window_bounds = array<i64: 4, 3, 68, 128>}, {pipeline_mode = #tpu.pipeline_mode<synchronous>, transform_indices = @transform_5, window_bounds = array<i64: 1, 128>}, {pipeline_mode = #tpu.pipeline_mode<synchronous>, transform_indices = @transform_6, window_bounds = array<i64: 1, 128>}, {transform_indices = @transform_7, window_bounds = array<i64: 32, 128>}]} {
    %cst = arith.constant 0.000000e+00 : bf16
    %0 = vector.broadcast %cst : bf16 to vector<8x68xbf16>
    %c0 = arith.constant 0 : index
    %c0_0 = arith.constant 0 : index
    %1 = vector.load %arg9[%c0, %c0_0] : memref<48x68xbf16, #tpu.memory_space<vmem>>, vector<8x68xbf16>
    tpu.vector_store %arg9[%c0, %c0_0], %0 {strides = array<i32>} : memref<48x68xbf16, #tpu.memory_space<vmem>>, vector<8x68xbf16>,
    %cst_1 = arith.constant 0.000000e+00 : bf16
    %2 = vector.broadcast %cst_1 : bf16 to vector<8x68xbf16>
    %c40 = arith.constant 40 : index
    %c0_2 = arith.constant 0 : index
    %3 = vector.load %arg9[%c40, %c0_2] : memref<48x68xbf16, #tpu.memory_space<vmem>>, vector<8x68xbf16>
    tpu.vector_store %arg9[%c40, %c0_2], %2 {strides = array<i32>} : memref<48x68xbf16, #tpu.memory_space<vmem>>, vector<8x68xbf16>,
    %cst_3 = arith.constant 0.000000e+00 : bf16
    %4 = vector.broadcast %cst_3 : bf16 to vector<32x4xbf16>
    %c8 = arith.constant 8 : index
    %c64 = arith.constant 64 : index
    %5 = vector.load %arg9[%c8, %c64] : memref<48x68xbf16, #tpu.memory_space<vmem>>, vector<32x4xbf16>
    tpu.vector_store %arg9[%c8, %c64], %4 {strides = array<i32>} : memref<48x68xbf16, #tpu.memory_space<vmem>>, vector<32x4xbf16>,
    %c0_4 = arith.constant 0 : index
    %c0_5 = arith.constant 0 : index
    %6 = vector.load %arg1[%c0_4, %c0_5] : memref<32x64xbf16, #tpu.memory_space<vmem>>, vector<32x64xbf16>
    %c8_6 = arith.constant 8 : index
    %c0_7 = arith.constant 0 : index
    %7 = vector.load %arg9[%c8_6, %c0_7] : memref<48x68xbf16, #tpu.memory_space<vmem>>, vector<32x64xbf16>
    tpu.vector_store %arg9[%c8_6, %c0_7], %6 {strides = array<i32>} : memref<48x68xbf16, #tpu.memory_space<vmem>>, vector<32x64xbf16>,
    %8 = tpu.iota {dimensions = array<i32: 0>} : vector<32x1xi32>
    %cst_8 = arith.constant 1.000000e+00 : f32
    %9 = vector.broadcast %cst_8 : f32 to vector<32x1xf32>
    %cst_9 = arith.constant 1.000000e+00 : f32
    %10 = vector.broadcast %cst_9 : f32 to vector<32x1xf32>
    %c0_i32 = arith.constant 0 : i32
    %11 = vector.broadcast %c0_i32 : i32 to vector<32x1xi32>
    %12 = arith.cmpi ne, %8, %11 : vector<32x1xi32>
    %13 = arith.extui %12 : vector<32x1xi1> to vector<32x1xi32>
    %14 = arith.sitofp %13 : vector<32x1xi32> to vector<32x1xf32>
    %15 = arith.mulf %9, %14 : vector<32x1xf32>
    %c15_i32 = arith.constant 15 : i32
    %16 = vector.broadcast %c15_i32 : i32 to vector<32x1xi32>
    %17 = arith.cmpi ne, %8, %16 : vector<32x1xi32>
    %18 = arith.extui %17 : vector<32x1xi1> to vector<32x1xi32>
    %19 = arith.sitofp %18 : vector<32x1xi32> to vector<32x1xf32>
    %20 = arith.mulf %10, %19 : vector<32x1xf32>
    %c16_i32 = arith.constant 16 : i32
    %21 = vector.broadcast %c16_i32 : i32 to vector<32x1xi32>
    %22 = arith.cmpi ne, %8, %21 : vector<32x1xi32>
    %23 = arith.extui %22 : vector<32x1xi1> to vector<32x1xi32>
    %24 = arith.sitofp %23 : vector<32x1xi32> to vector<32x1xf32>
    %25 = arith.mulf %15, %24 : vector<32x1xf32>
    %c31_i32 = arith.constant 31 : i32
    %26 = vector.broadcast %c31_i32 : i32 to vector<32x1xi32>
    %27 = arith.cmpi ne, %8, %26 : vector<32x1xi32>
    %28 = arith.extui %27 : vector<32x1xi1> to vector<32x1xi32>
    %29 = arith.sitofp %28 : vector<32x1xi32> to vector<32x1xf32>
    %30 = arith.mulf %20, %29 : vector<32x1xf32>
    %c7 = arith.constant 7 : index
    %c0_10 = arith.constant 0 : index
    %31 = vector.load %arg9[%c7, %c0_10] : memref<48x68xbf16, #tpu.memory_space<vmem>>, vector<32x68xbf16>
    %c0_11 = arith.constant 0 : index
    %c0_12 = arith.constant 0 : index
    %c0_13 = arith.constant 0 : index
    %c0_14 = arith.constant 0 : index
    %32 = vector.load %arg5[%c0_11, %c0_12, %c0_13, %c0_14] : memref<4x3x68x128xbf16, #tpu.memory_space<vmem>>, vector<1x1x68x128xbf16>
    %33 = vector.shape_cast %32 : vector<1x1x68x128xbf16> to vector<68x128xbf16>
    %cst_15 = arith.constant dense<0.000000e+00> : vector<32x128xf32>
    %34 = tpu.matmul %31, %33, %cst_15 {dimension_numbers = #tpu.dot_dimension_numbers<[1], [0], [0], [1], [0, 0, 1, 1], [], []>} : vector<32x68xbf16>, vector<68x128xbf16>, vector<32x128xf32> -> vector<32x128xf32>
    %c8_16 = arith.constant 8 : index
    %c0_17 = arith.constant 0 : index
    %35 = vector.load %arg9[%c8_16, %c0_17] : memref<48x68xbf16, #tpu.memory_space<vmem>>, vector<32x68xbf16>
    %c0_18 = arith.constant 0 : index
    %c1 = arith.constant 1 : index
    %c0_19 = arith.constant 0 : index
    %c0_20 = arith.constant 0 : index
    %36 = vector.load %arg5[%c0_18, %c1, %c0_19, %c0_20] : memref<4x3x68x128xbf16, #tpu.memory_space<vmem>>, vector<1x1x68x128xbf16>
    %37 = vector.shape_cast %36 : vector<1x1x68x128xbf16> to vector<68x128xbf16>
    %cst_21 = arith.constant dense<0.000000e+00> : vector<32x128xf32>
    %38 = tpu.matmul %35, %37, %cst_21 {dimension_numbers = #tpu.dot_dimension_numbers<[1], [0], [0], [1], [0, 0, 1, 1], [], []>} : vector<32x68xbf16>, vector<68x128xbf16>, vector<32x128xf32> -> vector<32x128xf32>
    %c9 = arith.constant 9 : index
    %c0_22 = arith.constant 0 : index
    %39 = vector.load %arg9[%c9, %c0_22] : memref<48x68xbf16, #tpu.memory_space<vmem>>, vector<32x68xbf16>
    %c0_23 = arith.constant 0 : index
    %c2 = arith.constant 2 : index
    %c0_24 = arith.constant 0 : index
    %c0_25 = arith.constant 0 : index
    %40 = vector.load %arg5[%c0_23, %c2, %c0_24, %c0_25] : memref<4x3x68x128xbf16, #tpu.memory_space<vmem>>, vector<1x1x68x128xbf16>
    %41 = vector.shape_cast %40 : vector<1x1x68x128xbf16> to vector<68x128xbf16>
    %cst_26 = arith.constant dense<0.000000e+00> : vector<32x128xf32>
    %42 = tpu.matmul %39, %41, %cst_26 {dimension_numbers = #tpu.dot_dimension_numbers<[1], [0], [0], [1], [0, 0, 1, 1], [], []>} : vector<32x68xbf16>, vector<68x128xbf16>, vector<32x128xf32> -> vector<32x128xf32>
    %43 = vector.broadcast %25 : vector<32x1xf32> to vector<32x128xf32>
    %44 = arith.mulf %43, %34 : vector<32x128xf32>
    %45 = arith.addf %44, %38 : vector<32x128xf32>
    %46 = vector.broadcast %30 : vector<32x1xf32> to vector<32x128xf32>
    %47 = arith.mulf %46, %42 : vector<32x128xf32>
    %48 = arith.addf %45, %47 : vector<32x128xf32>
    %c0_27 = arith.constant 0 : index
    %c0_28 = arith.constant 0 : index
    %49 = vector.load %arg10[%c0_27, %c0_28] : memref<32x128xf32, #tpu.memory_space<vmem>>, vector<32x128xf32>
    tpu.vector_store %arg10[%c0_27, %c0_28], %48 {strides = array<i32>} : memref<32x128xf32, #tpu.memory_space<vmem>>, vector<32x128xf32>,
    %c7_29 = arith.constant 7 : index
    %c0_30 = arith.constant 0 : index
    %50 = vector.load %arg9[%c7_29, %c0_30] : memref<48x68xbf16, #tpu.memory_space<vmem>>, vector<32x68xbf16>
    %c0_31 = arith.constant 0 : index
    %c0_32 = arith.constant 0 : index
    %c0_33 = arith.constant 0 : index
    %c0_34 = arith.constant 0 : index
    %51 = vector.load %arg2[%c0_31, %c0_32, %c0_33, %c0_34] : memref<3x3x68x64xbf16, #tpu.memory_space<vmem>>, vector<1x1x68x64xbf16>
    %52 = vector.shape_cast %51 : vector<1x1x68x64xbf16> to vector<68x64xbf16>
    %cst_35 = arith.constant dense<0.000000e+00> : vector<32x64xf32>
    %53 = tpu.matmul %50, %52, %cst_35 {dimension_numbers = #tpu.dot_dimension_numbers<[1], [0], [0], [1], [0, 0, 1, 1], [], []>} : vector<32x68xbf16>, vector<68x64xbf16>, vector<32x64xf32> -> vector<32x64xf32>
    %c8_36 = arith.constant 8 : index
    %c0_37 = arith.constant 0 : index
    %54 = vector.load %arg9[%c8_36, %c0_37] : memref<48x68xbf16, #tpu.memory_space<vmem>>, vector<32x68xbf16>
    %c0_38 = arith.constant 0 : index
    %c1_39 = arith.constant 1 : index
    %c0_40 = arith.constant 0 : index
    %c0_41 = arith.constant 0 : index
    %55 = vector.load %arg2[%c0_38, %c1_39, %c0_40, %c0_41] : memref<3x3x68x64xbf16, #tpu.memory_space<vmem>>, vector<1x1x68x64xbf16>
    %56 = vector.shape_cast %55 : vector<1x1x68x64xbf16> to vector<68x64xbf16>
    %cst_42 = arith.constant dense<0.000000e+00> : vector<32x64xf32>
    %57 = tpu.matmul %54, %56, %cst_42 {dimension_numbers = #tpu.dot_dimension_numbers<[1], [0], [0], [1], [0, 0, 1, 1], [], []>} : vector<32x68xbf16>, vector<68x64xbf16>, vector<32x64xf32> -> vector<32x64xf32>
    %c9_43 = arith.constant 9 : index
    %c0_44 = arith.constant 0 : index
    %58 = vector.load %arg9[%c9_43, %c0_44] : memref<48x68xbf16, #tpu.memory_space<vmem>>, vector<32x68xbf16>
    %c0_45 = arith.constant 0 : index
    %c2_46 = arith.constant 2 : index
    %c0_47 = arith.constant 0 : index
    %c0_48 = arith.constant 0 : index
    %59 = vector.load %arg2[%c0_45, %c2_46, %c0_47, %c0_48] : memref<3x3x68x64xbf16, #tpu.memory_space<vmem>>, vector<1x1x68x64xbf16>
    %60 = vector.shape_cast %59 : vector<1x1x68x64xbf16> to vector<68x64xbf16>
    %cst_49 = arith.constant dense<0.000000e+00> : vector<32x64xf32>
    %61 = tpu.matmul %58, %60, %cst_49 {dimension_numbers = #tpu.dot_dimension_numbers<[1], [0], [0], [1], [0, 0, 1, 1], [], []>} : vector<32x68xbf16>, vector<68x64xbf16>, vector<32x64xf32> -> vector<32x64xf32>
    %62 = vector.broadcast %25 : vector<32x1xf32> to vector<32x64xf32>
    %63 = arith.mulf %62, %53 : vector<32x64xf32>
    %64 = arith.addf %63, %57 : vector<32x64xf32>
    %65 = vector.broadcast %30 : vector<32x1xf32> to vector<32x64xf32>
    %66 = arith.mulf %65, %61 : vector<32x64xf32>
    %67 = arith.addf %64, %66 : vector<32x64xf32>
    %c0_50 = arith.constant 0 : index
    %c0_51 = arith.constant 0 : index
    %c0_52 = arith.constant 0 : index
    %68 = vector.load %arg3[%c0_50, %c0_51, %c0_52] : memref<3x1x64xf32, #tpu.memory_space<vmem>>, vector<1x1x64xf32>
    %69 = vector.shape_cast %68 : vector<1x1x64xf32> to vector<1x64xf32>
    %70 = vector.broadcast %69 : vector<1x64xf32> to vector<32x64xf32>
    %71 = arith.addf %67, %70 : vector<32x64xf32>
    %cst_53 = arith.constant 0.000000e+00 : f32
    %72 = vector.broadcast %cst_53 : f32 to vector<32x64xf32>
    %73 = arith.cmpf oge, %71, %72 : vector<32x64xf32>
    %c0_54 = arith.constant 0 : index
    %c0_55 = arith.constant 0 : index
    %c0_56 = arith.constant 0 : index
    %74 = vector.load %arg4[%c0_54, %c0_55, %c0_56] : memref<3x1x64xf32, #tpu.memory_space<vmem>>, vector<1x1x64xf32>
    %75 = vector.shape_cast %74 : vector<1x1x64xf32> to vector<1x64xf32>
    %76 = vector.broadcast %75 : vector<1x64xf32> to vector<32x64xf32>
    %77 = arith.mulf %76, %71 : vector<32x64xf32>
    %78 = arith.select %73, %71, %77 : vector<32x64xi1>, vector<32x64xf32>
    %79 = arith.truncf %78 : vector<32x64xf32> to vector<32x64xbf16>
    %c8_57 = arith.constant 8 : index
    %c0_58 = arith.constant 0 : index
    %80 = vector.load %arg9[%c8_57, %c0_58] : memref<48x68xbf16, #tpu.memory_space<vmem>>, vector<32x64xbf16>
    tpu.vector_store %arg9[%c8_57, %c0_58], %79 {strides = array<i32>} : memref<48x68xbf16, #tpu.memory_space<vmem>>, vector<32x64xbf16>,
    %c0_59 = arith.constant 0 : index
    %c0_60 = arith.constant 0 : index
    %81 = vector.load %arg10[%c0_59, %c0_60] : memref<32x128xf32, #tpu.memory_space<vmem>>, vector<32x128xf32>
    %c7_61 = arith.constant 7 : index
    %c0_62 = arith.constant 0 : index
    %82 = vector.load %arg9[%c7_61, %c0_62] : memref<48x68xbf16, #tpu.memory_space<vmem>>, vector<32x68xbf16>
    %c1_63 = arith.constant 1 : index
    %c0_64 = arith.constant 0 : index
    %c0_65 = arith.constant 0 : index
    %c0_66 = arith.constant 0 : index
    %83 = vector.load %arg5[%c1_63, %c0_64, %c0_65, %c0_66] : memref<4x3x68x128xbf16, #tpu.memory_space<vmem>>, vector<1x1x68x128xbf16>
    %84 = vector.shape_cast %83 : vector<1x1x68x128xbf16> to vector<68x128xbf16>
    %cst_67 = arith.constant dense<0.000000e+00> : vector<32x128xf32>
    %85 = tpu.matmul %82, %84, %cst_67 {dimension_numbers = #tpu.dot_dimension_numbers<[1], [0], [0], [1], [0, 0, 1, 1], [], []>} : vector<32x68xbf16>, vector<68x128xbf16>, vector<32x128xf32> -> vector<32x128xf32>
    %c8_68 = arith.constant 8 : index
    %c0_69 = arith.constant 0 : index
    %86 = vector.load %arg9[%c8_68, %c0_69] : memref<48x68xbf16, #tpu.memory_space<vmem>>, vector<32x68xbf16>
    %c1_70 = arith.constant 1 : index
    %c1_71 = arith.constant 1 : index
    %c0_72 = arith.constant 0 : index
    %c0_73 = arith.constant 0 : index
    %87 = vector.load %arg5[%c1_70, %c1_71, %c0_72, %c0_73] : memref<4x3x68x128xbf16, #tpu.memory_space<vmem>>, vector<1x1x68x128xbf16>
    %88 = vector.shape_cast %87 : vector<1x1x68x128xbf16> to vector<68x128xbf16>
    %cst_74 = arith.constant dense<0.000000e+00> : vector<32x128xf32>
    %89 = tpu.matmul %86, %88, %cst_74 {dimension_numbers = #tpu.dot_dimension_numbers<[1], [0], [0], [1], [0, 0, 1, 1], [], []>} : vector<32x68xbf16>, vector<68x128xbf16>, vector<32x128xf32> -> vector<32x128xf32>
    %c9_75 = arith.constant 9 : index
    %c0_76 = arith.constant 0 : index
    %90 = vector.load %arg9[%c9_75, %c0_76] : memref<48x68xbf16, #tpu.memory_space<vmem>>, vector<32x68xbf16>
    %c1_77 = arith.constant 1 : index
    %c2_78 = arith.constant 2 : index
    %c0_79 = arith.constant 0 : index
    %c0_80 = arith.constant 0 : index
    %91 = vector.load %arg5[%c1_77, %c2_78, %c0_79, %c0_80] : memref<4x3x68x128xbf16, #tpu.memory_space<vmem>>, vector<1x1x68x128xbf16>
    %92 = vector.shape_cast %91 : vector<1x1x68x128xbf16> to vector<68x128xbf16>
    %cst_81 = arith.constant dense<0.000000e+00> : vector<32x128xf32>
    %93 = tpu.matmul %90, %92, %cst_81 {dimension_numbers = #tpu.dot_dimension_numbers<[1], [0], [0], [1], [0, 0, 1, 1], [], []>} : vector<32x68xbf16>, vector<68x128xbf16>, vector<32x128xf32> -> vector<32x128xf32>
    %94 = vector.broadcast %25 : vector<32x1xf32> to vector<32x128xf32>
    %95 = arith.mulf %94, %85 : vector<32x128xf32>
    %96 = arith.addf %95, %89 : vector<32x128xf32>
    %97 = vector.broadcast %30 : vector<32x1xf32> to vector<32x128xf32>
    %98 = arith.mulf %97, %93 : vector<32x128xf32>
    %99 = arith.addf %96, %98 : vector<32x128xf32>
    %100 = arith.addf %81, %99 : vector<32x128xf32>
    %c0_82 = arith.constant 0 : index
    %c0_83 = arith.constant 0 : index
    %101 = vector.load %arg10[%c0_82, %c0_83] : memref<32x128xf32, #tpu.memory_space<vmem>>, vector<32x128xf32>
    tpu.vector_store %arg10[%c0_82, %c0_83], %100 {strides = array<i32>} : memref<32x128xf32, #tpu.memory_space<vmem>>, vector<32x128xf32>,
    %c7_84 = arith.constant 7 : index
    %c0_85 = arith.constant 0 : index
    %102 = vector.load %arg9[%c7_84, %c0_85] : memref<48x68xbf16, #tpu.memory_space<vmem>>, vector<32x68xbf16>
    %c1_86 = arith.constant 1 : index
    %c0_87 = arith.constant 0 : index
    %c0_88 = arith.constant 0 : index
    %c0_89 = arith.constant 0 : index
    %103 = vector.load %arg2[%c1_86, %c0_87, %c0_88, %c0_89] : memref<3x3x68x64xbf16, #tpu.memory_space<vmem>>, vector<1x1x68x64xbf16>
    %104 = vector.shape_cast %103 : vector<1x1x68x64xbf16> to vector<68x64xbf16>
    %cst_90 = arith.constant dense<0.000000e+00> : vector<32x64xf32>
    %105 = tpu.matmul %102, %104, %cst_90 {dimension_numbers = #tpu.dot_dimension_numbers<[1], [0], [0], [1], [0, 0, 1, 1], [], []>} : vector<32x68xbf16>, vector<68x64xbf16>, vector<32x64xf32> -> vector<32x64xf32>
    %c8_91 = arith.constant 8 : index
    %c0_92 = arith.constant 0 : index
    %106 = vector.load %arg9[%c8_91, %c0_92] : memref<48x68xbf16, #tpu.memory_space<vmem>>, vector<32x68xbf16>
    %c1_93 = arith.constant 1 : index
    %c1_94 = arith.constant 1 : index
    %c0_95 = arith.constant 0 : index
    %c0_96 = arith.constant 0 : index
    %107 = vector.load %arg2[%c1_93, %c1_94, %c0_95, %c0_96] : memref<3x3x68x64xbf16, #tpu.memory_space<vmem>>, vector<1x1x68x64xbf16>
    %108 = vector.shape_cast %107 : vector<1x1x68x64xbf16> to vector<68x64xbf16>
    %cst_97 = arith.constant dense<0.000000e+00> : vector<32x64xf32>
    %109 = tpu.matmul %106, %108, %cst_97 {dimension_numbers = #tpu.dot_dimension_numbers<[1], [0], [0], [1], [0, 0, 1, 1], [], []>} : vector<32x68xbf16>, vector<68x64xbf16>, vector<32x64xf32> -> vector<32x64xf32>
    %c9_98 = arith.constant 9 : index
    %c0_99 = arith.constant 0 : index
    %110 = vector.load %arg9[%c9_98, %c0_99] : memref<48x68xbf16, #tpu.memory_space<vmem>>, vector<32x68xbf16>
    %c1_100 = arith.constant 1 : index
    %c2_101 = arith.constant 2 : index
    %c0_102 = arith.constant 0 : index
    %c0_103 = arith.constant 0 : index
    %111 = vector.load %arg2[%c1_100, %c2_101, %c0_102, %c0_103] : memref<3x3x68x64xbf16, #tpu.memory_space<vmem>>, vector<1x1x68x64xbf16>
    %112 = vector.shape_cast %111 : vector<1x1x68x64xbf16> to vector<68x64xbf16>
    %cst_104 = arith.constant dense<0.000000e+00> : vector<32x64xf32>
    %113 = tpu.matmul %110, %112, %cst_104 {dimension_numbers = #tpu.dot_dimension_numbers<[1], [0], [0], [1], [0, 0, 1, 1], [], []>} : vector<32x68xbf16>, vector<68x64xbf16>, vector<32x64xf32> -> vector<32x64xf32>
    %114 = vector.broadcast %25 : vector<32x1xf32> to vector<32x64xf32>
    %115 = arith.mulf %114, %105 : vector<32x64xf32>
    %116 = arith.addf %115, %109 : vector<32x64xf32>
    %117 = vector.broadcast %30 : vector<32x1xf32> to vector<32x64xf32>
    %118 = arith.mulf %117, %113 : vector<32x64xf32>
    %119 = arith.addf %116, %118 : vector<32x64xf32>
    %c1_105 = arith.constant 1 : index
    %c0_106 = arith.constant 0 : index
    %c0_107 = arith.constant 0 : index
    %120 = vector.load %arg3[%c1_105, %c0_106, %c0_107] : memref<3x1x64xf32, #tpu.memory_space<vmem>>, vector<1x1x64xf32>
    %121 = vector.shape_cast %120 : vector<1x1x64xf32> to vector<1x64xf32>
    %122 = vector.broadcast %121 : vector<1x64xf32> to vector<32x64xf32>
    %123 = arith.addf %119, %122 : vector<32x64xf32>
    %cst_108 = arith.constant 0.000000e+00 : f32
    %124 = vector.broadcast %cst_108 : f32 to vector<32x64xf32>
    %125 = arith.cmpf oge, %123, %124 : vector<32x64xf32>
    %c1_109 = arith.constant 1 : index
    %c0_110 = arith.constant 0 : index
    %c0_111 = arith.constant 0 : index
    %126 = vector.load %arg4[%c1_109, %c0_110, %c0_111] : memref<3x1x64xf32, #tpu.memory_space<vmem>>, vector<1x1x64xf32>
    %127 = vector.shape_cast %126 : vector<1x1x64xf32> to vector<1x64xf32>
    %128 = vector.broadcast %127 : vector<1x64xf32> to vector<32x64xf32>
    %129 = arith.mulf %128, %123 : vector<32x64xf32>
    %130 = arith.select %125, %123, %129 : vector<32x64xi1>, vector<32x64xf32>
    %131 = arith.truncf %130 : vector<32x64xf32> to vector<32x64xbf16>
    %c8_112 = arith.constant 8 : index
    %c0_113 = arith.constant 0 : index
    %132 = vector.load %arg9[%c8_112, %c0_113] : memref<48x68xbf16, #tpu.memory_space<vmem>>, vector<32x64xbf16>
    tpu.vector_store %arg9[%c8_112, %c0_113], %131 {strides = array<i32>} : memref<48x68xbf16, #tpu.memory_space<vmem>>, vector<32x64xbf16>,
    %c0_114 = arith.constant 0 : index
    %c0_115 = arith.constant 0 : index
    %133 = vector.load %arg10[%c0_114, %c0_115] : memref<32x128xf32, #tpu.memory_space<vmem>>, vector<32x128xf32>
    %c7_116 = arith.constant 7 : index
    %c0_117 = arith.constant 0 : index
    %134 = vector.load %arg9[%c7_116, %c0_117] : memref<48x68xbf16, #tpu.memory_space<vmem>>, vector<32x68xbf16>
    %c2_118 = arith.constant 2 : index
    %c0_119 = arith.constant 0 : index
    %c0_120 = arith.constant 0 : index
    %c0_121 = arith.constant 0 : index
    %135 = vector.load %arg5[%c2_118, %c0_119, %c0_120, %c0_121] : memref<4x3x68x128xbf16, #tpu.memory_space<vmem>>, vector<1x1x68x128xbf16>
    %136 = vector.shape_cast %135 : vector<1x1x68x128xbf16> to vector<68x128xbf16>
    %cst_122 = arith.constant dense<0.000000e+00> : vector<32x128xf32>
    %137 = tpu.matmul %134, %136, %cst_122 {dimension_numbers = #tpu.dot_dimension_numbers<[1], [0], [0], [1], [0, 0, 1, 1], [], []>} : vector<32x68xbf16>, vector<68x128xbf16>, vector<32x128xf32> -> vector<32x128xf32>
    %c8_123 = arith.constant 8 : index
    %c0_124 = arith.constant 0 : index
    %138 = vector.load %arg9[%c8_123, %c0_124] : memref<48x68xbf16, #tpu.memory_space<vmem>>, vector<32x68xbf16>
    %c2_125 = arith.constant 2 : index
    %c1_126 = arith.constant 1 : index
    %c0_127 = arith.constant 0 : index
    %c0_128 = arith.constant 0 : index
    %139 = vector.load %arg5[%c2_125, %c1_126, %c0_127, %c0_128] : memref<4x3x68x128xbf16, #tpu.memory_space<vmem>>, vector<1x1x68x128xbf16>
    %140 = vector.shape_cast %139 : vector<1x1x68x128xbf16> to vector<68x128xbf16>
    %cst_129 = arith.constant dense<0.000000e+00> : vector<32x128xf32>
    %141 = tpu.matmul %138, %140, %cst_129 {dimension_numbers = #tpu.dot_dimension_numbers<[1], [0], [0], [1], [0, 0, 1, 1], [], []>} : vector<32x68xbf16>, vector<68x128xbf16>, vector<32x128xf32> -> vector<32x128xf32>
    %c9_130 = arith.constant 9 : index
    %c0_131 = arith.constant 0 : index
    %142 = vector.load %arg9[%c9_130, %c0_131] : memref<48x68xbf16, #tpu.memory_space<vmem>>, vector<32x68xbf16>
    %c2_132 = arith.constant 2 : index
    %c2_133 = arith.constant 2 : index
    %c0_134 = arith.constant 0 : index
    %c0_135 = arith.constant 0 : index
    %143 = vector.load %arg5[%c2_132, %c2_133, %c0_134, %c0_135] : memref<4x3x68x128xbf16, #tpu.memory_space<vmem>>, vector<1x1x68x128xbf16>
    %144 = vector.shape_cast %143 : vector<1x1x68x128xbf16> to vector<68x128xbf16>
    %cst_136 = arith.constant dense<0.000000e+00> : vector<32x128xf32>
    %145 = tpu.matmul %142, %144, %cst_136 {dimension_numbers = #tpu.dot_dimension_numbers<[1], [0], [0], [1], [0, 0, 1, 1], [], []>} : vector<32x68xbf16>, vector<68x128xbf16>, vector<32x128xf32> -> vector<32x128xf32>
    %146 = vector.broadcast %25 : vector<32x1xf32> to vector<32x128xf32>
    %147 = arith.mulf %146, %137 : vector<32x128xf32>
    %148 = arith.addf %147, %141 : vector<32x128xf32>
    %149 = vector.broadcast %30 : vector<32x1xf32> to vector<32x128xf32>
    %150 = arith.mulf %149, %145 : vector<32x128xf32>
    %151 = arith.addf %148, %150 : vector<32x128xf32>
    %152 = arith.addf %133, %151 : vector<32x128xf32>
    %c0_137 = arith.constant 0 : index
    %c0_138 = arith.constant 0 : index
    %153 = vector.load %arg10[%c0_137, %c0_138] : memref<32x128xf32, #tpu.memory_space<vmem>>, vector<32x128xf32>
    tpu.vector_store %arg10[%c0_137, %c0_138], %152 {strides = array<i32>} : memref<32x128xf32, #tpu.memory_space<vmem>>, vector<32x128xf32>,
    %c7_139 = arith.constant 7 : index
    %c0_140 = arith.constant 0 : index
    %154 = vector.load %arg9[%c7_139, %c0_140] : memref<48x68xbf16, #tpu.memory_space<vmem>>, vector<32x68xbf16>
    %c2_141 = arith.constant 2 : index
    %c0_142 = arith.constant 0 : index
    %c0_143 = arith.constant 0 : index
    %c0_144 = arith.constant 0 : index
    %155 = vector.load %arg2[%c2_141, %c0_142, %c0_143, %c0_144] : memref<3x3x68x64xbf16, #tpu.memory_space<vmem>>, vector<1x1x68x64xbf16>
    %156 = vector.shape_cast %155 : vector<1x1x68x64xbf16> to vector<68x64xbf16>
    %cst_145 = arith.constant dense<0.000000e+00> : vector<32x64xf32>
    %157 = tpu.matmul %154, %156, %cst_145 {dimension_numbers = #tpu.dot_dimension_numbers<[1], [0], [0], [1], [0, 0, 1, 1], [], []>} : vector<32x68xbf16>, vector<68x64xbf16>, vector<32x64xf32> -> vector<32x64xf32>
    %c8_146 = arith.constant 8 : index
    %c0_147 = arith.constant 0 : index
    %158 = vector.load %arg9[%c8_146, %c0_147] : memref<48x68xbf16, #tpu.memory_space<vmem>>, vector<32x68xbf16>
    %c2_148 = arith.constant 2 : index
    %c1_149 = arith.constant 1 : index
    %c0_150 = arith.constant 0 : index
    %c0_151 = arith.constant 0 : index
    %159 = vector.load %arg2[%c2_148, %c1_149, %c0_150, %c0_151] : memref<3x3x68x64xbf16, #tpu.memory_space<vmem>>, vector<1x1x68x64xbf16>
    %160 = vector.shape_cast %159 : vector<1x1x68x64xbf16> to vector<68x64xbf16>
    %cst_152 = arith.constant dense<0.000000e+00> : vector<32x64xf32>
    %161 = tpu.matmul %158, %160, %cst_152 {dimension_numbers = #tpu.dot_dimension_numbers<[1], [0], [0], [1], [0, 0, 1, 1], [], []>} : vector<32x68xbf16>, vector<68x64xbf16>, vector<32x64xf32> -> vector<32x64xf32>
    %c9_153 = arith.constant 9 : index
    %c0_154 = arith.constant 0 : index
    %162 = vector.load %arg9[%c9_153, %c0_154] : memref<48x68xbf16, #tpu.memory_space<vmem>>, vector<32x68xbf16>
    %c2_155 = arith.constant 2 : index
    %c2_156 = arith.constant 2 : index
    %c0_157 = arith.constant 0 : index
    %c0_158 = arith.constant 0 : index
    %163 = vector.load %arg2[%c2_155, %c2_156, %c0_157, %c0_158] : memref<3x3x68x64xbf16, #tpu.memory_space<vmem>>, vector<1x1x68x64xbf16>
    %164 = vector.shape_cast %163 : vector<1x1x68x64xbf16> to vector<68x64xbf16>
    %cst_159 = arith.constant dense<0.000000e+00> : vector<32x64xf32>
    %165 = tpu.matmul %162, %164, %cst_159 {dimension_numbers = #tpu.dot_dimension_numbers<[1], [0], [0], [1], [0, 0, 1, 1], [], []>} : vector<32x68xbf16>, vector<68x64xbf16>, vector<32x64xf32> -> vector<32x64xf32>
    %166 = vector.broadcast %25 : vector<32x1xf32> to vector<32x64xf32>
    %167 = arith.mulf %166, %157 : vector<32x64xf32>
    %168 = arith.addf %167, %161 : vector<32x64xf32>
    %169 = vector.broadcast %30 : vector<32x1xf32> to vector<32x64xf32>
    %170 = arith.mulf %169, %165 : vector<32x64xf32>
    %171 = arith.addf %168, %170 : vector<32x64xf32>
    %c2_160 = arith.constant 2 : index
    %c0_161 = arith.constant 0 : index
    %c0_162 = arith.constant 0 : index
    %172 = vector.load %arg3[%c2_160, %c0_161, %c0_162] : memref<3x1x64xf32, #tpu.memory_space<vmem>>, vector<1x1x64xf32>
    %173 = vector.shape_cast %172 : vector<1x1x64xf32> to vector<1x64xf32>
    %174 = vector.broadcast %173 : vector<1x64xf32> to vector<32x64xf32>
    %175 = arith.addf %171, %174 : vector<32x64xf32>
    %cst_163 = arith.constant 0.000000e+00 : f32
    %176 = vector.broadcast %cst_163 : f32 to vector<32x64xf32>
    %177 = arith.cmpf oge, %175, %176 : vector<32x64xf32>
    %c2_164 = arith.constant 2 : index
    %c0_165 = arith.constant 0 : index
    %c0_166 = arith.constant 0 : index
    %178 = vector.load %arg4[%c2_164, %c0_165, %c0_166] : memref<3x1x64xf32, #tpu.memory_space<vmem>>, vector<1x1x64xf32>
    %179 = vector.shape_cast %178 : vector<1x1x64xf32> to vector<1x64xf32>
    %180 = vector.broadcast %179 : vector<1x64xf32> to vector<32x64xf32>
    %181 = arith.mulf %180, %175 : vector<32x64xf32>
    %182 = arith.select %177, %175, %181 : vector<32x64xi1>, vector<32x64xf32>
    %183 = arith.truncf %182 : vector<32x64xf32> to vector<32x64xbf16>
    %c8_167 = arith.constant 8 : index
    %c0_168 = arith.constant 0 : index
    %184 = vector.load %arg9[%c8_167, %c0_168] : memref<48x68xbf16, #tpu.memory_space<vmem>>, vector<32x64xbf16>
    tpu.vector_store %arg9[%c8_167, %c0_168], %183 {strides = array<i32>} : memref<48x68xbf16, #tpu.memory_space<vmem>>, vector<32x64xbf16>,
    %c0_169 = arith.constant 0 : index
    %c0_170 = arith.constant 0 : index
    %185 = vector.load %arg10[%c0_169, %c0_170] : memref<32x128xf32, #tpu.memory_space<vmem>>, vector<32x128xf32>
    %c7_171 = arith.constant 7 : index
    %c0_172 = arith.constant 0 : index
    %186 = vector.load %arg9[%c7_171, %c0_172] : memref<48x68xbf16, #tpu.memory_space<vmem>>, vector<32x68xbf16>
    %c3 = arith.constant 3 : index
    %c0_173 = arith.constant 0 : index
    %c0_174 = arith.constant 0 : index
    %c0_175 = arith.constant 0 : index
    %187 = vector.load %arg5[%c3, %c0_173, %c0_174, %c0_175] : memref<4x3x68x128xbf16, #tpu.memory_space<vmem>>, vector<1x1x68x128xbf16>
    %188 = vector.shape_cast %187 : vector<1x1x68x128xbf16> to vector<68x128xbf16>
    %cst_176 = arith.constant dense<0.000000e+00> : vector<32x128xf32>
    %189 = tpu.matmul %186, %188, %cst_176 {dimension_numbers = #tpu.dot_dimension_numbers<[1], [0], [0], [1], [0, 0, 1, 1], [], []>} : vector<32x68xbf16>, vector<68x128xbf16>, vector<32x128xf32> -> vector<32x128xf32>
    %c8_177 = arith.constant 8 : index
    %c0_178 = arith.constant 0 : index
    %190 = vector.load %arg9[%c8_177, %c0_178] : memref<48x68xbf16, #tpu.memory_space<vmem>>, vector<32x68xbf16>
    %c3_179 = arith.constant 3 : index
    %c1_180 = arith.constant 1 : index
    %c0_181 = arith.constant 0 : index
    %c0_182 = arith.constant 0 : index
    %191 = vector.load %arg5[%c3_179, %c1_180, %c0_181, %c0_182] : memref<4x3x68x128xbf16, #tpu.memory_space<vmem>>, vector<1x1x68x128xbf16>
    %192 = vector.shape_cast %191 : vector<1x1x68x128xbf16> to vector<68x128xbf16>
    %cst_183 = arith.constant dense<0.000000e+00> : vector<32x128xf32>
    %193 = tpu.matmul %190, %192, %cst_183 {dimension_numbers = #tpu.dot_dimension_numbers<[1], [0], [0], [1], [0, 0, 1, 1], [], []>} : vector<32x68xbf16>, vector<68x128xbf16>, vector<32x128xf32> -> vector<32x128xf32>
    %c9_184 = arith.constant 9 : index
    %c0_185 = arith.constant 0 : index
    %194 = vector.load %arg9[%c9_184, %c0_185] : memref<48x68xbf16, #tpu.memory_space<vmem>>, vector<32x68xbf16>
    %c3_186 = arith.constant 3 : index
    %c2_187 = arith.constant 2 : index
    %c0_188 = arith.constant 0 : index
    %c0_189 = arith.constant 0 : index
    %195 = vector.load %arg5[%c3_186, %c2_187, %c0_188, %c0_189] : memref<4x3x68x128xbf16, #tpu.memory_space<vmem>>, vector<1x1x68x128xbf16>
    %196 = vector.shape_cast %195 : vector<1x1x68x128xbf16> to vector<68x128xbf16>
    %cst_190 = arith.constant dense<0.000000e+00> : vector<32x128xf32>
    %197 = tpu.matmul %194, %196, %cst_190 {dimension_numbers = #tpu.dot_dimension_numbers<[1], [0], [0], [1], [0, 0, 1, 1], [], []>} : vector<32x68xbf16>, vector<68x128xbf16>, vector<32x128xf32> -> vector<32x128xf32>
    %198 = vector.broadcast %25 : vector<32x1xf32> to vector<32x128xf32>
    %199 = arith.mulf %198, %189 : vector<32x128xf32>
    %200 = arith.addf %199, %193 : vector<32x128xf32>
    %201 = vector.broadcast %30 : vector<32x1xf32> to vector<32x128xf32>
    %202 = arith.mulf %201, %197 : vector<32x128xf32>
    %203 = arith.addf %200, %202 : vector<32x128xf32>
    %204 = arith.addf %185, %203 : vector<32x128xf32>
    %c0_191 = arith.constant 0 : index
    %c0_192 = arith.constant 0 : index
    %205 = vector.load %arg10[%c0_191, %c0_192] : memref<32x128xf32, #tpu.memory_space<vmem>>, vector<32x128xf32>
    tpu.vector_store %arg10[%c0_191, %c0_192], %204 {strides = array<i32>} : memref<32x128xf32, #tpu.memory_space<vmem>>, vector<32x128xf32>,
    %c0_193 = arith.constant 0 : index
    %c0_194 = arith.constant 0 : index
    %206 = vector.load %arg10[%c0_193, %c0_194] : memref<32x128xf32, #tpu.memory_space<vmem>>, vector<32x128xf32>
    %c0_195 = arith.constant 0 : index
    %c0_196 = arith.constant 0 : index
    %207 = vector.load %arg6[%c0_195, %c0_196] : memref<1x128xf32, #tpu.memory_space<vmem>>, vector<1x128xf32>
    %208 = vector.broadcast %207 : vector<1x128xf32> to vector<32x128xf32>
    %209 = arith.addf %206, %208 : vector<32x128xf32>
    %cst_197 = arith.constant 0.000000e+00 : f32
    %210 = vector.broadcast %cst_197 : f32 to vector<32x128xf32>
    %211 = arith.cmpf oge, %209, %210 : vector<32x128xf32>
    %c0_198 = arith.constant 0 : index
    %c0_199 = arith.constant 0 : index
    %212 = vector.load %arg7[%c0_198, %c0_199] : memref<1x128xf32, #tpu.memory_space<vmem>>, vector<1x128xf32>
    %213 = vector.broadcast %212 : vector<1x128xf32> to vector<32x128xf32>
    %214 = arith.mulf %213, %209 : vector<32x128xf32>
    %215 = arith.select %211, %209, %214 : vector<32x128xi1>, vector<32x128xf32>
    %c0_200 = arith.constant 0 : index
    %c0_201 = arith.constant 0 : index
    %216 = vector.load %arg8[%c0_200, %c0_201] : memref<32x128xf32, #tpu.memory_space<vmem>>, vector<32x128xf32>
    tpu.vector_store %arg8[%c0_200, %c0_201], %215 {strides = array<i32>} : memref<32x128xf32, #tpu.memory_space<vmem>>, vector<32x128xf32>,
    return
  }
  func.func @transform_0(%arg0: i32) -> (i32, i32) {
    %c0_i32 = arith.constant 0 : i32
    %c0_i32_0 = arith.constant 0 : i32
    return %arg0, %c0_i32 : i32, i32
  }
  func.func @transform_1(%arg0: i32) -> (i32, i32, i32, i32) {
    %c0_i32 = arith.constant 0 : i32
    %c0_i32_0 = arith.constant 0 : i32
    %c0_i32_1 = arith.constant 0 : i32
    %c0_i32_2 = arith.constant 0 : i32
    %c0_i32_3 = arith.constant 0 : i32
    return %c0_i32, %c0_i32_0, %c0_i32_1, %c0_i32_2 : i32, i32, i32, i32
  }
  func.func @transform_2(%arg0: i32) -> (i32, i32, i32) {
    %c0_i32 = arith.constant 0 : i32
    %c0_i32_0 = arith.constant 0 : i32
    %c0_i32_1 = arith.constant 0 : i32
    %c0_i32_2 = arith.constant 0 : i32
    return %c0_i32, %c0_i32_0, %c0_i32_1 : i32, i32, i32
  }
  func.func @transform_3(%arg0: i32) -> (i32, i32, i32) {
    %c0_i32 = arith.constant 0 : i32
    %c0_i32_0 = arith.constant 0 : i32
    %c0_i32_1 = arith.constant 0 : i32
    %c0_i32_2 = arith.constant 0 : i32
    return %c0_i32, %c0_i32_0, %c0_i32_1 : i32, i32, i32
  }
  func.func @transform_4(%arg0: i32) -> (i32, i32, i32, i32) {
    %c0_i32 = arith.constant 0 : i32
    %c0_i32_0 = arith.constant 0 : i32
    %c0_i32_1 = arith.constant 0 : i32
    %c0_i32_2 = arith.constant 0 : i32
    %c0_i32_3 = arith.constant 0 : i32
    return %c0_i32, %c0_i32_0, %c0_i32_1, %c0_i32_2 : i32, i32, i32, i32
  }
  func.func @transform_5(%arg0: i32) -> (i32, i32) {
    %c0_i32 = arith.constant 0 : i32
    %c0_i32_0 = arith.constant 0 : i32
    %c0_i32_1 = arith.constant 0 : i32
    return %c0_i32, %c0_i32_0 : i32, i32
  }
  func.func @transform_6(%arg0: i32) -> (i32, i32) {
    %c0_i32 = arith.constant 0 : i32
    %c0_i32_0 = arith.constant 0 : i32
    %c0_i32_1 = arith.constant 0 : i32
    return %c0_i32, %c0_i32_0 : i32, i32
  }
  func.func @transform_7(%arg0: i32) -> (i32, i32) {
    %c0_i32 = arith.constant 0 : i32
    %c0_i32_0 = arith.constant 0 : i32
    return %arg0, %c0_i32 : i32, i32
  }
}

</mosaic_0001>

<llo_original>
// kernel: basic_block_forward.1
$region0: #{basic_block_forward.1}
  #allocation0 [shape = 'u32[]', space=smem, size = 0x4, offset = 0x4, fixed_abs, tag = 'smem constant byte address 0x4 - core index']
  #allocation1 [shape = 'u32[144,128]{1,0:T(1,128)}', space=vmem, size = 0x12000, scoped, tag = 'internal scratch']
  #allocation2 [shape = 'bf16[48,68]{1,0:T(16,128)(2,1)}', space=vmem, size = 0x3000, scoped, tag = 'scratch operand']
  #allocation3 [shape = 'f32[32,128]{1,0:T(8,128)}', space=vmem, size = 0x4000, scoped, tag = 'scratch operand']
  %s0 = inlined_call_operand.vmem [shape: bf16[32,64], index: 0, kind: input, shape index: {}]
  %s1 = inlined_call_operand.vmem [shape: bf16[3,3,68,64], index: 1, kind: input, shape index: {}]
  %s2 = inlined_call_operand.vmem [shape: f32[3,1,64], index: 2, kind: input, shape index: {}]
  %s3 = inlined_call_operand.vmem [shape: f32[3,1,64], index: 3, kind: input, shape index: {}]
  %s4 = inlined_call_operand.vmem [shape: bf16[4,3,68,128], index: 4, kind: input, shape index: {}]
  %s5 = inlined_call_operand.vmem [shape: f32[1,128], index: 5, kind: input, shape index: {}]
  %s6 = inlined_call_operand.vmem [shape: f32[1,128], index: 6, kind: input, shape index: {}]
  %s7 = inlined_call_operand.vmem [shape: f32[32,128], index: 7, kind: output, shape index: {}]
  %s8 = sld [smem:[#allocation0]]
  $region38: #{basic_block_forward.1} parent=0
    _
  %s10 = ssub.s32 1, %s8
  %s11 = scalar_select 0, %s10, %s8
  // Predicated region
  $region2: #{basic_block_forward.1} parent=0 // pred_check
    _
  $region3: #{basic_block_forward.1} parent=0 // pred_check_branch
    %13 = sbr.rel (0) target = $region5
  $region4: #{basic_block_forward.1} parent=0 // pred_region
    _
  $region5: #{basic_block_forward.1} parent=0 // pred_fallthru
    _
  // Predicated region
  $region6: #{basic_block_forward.1} parent=0 // pred_check
    _
  $region7: #{basic_block_forward.1} parent=0 // pred_check_branch
    %15 = sbr.rel (0) target = $region9
  $region8: #{basic_block_forward.1} parent=0 // pred_region
    _
  $region9: #{basic_block_forward.1} parent=0 // pred_fallthru
    _
  // Predicated region
  $region10: #{basic_block_forward.1} parent=0 // pred_check
    _
  $region11: #{basic_block_forward.1} parent=0 // pred_check_branch
    %17 = sbr.rel (0) target = $region13
  $region12: #{basic_block_forward.1} parent=0 // pred_region
    _
  $region13: #{basic_block_forward.1} parent=0 // pred_fallthru
    _
  // Predicated region
  $region14: #{basic_block_forward.1} parent=0 // pred_check
    _
  $region15: #{basic_block_forward.1} parent=0 // pred_check_branch
    %19 = sbr.rel (0) target = $region17
  $region16: #{basic_block_forward.1} parent=0 // pred_region
    _
  $region17: #{basic_block_forward.1} parent=0 // pred_fallthru
    _
  // Predicated region
  $region18: #{basic_block_forward.1} parent=0 // pred_check
    _
  $region19: #{basic_block_forward.1} parent=0 // pred_check_branch
    %21 = sbr.rel (0) target = $region21
  $region20: #{basic_block_forward.1} parent=0 // pred_region
    _
  $region21: #{basic_block_forward.1} parent=0 // pred_fallthru
    _
  // Predicated region
  $region22: #{basic_block_forward.1} parent=0 // pred_check
    _
  $region23: #{basic_block_forward.1} parent=0 // pred_check_branch
    %23 = sbr.rel (0) target = $region25
  $region24: #{basic_block_forward.1} parent=0 // pred_region
    _
  $region25: #{basic_block_forward.1} parent=0 // pred_fallthru
    _
  // Predicated region
  $region26: #{basic_block_forward.1} parent=0 // pred_check
    _
  $region27: #{basic_block_forward.1} parent=0 // pred_check_branch
    %25 = sbr.rel (0) target = $region29
  $region28: #{basic_block_forward.1} parent=0 // pred_region
    _
  $region29: #{basic_block_forward.1} parent=0 // pred_fallthru
    _
  %vm27 = vcmask 551936
  %28 = vst.msk [vmem:[#allocation2] sm:$0xf] %vm27, 0
  %vm29 = vcmask 556036
  %30 = vst.msk [vmem:[#allocation2 + $0x10] sm:$0xf0] %vm29, 0
  %vm31 = vcmask 556548
  %32 = vst.msk [vmem:[#allocation2] sm:$0xf0] %vm31, 0
  %vm33 = vcmask 556544
  %34 = vst.msk [vmem:[#allocation2 + $0x8] sm:$0xff] %vm33, 0
  %vm35 = vcmask 552448
  %36 = vst.msk [vmem:[#allocation2 + $0x10] sm:$0xf] %vm35, 0
  %v37 = vld [vmem:[%s0] sm:$0xf]
  %v38 = vld [vmem:[%s0 + $0x4] sm:$0xf]
  %v39 = vld [vmem:[%s0 + $0x8] sm:$0xf]
  %v40 = vld [vmem:[%s0 + $0xc] sm:$0xf]
  %v45 = vunpack.c.l.b16 %v37
  %v46 = vunpack.c.l.b16 %v38
  %v47 = vunpack.c.l.b16 %v39
  %v48 = vunpack.c.l.b16 %v40
  %v49 = vpack.c.b16 %v45, %v45
  %v50 = vpack.c.b16 %v47, %v46
  %v51 = vpack.c.b16 %v48, %v48
  %vm55 = vcmask 523268
  %56 = vst.msk [vmem:[#allocation2] sm:$0xf0] %vm55, %v49
  %vm57 = vcmask 523264
  %58 = vst.msk [vmem:[#allocation2 + $0x8] sm:$0xff] %vm57, %v50
  %vm59 = vcmask 519168
  %60 = vst.msk [vmem:[#allocation2 + $0x10] sm:$0xf] %vm59, %v51
  %v61 = vlaneseq
  %v62 = vshrl.u32 %v61, 7
  %v63 = vadd.s32 %v62, 8
  %v64 = vadd.s32 %v62, 16
  %v65 = vadd.s32 %v62, 24
  %vm66 = vcmp.ne.s32.totalorder %v62, 0
  %vm67 = vcmp.ne.s32.totalorder %v63, 0
  %vm68 = vcmp.ne.s32.totalorder %v64, 0
  %vm69 = vcmp.ne.s32.totalorder %v65, 0
  %v70 = vsel %vm66, 1, 0
  %v71 = vsel %vm67, 1, 0
  %v72 = vsel %vm68, 1, 0
  %v73 = vsel %vm69, 1, 0
  %v74 = vcvt.s32.f32 %v70
  %v75 = vcvt.s32.f32 %v71
  %v76 = vcvt.s32.f32 %v72
  %v77 = vcvt.s32.f32 %v73
  %vm78 = vcmp.ne.s32.totalorder %v62, 15
  %vm79 = vcmp.ne.s32.totalorder %v63, 15
  %vm80 = vcmp.ne.s32.totalorder %v64, 15
  %vm81 = vcmp.ne.s32.totalorder %v65, 15
  %v82 = vsel %vm78, 1, 0
  %v83 = vsel %vm79, 1, 0
  %v84 = vsel %vm80, 1, 0
  %v85 = vsel %vm81, 1, 0
  %v86 = vcvt.s32.f32 %v82
  %v87 = vcvt.s32.f32 %v83
  %v88 = vcvt.s32.f32 %v84
  %v89 = vcvt.s32.f32 %v85
  %vm90 = vcmp.ne.s32.totalorder %v62, 16
  %vm91 = vcmp.ne.s32.totalorder %v63, 16
  %vm92 = vcmp.ne.s32.totalorder %v64, 16
  %vm93 = vcmp.ne.s32.totalorder %v65, 16
  %v94 = vsel %vm90, 1, 0
  %v95 = vsel %vm91, 1, 0
  %v96 = vsel %vm92, 1, 0
  %v97 = vsel %vm93, 1, 0
  %v98 = vcvt.s32.f32 %v94
  %v99 = vcvt.s32.f32 %v95
  %v100 = vcvt.s32.f32 %v96
  %v101 = vcvt.s32.f32 %v97
  %v102 = vmul.f32 %v74, %v98
  %v103 = vmul.f32 %v75, %v99
  %v104 = vmul.f32 %v76, %v100
  %v105 = vmul.f32 %v77, %v101
  %vm106 = vcmp.ne.s32.totalorder %v62, 31
  %vm107 = vcmp.ne.s32.totalorder %v63, 31
  %vm108 = vcmp.ne.s32.totalorder %v64, 31
  %vm109 = vcmp.ne.s32.totalorder %v65, 31
  %v110 = vsel %vm106, 1, 0
  %v111 = vsel %vm107, 1, 0
  %v112 = vsel %vm108, 1, 0
  %v113 = vsel %vm109, 1, 0
  %v114 = vcvt.s32.f32 %v110
  %v115 = vcvt.s32.f32 %v111
  %v116 = vcvt.s32.f32 %v112
  %v117 = vcvt.s32.f32 %v113
  %v118 = vmul.f32 %v86, %v114
  %v119 = vmul.f32 %v87, %v115
  %v120 = vmul.f32 %v88, %v116
  %v121 = vmul.f32 %v89, %v117
  %v122 = vld [vmem:[#allocation2] sm:$0xf8]
  %v123 = vld [vmem:[#allocation2 + $0x8] sm:$0xff]
  %v124 = vld [vmem:[#allocation2 + $0x10] sm:$0xf]
  %v125 = vld [vmem:[%s4] sm:$0xf]
  %v126 = vld [vmem:[%s4 + $0x4] sm:$0xf]
  %v127 = vld [vmem:[%s4 + $0x8] sm:$0xf]
  %v128 = vld [vmem:[%s4 + $0xc] sm:$0xf]
  %v129 = vld [vmem:[%s4 + $0x10] sm:$0xf]
  %v130 = vld [vmem:[%s4 + $0x14] sm:$0xf]
  %v131 = vld [vmem:[%s4 + $0x18] sm:$0xf]
  %v132 = vld [vmem:[%s4 + $0x1c] sm:$0xf]
  %v133 = vld [vmem:[%s4 + $0x20] sm:$0x3]
  %vm134 = vsmask.f32 4352
  %v136 = vshrl.u32 %v122, 16
  %v138 = vrot.slane %v136, 3
  %v139 = vshll.u32 %v122, 16
  %v141 = vrot.slane %v139, 4
  %v142 = vor.u32 %v138, %v141
  %v144 = vshrl.u32 %v123, 16
  %v146 = vrot.slane %v144, 3
  %v147 = vshll.u32 %v123, 16
  %v149 = vrot.slane %v147, 4
  %v150 = vor.u32 %v146, %v149
  %v151 = vsel %vm134, %v142, %v150
  %v153 = vshrl.u32 %v124, 16
  %v155 = vrot.slane %v153, 3
  %v156 = vshll.u32 %v124, 16
  %v158 = vrot.slane %v156, 4
  %v159 = vor.u32 %v155, %v158
  %v160 = vsel %vm134, %v150, %v159
  %v170 = vunpack.c.l.b16 %v125
  %v171 = vunpack.c.l.b16 %v126
  %v172 = vunpack.c.l.b16 %v127
  %v173 = vunpack.c.l.b16 %v128
  %v174 = vunpack.c.l.b16 %v129
  %v175 = vunpack.c.l.b16 %v130
  %v176 = vunpack.c.l.b16 %v131
  %v177 = vunpack.c.l.b16 %v132
  %v178 = vunpack.c.l.b16 %v133
  %v179 = vpack.c.b16 %v171, %v170
  %v180 = vpack.c.b16 %v173, %v172
  %v181 = vpack.c.b16 %v175, %v174
  %v182 = vpack.c.b16 %v177, %v176
  %v183 = vpack.c.b16 %v178, %v178
  %vm188 = vcmask 556032
  %v190 = vsel %vm188, %v151, 0
  %v193 = vsel %vm188, %v160, 0
  %vm195 = vcmask 1041408
  %v197 = vsel %vm195, %v183, 0
  %199 = vmatprep.subr.bf16.mxu0 0
  %200 = vmatpush1.bf16.msra.mxu0 %v179
  %201 = vmatprep.subr.bf16.mxu0 0
  %202 = vmatpush1.bf16.msra.mxu0 %v180
  %203 = vmatprep.subr.bf16.mxu0 0
  %204 = vmatpush1.bf16.msra.mxu0 %v181
  %205 = vmatprep.subr.bf16.mxu0 0
  %206 = vmatpush1.bf16.msra.mxu0 %v182
  %207 = vmatprep.subr.bf16.mxu0 0
  %208 = vmatpush1.bf16.msra.mxu0 %v197
  %209 = vmatprep.subr.bf16.mxu0 0
  %210 = vmatpush1.bf16.msra.mxu0 0
  %211 = vmatprep.subr.bf16.mxu0 0
  %212 = vmatpush1.bf16.msra.mxu0 0
  %213 = vmatprep.subr.bf16.mxu0 0
  %214 = vmatpush1.bf16.msra.mxu0 0
  %215 = vmatprep.subr.bf16.mxu0 0
  %216 = vmatpush1.bf16.msra.mxu0 0
  %217 = vmatprep.subr.bf16.mxu0 0
  %218 = vmatpush1.bf16.msra.mxu0 0
  %219 = vmatprep.subr.bf16.mxu0 0
  %220 = vmatpush1.bf16.msra.mxu0 0
  %221 = vmatprep.subr.bf16.mxu0 0
  %222 = vmatpush1.bf16.msra.mxu0 0
  %223 = vmatprep.subr.bf16.mxu0 0
  %224 = vmatpush1.bf16.msra.mxu0 0
  %225 = vmatprep.subr.bf16.mxu0 0
  %226 = vmatpush1.bf16.msra.mxu0 0
  %227 = vmatprep.subr.bf16.mxu0 0
  %228 = vmatpush1.bf16.msra.mxu0 0
  %229 = vmatprep.subr.bf16.mxu0 0
  %230 = vmatpush1.bf16.msra.mxu0 0
  %231 = vmatprep.mubr.bf16.mxu0 0
  %232 = vmatmul.mubr.bf16.gmra.mrb[0].mxu0 %v190
  %v233 = vpop.f32.mrb[0].mxu0
  %v234 = vadd.f32 0.0, %v233
  %v235 = vpop.f32.mrb[0].mxu0
  %v236 = vpop.f32.mrb[0].mxu0
  %v237 = vadd.f32 0.0, %v236
  %v238 = vpop.f32.mrb[0].mxu0
  %239 = vmatprep.mubr.bf16.mxu0 0
  %240 = vmatmul.mubr.bf16.gmra.mrb[0].mxu0 %v193
  %v241 = vpop.f32.mrb[0].mxu0
  %v242 = vadd.f32 0.0, %v241
  %v243 = vpop.f32.mrb[0].mxu0
  %v244 = vpop.f32.mrb[0].mxu0
  %v245 = vadd.f32 0.0, %v244
  %v246 = vpop.f32.mrb[0].mxu0
  %247 = vdwg.mxu0
  %v248 = vld [vmem:[#allocation2] sm:$0xf0]
  %s249 = scalar_lea.vmem %s4, 36
  %v250 = vld [vmem:[%s249] sm:$0xf]
  %v251 = vld [vmem:[%s249 + $0x4] sm:$0xf]
  %v252 = vld [vmem:[%s249 + $0x8] sm:$0xf]
  %v253 = vld [vmem:[%s249 + $0xc] sm:$0xf]
  %v254 = vld [vmem:[%s249 + $0x10] sm:$0xf]
  %v255 = vld [vmem:[%s249 + $0x14] sm:$0xf]
  %v256 = vld [vmem:[%s249 + $0x18] sm:$0xf]
  %v257 = vld [vmem:[%s249 + $0x1c] sm:$0xf]
  %v258 = vld [vmem:[%s249 + $0x20] sm:$0x3]
  %vm262 = vcmask 1043456
  %v263 = vrot.slane %v248, 4
  %v264 = vrot.slane %v123, 4
  %v265 = vsel %vm262, %v263, %v264
  %v266 = vrot.slane %v124, 4
  %v267 = vsel %vm262, %v264, %v266
  %v277 = vunpack.c.l.b16 %v250
  %v278 = vunpack.c.l.b16 %v251
  %v279 = vunpack.c.l.b16 %v252
  %v280 = vunpack.c.l.b16 %v253
  %v281 = vunpack.c.l.b16 %v254
  %v282 = vunpack.c.l.b16 %v255
  %v283 = vunpack.c.l.b16 %v256
  %v284 = vunpack.c.l.b16 %v257
  %v285 = vunpack.c.l.b16 %v258
  %v286 = vpack.c.b16 %v278, %v277
  %v287 = vpack.c.b16 %v280, %v279
  %v288 = vpack.c.b16 %v282, %v281
  %v289 = vpack.c.b16 %v284, %v283
  %v290 = vpack.c.b16 %v285, %v285
  %v296 = vsel %vm188, %v265, 0
  %v299 = vsel %vm188, %v267, 0
  %v302 = vsel %vm195, %v290, 0
  %304 = vmatprep.subr.bf16.mxu0 0
  %305 = vmatpush1.bf16.msra.mxu0 %v286
  %306 = vmatprep.subr.bf16.mxu0 0
  %307 = vmatpush1.bf16.msra.mxu0 %v287
  %308 = vmatprep.subr.bf16.mxu0 0
  %309 = vmatpush1.bf16.msra.mxu0 %v288
  %310 = vmatprep.subr.bf16.mxu0 0
  %311 = vmatpush1.bf16.msra.mxu0 %v289
  %312 = vmatprep.subr.bf16.mxu0 0
  %313 = vmatpush1.bf16.msra.mxu0 %v302
  %314 = vmatprep.subr.bf16.mxu0 0
  %315 = vmatpush1.bf16.msra.mxu0 0
  %316 = vmatprep.subr.bf16.mxu0 0
  %317 = vmatpush1.bf16.msra.mxu0 0
  %318 = vmatprep.subr.bf16.mxu0 0
  %319 = vmatpush1.bf16.msra.mxu0 0
  %320 = vmatprep.subr.bf16.mxu0 0
  %321 = vmatpush1.bf16.msra.mxu0 0
  %322 = vmatprep.subr.bf16.mxu0 0
  %323 = vmatpush1.bf16.msra.mxu0 0
  %324 = vmatprep.subr.bf16.mxu0 0
  %325 = vmatpush1.bf16.msra.mxu0 0
  %326 = vmatprep.subr.bf16.mxu0 0
  %327 = vmatpush1.bf16.msra.mxu0 0
  %328 = vmatprep.subr.bf16.mxu0 0
  %329 = vmatpush1.bf16.msra.mxu0 0
  %330 = vmatprep.subr.bf16.mxu0 0
  %331 = vmatpush1.bf16.msra.mxu0 0
  %332 = vmatprep.subr.bf16.mxu0 0
  %333 = vmatpush1.bf16.msra.mxu0 0
  %334 = vmatprep.subr.bf16.mxu0 0
  %335 = vmatpush1.bf16.msra.mxu0 0
  %336 = vmatprep.mubr.bf16.mxu0 0
  %337 = vmatmul.mubr.bf16.gmra.mrb[0].mxu0 %v296
  %v338 = vpop.f32.mrb[0].mxu0
  %v339 = vadd.f32 0.0, %v338
  %v340 = vpop.f32.mrb[0].mxu0
  %v341 = vpop.f32.mrb[0].mxu0
  %v342 = vadd.f32 0.0, %v341
  %v343 = vpop.f32.mrb[0].mxu0
  %344 = vmatprep.mubr.bf16.mxu0 0
  %345 = vmatmul.mubr.bf16.gmra.mrb[0].mxu0 %v299
  %v346 = vpop.f32.mrb[0].mxu0
  %v347 = vadd.f32 0.0, %v346
  %v348 = vpop.f32.mrb[0].mxu0
  %v349 = vpop.f32.mrb[0].mxu0
  %v350 = vadd.f32 0.0, %v349
  %v351 = vpop.f32.mrb[0].mxu0
  %352 = vdwg.mxu0
  %v353 = vld [vmem:[#allocation2 + $0x10] sm:$0x1f]
  %s354 = scalar_lea.vmem %s4, 72
  %v355 = vld [vmem:[%s354] sm:$0xf]
  %v356 = vld [vmem:[%s354 + $0x4] sm:$0xf]
  %v357 = vld [vmem:[%s354 + $0x8] sm:$0xf]
  %v358 = vld [vmem:[%s354 + $0xc] sm:$0xf]
  %v359 = vld [vmem:[%s354 + $0x10] sm:$0xf]
  %v360 = vld [vmem:[%s354 + $0x14] sm:$0xf]
  %v361 = vld [vmem:[%s354 + $0x18] sm:$0xf]
  %v362 = vld [vmem:[%s354 + $0x1c] sm:$0xf]
  %v363 = vld [vmem:[%s354 + $0x20] sm:$0x3]
  %vm364 = vsmask.f32 3328
  %v366 = vshrl.u32 %v248, 16
  %v368 = vrot.slane %v366, 4
  %v369 = vshll.u32 %v248, 16
  %v371 = vrot.slane %v369, 5
  %v372 = vor.u32 %v368, %v371
  %v373 = vrot.slane %v144, 4
  %v374 = vrot.slane %v147, 5
  %v375 = vor.u32 %v373, %v374
  %v376 = vsel %vm364, %v372, %v375
  %v378 = vshrl.u32 %v353, 16
  %v380 = vrot.slane %v378, 4
  %v381 = vshll.u32 %v353, 16
  %v383 = vrot.slane %v381, 5
  %v384 = vor.u32 %v380, %v383
  %v385 = vsel %vm364, %v375, %v384
  %v395 = vunpack.c.l.b16 %v355
  %v396 = vunpack.c.l.b16 %v356
  %v397 = vunpack.c.l.b16 %v357
  %v398 = vunpack.c.l.b16 %v358
  %v399 = vunpack.c.l.b16 %v359
  %v400 = vunpack.c.l.b16 %v360
  %v401 = vunpack.c.l.b16 %v361
  %v402 = vunpack.c.l.b16 %v362
  %v403 = vunpack.c.l.b16 %v363
  %v404 = vpack.c.b16 %v396, %v395
  %v405 = vpack.c.b16 %v398, %v397
  %v406 = vpack.c.b16 %v400, %v399
  %v407 = vpack.c.b16 %v402, %v401
  %v408 = vpack.c.b16 %v403, %v403
  %v414 = vsel %vm188, %v376, 0
  %v417 = vsel %vm188, %v385, 0
  %v420 = vsel %vm195, %v408, 0
  %422 = vmatprep.subr.bf16.mxu0 0
  %423 = vmatpush1.bf16.msra.mxu0 %v404
  %424 = vmatprep.subr.bf16.mxu0 0
  %425 = vmatpush1.bf16.msra.mxu0 %v405
  %426 = vmatprep.subr.bf16.mxu0 0
  %427 = vmatpush1.bf16.msra.mxu0 %v406
  %428 = vmatprep.subr.bf16.mxu0 0
  %429 = vmatpush1.bf16.msra.mxu0 %v407
  %430 = vmatprep.subr.bf16.mxu0 0
  %431 = vmatpush1.bf16.msra.mxu0 %v420
  %432 = vmatprep.subr.bf16.mxu0 0
  %433 = vmatpush1.bf16.msra.mxu0 0
  %434 = vmatprep.subr.bf16.mxu0 0
  %435 = vmatpush1.bf16.msra.mxu0 0
  %436 = vmatprep.subr.bf16.mxu0 0
  %437 = vmatpush1.bf16.msra.mxu0 0
  %438 = vmatprep.subr.bf16.mxu0 0
  %439 = vmatpush1.bf16.msra.mxu0 0
  %440 = vmatprep.subr.bf16.mxu0 0
  %441 = vmatpush1.bf16.msra.mxu0 0
  %442 = vmatprep.subr.bf16.mxu0 0
  %443 = vmatpush1.bf16.msra.mxu0 0
  %444 = vmatprep.subr.bf16.mxu0 0
  %445 = vmatpush1.bf16.msra.mxu0 0
  %446 = vmatprep.subr.bf16.mxu0 0
  %447 = vmatpush1.bf16.msra.mxu0 0
  %448 = vmatprep.subr.bf16.mxu0 0
  %449 = vmatpush1.bf16.msra.mxu0 0
  %450 = vmatprep.subr.bf16.mxu0 0
  %451 = vmatpush1.bf16.msra.mxu0 0
  %452 = vmatprep.subr.bf16.mxu0 0
  %453 = vmatpush1.bf16.msra.mxu0 0
  %454 = vmatprep.mubr.bf16.mxu0 0
  %455 = vmatmul.mubr.bf16.gmra.mrb[0].mxu0 %v414
  %v456 = vpop.f32.mrb[0].mxu0
  %v457 = vadd.f32 0.0, %v456
  %v458 = vpop.f32.mrb[0].mxu0
  %v459 = vpop.f32.mrb[0].mxu0
  %v460 = vadd.f32 0.0, %v459
  %v461 = vpop.f32.mrb[0].mxu0
  %462 = vmatprep.mubr.bf16.mxu0 0
  %463 = vmatmul.mubr.bf16.gmra.mrb[0].mxu0 %v417
  %v464 = vpop.f32.mrb[0].mxu0
  %v465 = vadd.f32 0.0, %v464
  %v466 = vpop.f32.mrb[0].mxu0
  %v467 = vpop.f32.mrb[0].mxu0
  %v468 = vadd.f32 0.0, %v467
  %v469 = vpop.f32.mrb[0].mxu0
  %470 = vdwg.mxu0
  %v471 = vmul.f32 %v102, %v234
  %v472 = vmul.f32 %v103, %v237
  %v473 = vmul.f32 %v104, %v242
  %v474 = vmul.f32 %v105, %v245
  %v475 = vadd.f32 %v471, %v339
  %v476 = vadd.f32 %v472, %v342
  %v477 = vadd.f32 %v473, %v347
  %v478 = vadd.f32 %v474, %v350
  %v479 = vmul.f32 %v118, %v457
  %v480 = vmul.f32 %v119, %v460
  %v481 = vmul.f32 %v120, %v465
  %v482 = vmul.f32 %v121, %v468
  %v483 = vadd.f32 %v475, %v479
  %v484 = vadd.f32 %v476, %v480
  %v485 = vadd.f32 %v477, %v481
  %v486 = vadd.f32 %v478, %v482
  %487 = vst [vmem:[#allocation3] sm:$0xff] %v483
  %488 = vst [vmem:[#allocation3 + $0x8] sm:$0xff] %v484
  %489 = vst [vmem:[#allocation3 + $0x10] sm:$0xff] %v485
  %490 = vst [vmem:[#allocation3 + $0x18] sm:$0xff] %v486
  %v491 = vld [vmem:[#allocation2] sm:$0xf8]
  %v492 = vld [vmem:[#allocation2 + $0x8] sm:$0xff]
  %v493 = vld [vmem:[#allocation2 + $0x10] sm:$0xf]
  %v494 = vld [vmem:[%s1] sm:$0xf]
  %v495 = vld [vmem:[%s1 + $0x4] sm:$0xf]
  %v496 = vld [vmem:[%s1 + $0x8] sm:$0xf]
  %v497 = vld [vmem:[%s1 + $0xc] sm:$0xf]
  %v498 = vld [vmem:[%s1 + $0x10] sm:$0xf]
  %v499 = vld [vmem:[%s1 + $0x14] sm:$0xf]
  %v500 = vld [vmem:[%s1 + $0x18] sm:$0xf]
  %v501 = vld [vmem:[%s1 + $0x1c] sm:$0xf]
  %v502 = vld [vmem:[%s1 + $0x20] sm:$0x3]
  %v504 = vshrl.u32 %v491, 16
  %v506 = vrot.slane %v504, 3
  %v507 = vshll.u32 %v491, 16
  %v509 = vrot.slane %v507, 4
  %v510 = vor.u32 %v506, %v509
  %v512 = vshrl.u32 %v492, 16
  %v514 = vrot.slane %v512, 3
  %v515 = vshll.u32 %v492, 16
  %v517 = vrot.slane %v515, 4
  %v518 = vor.u32 %v514, %v517
  %v519 = vsel %vm134, %v510, %v518
  %v521 = vshrl.u32 %v493, 16
  %v523 = vrot.slane %v521, 3
  %v524 = vshll.u32 %v493, 16
  %v526 = vrot.slane %v524, 4
  %v527 = vor.u32 %v523, %v526
  %v528 = vsel %vm134, %v518, %v527
  %v538 = vunpack.c.l.b16 %v494
  %v539 = vunpack.c.l.b16 %v495
  %v540 = vunpack.c.l.b16 %v496
  %v541 = vunpack.c.l.b16 %v497
  %v542 = vunpack.c.l.b16 %v498
  %v543 = vunpack.c.l.b16 %v499
  %v544 = vunpack.c.l.b16 %v500
  %v545 = vunpack.c.l.b16 %v501
  %v546 = vunpack.c.l.b16 %v502
  %v547 = vpack.c.b16 %v539, %v538
  %v548 = vpack.c.b16 %v541, %v540
  %v549 = vpack.c.b16 %v543, %v542
  %v550 = vpack.c.b16 %v545, %v544
  %v551 = vpack.c.b16 %v546, %v546
  %v557 = vsel %vm188, %v519, 0
  %v560 = vsel %vm188, %v528, 0
  %v563 = vsel %vm195, %v551, 0
  %565 = vmatprep.subr.bf16.mxu0 0
  %566 = vmatpush1.bf16.msra.mxu0 %v547
  %567 = vmatprep.subr.bf16.mxu0 0
  %568 = vmatpush1.bf16.msra.mxu0 %v548
  %569 = vmatprep.subr.bf16.mxu0 0
  %570 = vmatpush1.bf16.msra.mxu0 %v549
  %571 = vmatprep.subr.bf16.mxu0 0
  %572 = vmatpush1.bf16.msra.mxu0 %v550
  %573 = vmatprep.subr.bf16.mxu0 0
  %574 = vmatpush1.bf16.msra.mxu0 %v563
  %575 = vmatprep.subr.bf16.mxu0 0
  %576 = vmatpush1.bf16.msra.mxu0 0
  %577 = vmatprep.subr.bf16.mxu0 0
  %578 = vmatpush1.bf16.msra.mxu0 0
  %579 = vmatprep.subr.bf16.mxu0 0
  %580 = vmatpush1.bf16.msra.mxu0 0
  %581 = vmatprep.subr.bf16.mxu0 0
  %582 = vmatpush1.bf16.msra.mxu0 0
  %583 = vmatprep.subr.bf16.mxu0 0
  %584 = vmatpush1.bf16.msra.mxu0 0
  %585 = vmatprep.subr.bf16.mxu0 0
  %586 = vmatpush1.bf16.msra.mxu0 0
  %587 = vmatprep.subr.bf16.mxu0 0
  %588 = vmatpush1.bf16.msra.mxu0 0
  %589 = vmatprep.subr.bf16.mxu0 0
  %590 = vmatpush1.bf16.msra.mxu0 0
  %591 = vmatprep.subr.bf16.mxu0 0
  %592 = vmatpush1.bf16.msra.mxu0 0
  %593 = vmatprep.subr.bf16.mxu0 0
  %594 = vmatpush1.bf16.msra.mxu0 0
  %595 = vmatprep.subr.bf16.mxu0 0
  %596 = vmatpush1.bf16.msra.mxu0 0
  %597 = vmatprep.mubr.bf16.mxu0 0
  %598 = vmatmul.mubr.bf16.gmra.mrb[0].mxu0 %v557
  %v599 = vpop.f32.mrb[0].mxu0
  %v600 = vadd.f32 0.0, %v599
  %v601 = vpop.f32.mrb[0].mxu0
  %v602 = vpop.f32.mrb[0].mxu0
  %v603 = vadd.f32 0.0, %v602
  %v604 = vpop.f32.mrb[0].mxu0
  %605 = vmatprep.mubr.bf16.mxu0 0
  %606 = vmatmul.mubr.bf16.gmra.mrb[0].mxu0 %v560
  %v607 = vpop.f32.mrb[0].mxu0
  %v608 = vadd.f32 0.0, %v607
  %v609 = vpop.f32.mrb[0].mxu0
  %v610 = vpop.f32.mrb[0].mxu0
  %v611 = vadd.f32 0.0, %v610
  %v612 = vpop.f32.mrb[0].mxu0
  %613 = vdwg.mxu0
  %v614 = vld [vmem:[#allocation2] sm:$0xf0]
  %s615 = scalar_lea.vmem %s1, 36
  %v616 = vld [vmem:[%s615] sm:$0xf]
  %v617 = vld [vmem:[%s615 + $0x4] sm:$0xf]
  %v618 = vld [vmem:[%s615 + $0x8] sm:$0xf]
  %v619 = vld [vmem:[%s615 + $0xc] sm:$0xf]
  %v620 = vld [vmem:[%s615 + $0x10] sm:$0xf]
  %v621 = vld [vmem:[%s615 + $0x14] sm:$0xf]
  %v622 = vld [vmem:[%s615 + $0x18] sm:$0xf]
  %v623 = vld [vmem:[%s615 + $0x1c] sm:$0xf]
  %v624 = vld [vmem:[%s615 + $0x20] sm:$0x3]
  %v628 = vrot.slane %v614, 4
  %v629 = vrot.slane %v492, 4
  %v630 = vsel %vm262, %v628, %v629
  %v631 = vrot.slane %v493, 4
  %v632 = vsel %vm262, %v629, %v631
  %v642 = vunpack.c.l.b16 %v616
  %v643 = vunpack.c.l.b16 %v617
  %v644 = vunpack.c.l.b16 %v618
  %v645 = vunpack.c.l.b16 %v619
  %v646 = vunpack.c.l.b16 %v620
  %v647 = vunpack.c.l.b16 %v621
  %v648 = vunpack.c.l.b16 %v622
  %v649 = vunpack.c.l.b16 %v623
  %v650 = vunpack.c.l.b16 %v624
  %v651 = vpack.c.b16 %v643, %v642
  %v652 = vpack.c.b16 %v645, %v644
  %v653 = vpack.c.b16 %v647, %v646
  %v654 = vpack.c.b16 %v649, %v648
  %v655 = vpack.c.b16 %v650, %v650
  %v661 = vsel %vm188, %v630, 0
  %v664 = vsel %vm188, %v632, 0
  %v667 = vsel %vm195, %v655, 0
  %669 = vmatprep.subr.bf16.mxu0 0
  %670 = vmatpush1.bf16.msra.mxu0 %v651
  %671 = vmatprep.subr.bf16.mxu0 0
  %672 = vmatpush1.bf16.msra.mxu0 %v652
  %673 = vmatprep.subr.bf16.mxu0 0
  %674 = vmatpush1.bf16.msra.mxu0 %v653
  %675 = vmatprep.subr.bf16.mxu0 0
  %676 = vmatpush1.bf16.msra.mxu0 %v654
  %677 = vmatprep.subr.bf16.mxu0 0
  %678 = vmatpush1.bf16.msra.mxu0 %v667
  %679 = vmatprep.subr.bf16.mxu0 0
  %680 = vmatpush1.bf16.msra.mxu0 0
  %681 = vmatprep.subr.bf16.mxu0 0
  %682 = vmatpush1.bf16.msra.mxu0 0
  %683 = vmatprep.subr.bf16.mxu0 0
  %684 = vmatpush1.bf16.msra.mxu0 0
  %685 = vmatprep.subr.bf16.mxu0 0
  %686 = vmatpush1.bf16.msra.mxu0 0
  %687 = vmatprep.subr.bf16.mxu0 0
  %688 = vmatpush1.bf16.msra.mxu0 0
  %689 = vmatprep.subr.bf16.mxu0 0
  %690 = vmatpush1.bf16.msra.mxu0 0
  %691 = vmatprep.subr.bf16.mxu0 0
  %692 = vmatpush1.bf16.msra.mxu0 0
  %693 = vmatprep.subr.bf16.mxu0 0
  %694 = vmatpush1.bf16.msra.mxu0 0
  %695 = vmatprep.subr.bf16.mxu0 0
  %696 = vmatpush1.bf16.msra.mxu0 0
  %697 = vmatprep.subr.bf16.mxu0 0
  %698 = vmatpush1.bf16.msra.mxu0 0
  %699 = vmatprep.subr.bf16.mxu0 0
  %700 = vmatpush1.bf16.msra.mxu0 0
  %701 = vmatprep.mubr.bf16.mxu0 0
  %702 = vmatmul.mubr.bf16.gmra.mrb[0].mxu0 %v661
  %v703 = vpop.f32.mrb[0].mxu0
  %v704 = vadd.f32 0.0, %v703
  %v705 = vpop.f32.mrb[0].mxu0
  %v706 = vpop.f32.mrb[0].mxu0
  %v707 = vadd.f32 0.0, %v706
  %v708 = vpop.f32.mrb[0].mxu0
  %709 = vmatprep.mubr.bf16.mxu0 0
  %710 = vmatmul.mubr.bf16.gmra.mrb[0].mxu0 %v664
  %v711 = vpop.f32.mrb[0].mxu0
  %v712 = vadd.f32 0.0, %v711
  %v713 = vpop.f32.mrb[0].mxu0
  %v714 = vpop.f32.mrb[0].mxu0
  %v715 = vadd.f32 0.0, %v714
  %v716 = vpop.f32.mrb[0].mxu0
  %717 = vdwg.mxu0
  %v718 = vld [vmem:[#allocation2 + $0x10] sm:$0x1f]
  %s719 = scalar_lea.vmem %s1, 72
  %v720 = vld [vmem:[%s719] sm:$0xf]
  %v721 = vld [vmem:[%s719 + $0x4] sm:$0xf]
  %v722 = vld [vmem:[%s719 + $0x8] sm:$0xf]
  %v723 = vld [vmem:[%s719 + $0xc] sm:$0xf]
  %v724 = vld [vmem:[%s719 + $0x10] sm:$0xf]
  %v725 = vld [vmem:[%s719 + $0x14] sm:$0xf]
  %v726 = vld [vmem:[%s719 + $0x18] sm:$0xf]
  %v727 = vld [vmem:[%s719 + $0x1c] sm:$0xf]
  %v728 = vld [vmem:[%s719 + $0x20] sm:$0x3]
  %v730 = vshrl.u32 %v614, 16
  %v732 = vrot.slane %v730, 4
  %v733 = vshll.u32 %v614, 16
  %v735 = vrot.slane %v733, 5
  %v736 = vor.u32 %v732, %v735
  %v737 = vrot.slane %v512, 4
  %v738 = vrot.slane %v515, 5
  %v739 = vor.u32 %v737, %v738
  %v740 = vsel %vm364, %v736, %v739
  %v742 = vshrl.u32 %v718, 16
  %v744 = vrot.slane %v742, 4
  %v745 = vshll.u32 %v718, 16
  %v747 = vrot.slane %v745, 5
  %v748 = vor.u32 %v744, %v747
  %v749 = vsel %vm364, %v739, %v748
  %v759 = vunpack.c.l.b16 %v720
  %v760 = vunpack.c.l.b16 %v721
  %v761 = vunpack.c.l.b16 %v722
  %v762 = vunpack.c.l.b16 %v723
  %v763 = vunpack.c.l.b16 %v724
  %v764 = vunpack.c.l.b16 %v725
  %v765 = vunpack.c.l.b16 %v726
  %v766 = vunpack.c.l.b16 %v727
  %v767 = vunpack.c.l.b16 %v728
  %v768 = vpack.c.b16 %v760, %v759
  %v769 = vpack.c.b16 %v762, %v761
  %v770 = vpack.c.b16 %v764, %v763
  %v771 = vpack.c.b16 %v766, %v765
  %v772 = vpack.c.b16 %v767, %v767
  %v778 = vsel %vm188, %v740, 0
  %v781 = vsel %vm188, %v749, 0
  %v784 = vsel %vm195, %v772, 0
  %786 = vmatprep.subr.bf16.mxu0 0
  %787 = vmatpush1.bf16.msra.mxu0 %v768
  %788 = vmatprep.subr.bf16.mxu0 0
  %789 = vmatpush1.bf16.msra.mxu0 %v769
  %790 = vmatprep.subr.bf16.mxu0 0
  %791 = vmatpush1.bf16.msra.mxu0 %v770
  %792 = vmatprep.subr.bf16.mxu0 0
  %793 = vmatpush1.bf16.msra.mxu0 %v771
  %794 = vmatprep.subr.bf16.mxu0 0
  %795 = vmatpush1.bf16.msra.mxu0 %v784
  %796 = vmatprep.subr.bf16.mxu0 0
  %797 = vmatpush1.bf16.msra.mxu0 0
  %798 = vmatprep.subr.bf16.mxu0 0
  %799 = vmatpush1.bf16.msra.mxu0 0
  %800 = vmatprep.subr.bf16.mxu0 0
  %801 = vmatpush1.bf16.msra.mxu0 0
  %802 = vmatprep.subr.bf16.mxu0 0
  %803 = vmatpush1.bf16.msra.mxu0 0
  %804 = vmatprep.subr.bf16.mxu0 0
  %805 = vmatpush1.bf16.msra.mxu0 0
  %806 = vmatprep.subr.bf16.mxu0 0
  %807 = vmatpush1.bf16.msra.mxu0 0
  %808 = vmatprep.subr.bf16.mxu0 0
  %809 = vmatpush1.bf16.msra.mxu0 0
  %810 = vmatprep.subr.bf16.mxu0 0
  %811 = vmatpush1.bf16.msra.mxu0 0
  %812 = vmatprep.subr.bf16.mxu0 0
  %813 = vmatpush1.bf16.msra.mxu0 0
  %814 = vmatprep.subr.bf16.mxu0 0
  %815 = vmatpush1.bf16.msra.mxu0 0
  %816 = vmatprep.subr.bf16.mxu0 0
  %817 = vmatpush1.bf16.msra.mxu0 0
  %818 = vmatprep.mubr.bf16.mxu0 0
  %819 = vmatmul.mubr.bf16.gmra.mrb[0].mxu0 %v778
  %v820 = vpop.f32.mrb[0].mxu0
  %v821 = vadd.f32 0.0, %v820
  %v822 = vpop.f32.mrb[0].mxu0
  %v823 = vpop.f32.mrb[0].mxu0
  %v824 = vadd.f32 0.0, %v823
  %v825 = vpop.f32.mrb[0].mxu0
  %826 = vmatprep.mubr.bf16.mxu0 0
  %827 = vmatmul.mubr.bf16.gmra.mrb[0].mxu0 %v781
  %v828 = vpop.f32.mrb[0].mxu0
  %v829 = vadd.f32 0.0, %v828
  %v830 = vpop.f32.mrb[0].mxu0
  %v831 = vpop.f32.mrb[0].mxu0
  %v832 = vadd.f32 0.0, %v831
  %v833 = vpop.f32.mrb[0].mxu0
  %834 = vdwg.mxu0
  %v835 = vmul.f32 %v102, %v600
  %v836 = vmul.f32 %v103, %v603
  %v837 = vmul.f32 %v104, %v608
  %v838 = vmul.f32 %v105, %v611
  %v839 = vadd.f32 %v835, %v704
  %v840 = vadd.f32 %v836, %v707
  %v841 = vadd.f32 %v837, %v712
  %v842 = vadd.f32 %v838, %v715
  %v843 = vmul.f32 %v118, %v821
  %v844 = vmul.f32 %v119, %v824
  %v845 = vmul.f32 %v120, %v829
  %v846 = vmul.f32 %v121, %v832
  %v847 = vadd.f32 %v839, %v843
  %v848 = vadd.f32 %v840, %v844
  %v849 = vadd.f32 %v841, %v845
  %v850 = vadd.f32 %v842, %v846
  %v851 = vld [vmem:[%s2] sm:$0x1]
  %v853 = vlaneseq
  %v854 = vshrl.u32 %v853, 7
  %v855 = vsub.s32 0, %v854
  %v856 = vrot.slane %v851, %v855
  %v858 = vadd.f32 %v847, %v856
  %v859 = vadd.f32 %v848, %v856
  %v860 = vadd.f32 %v849, %v856
  %v861 = vadd.f32 %v850, %v856
  %vm862 = vcmp.ge.f32.partialorder %v858, 0.0
  %vm863 = vcmp.ge.f32.partialorder %v859, 0.0
  %vm864 = vcmp.ge.f32.partialorder %v860, 0.0
  %vm865 = vcmp.ge.f32.partialorder %v861, 0.0
  %v866 = vld [vmem:[%s3] sm:$0x1]
  %v868 = vlaneseq
  %v869 = vshrl.u32 %v868, 7
  %v870 = vsub.s32 0, %v869
  %v871 = vrot.slane %v866, %v870
  %v873 = vmul.f32 %v871, %v858
  %v874 = vmul.f32 %v871, %v859
  %v875 = vmul.f32 %v871, %v860
  %v876 = vmul.f32 %v871, %v861
  %v877 = vsel %vm862, %v858, %v873
  %v878 = vsel %vm863, %v859, %v874
  %v879 = vsel %vm864, %v860, %v875
  %v880 = vsel %vm865, %v861, %v876
  %v881 = vpack.c.bf16 %v878, %v877
  %v882 = vpack.c.bf16 %v880, %v879
  %v885 = vrot.slane %v881, 4
  %v886 = vrot.slane %v882, 4
  %v887 = vsel %vm262, %v885, %v886
  %891 = vst.msk [vmem:[#allocation2] sm:$0xf0] %vm55, %v885
  %892 = vst.msk [vmem:[#allocation2 + $0x8] sm:$0xff] %vm57, %v887
  %893 = vst.msk [vmem:[#allocation2 + $0x10] sm:$0xf] %vm59, %v886
  %v894 = vld [vmem:[#allocation3] sm:$0xff]
  %v895 = vld [vmem:[#allocation3 + $0x8] sm:$0xff]
  %v896 = vld [vmem:[#allocation3 + $0x10] sm:$0xff]
  %v897 = vld [vmem:[#allocation3 + $0x18] sm:$0xff]
  %v898 = vld [vmem:[#allocation2] sm:$0xf8]
  %v899 = vld [vmem:[#allocation2 + $0x8] sm:$0xff]
  %v900 = vld [vmem:[#allocation2 + $0x10] sm:$0xf]
  %s901 = scalar_lea.vmem %s4, 108
  %v902 = vld [vmem:[%s901] sm:$0xf]
  %v903 = vld [vmem:[%s901 + $0x4] sm:$0xf]
  %v904 = vld [vmem:[%s901 + $0x8] sm:$0xf]
  %v905 = vld [vmem:[%s901 + $0xc] sm:$0xf]
  %v906 = vld [vmem:[%s901 + $0x10] sm:$0xf]
  %v907 = vld [vmem:[%s901 + $0x14] sm:$0xf]
  %v908 = vld [vmem:[%s901 + $0x18] sm:$0xf]
  %v909 = vld [vmem:[%s901 + $0x1c] sm:$0xf]
  %v910 = vld [vmem:[%s901 + $0x20] sm:$0x3]
  %v912 = vshrl.u32 %v898, 16
  %v914 = vrot.slane %v912, 3
  %v915 = vshll.u32 %v898, 16
  %v917 = vrot.slane %v915, 4
  %v918 = vor.u32 %v914, %v917
  %v920 = vshrl.u32 %v899, 16
  %v922 = vrot.slane %v920, 3
  %v923 = vshll.u32 %v899, 16
  %v925 = vrot.slane %v923, 4
  %v926 = vor.u32 %v922, %v925
  %v927 = vsel %vm134, %v918, %v926
  %v929 = vshrl.u32 %v900, 16
  %v931 = vrot.slane %v929, 3
  %v932 = vshll.u32 %v900, 16
  %v934 = vrot.slane %v932, 4
  %v935 = vor.u32 %v931, %v934
  %v936 = vsel %vm134, %v926, %v935
  %v946 = vunpack.c.l.b16 %v902
  %v947 = vunpack.c.l.b16 %v903
  %v948 = vunpack.c.l.b16 %v904
  %v949 = vunpack.c.l.b16 %v905
  %v950 = vunpack.c.l.b16 %v906
  %v951 = vunpack.c.l.b16 %v907
  %v952 = vunpack.c.l.b16 %v908
  %v953 = vunpack.c.l.b16 %v909
  %v954 = vunpack.c.l.b16 %v910
  %v955 = vpack.c.b16 %v947, %v946
  %v956 = vpack.c.b16 %v949, %v948
  %v957 = vpack.c.b16 %v951, %v950
  %v958 = vpack.c.b16 %v953, %v952
  %v959 = vpack.c.b16 %v954, %v954
  %v965 = vsel %vm188, %v927, 0
  %v968 = vsel %vm188, %v936, 0
  %v971 = vsel %vm195, %v959, 0
  %973 = vmatprep.subr.bf16.mxu0 0
  %974 = vmatpush1.bf16.msra.mxu0 %v955
  %975 = vmatprep.subr.bf16.mxu0 0
  %976 = vmatpush1.bf16.msra.mxu0 %v956
  %977 = vmatprep.subr.bf16.mxu0 0
  %978 = vmatpush1.bf16.msra.mxu0 %v957
  %979 = vmatprep.subr.bf16.mxu0 0
  %980 = vmatpush1.bf16.msra.mxu0 %v958
  %981 = vmatprep.subr.bf16.mxu0 0
  %982 = vmatpush1.bf16.msra.mxu0 %v971
  %983 = vmatprep.subr.bf16.mxu0 0
  %984 = vmatpush1.bf16.msra.mxu0 0
  %985 = vmatprep.subr.bf16.mxu0 0
  %986 = vmatpush1.bf16.msra.mxu0 0
  %987 = vmatprep.subr.bf16.mxu0 0
  %988 = vmatpush1.bf16.msra.mxu0 0
  %989 = vmatprep.subr.bf16.mxu0 0
  %990 = vmatpush1.bf16.msra.mxu0 0
  %991 = vmatprep.subr.bf16.mxu0 0
  %992 = vmatpush1.bf16.msra.mxu0 0
  %993 = vmatprep.subr.bf16.mxu0 0
  %994 = vmatpush1.bf16.msra.mxu0 0
  %995 = vmatprep.subr.bf16.mxu0 0
  %996 = vmatpush1.bf16.msra.mxu0 0
  %997 = vmatprep.subr.bf16.mxu0 0
  %998 = vmatpush1.bf16.msra.mxu0 0
  %999 = vmatprep.subr.bf16.mxu0 0
  %1000 = vmatpush1.bf16.msra.mxu0 0
  %1001 = vmatprep.subr.bf16.mxu0 0
  %1002 = vmatpush1.bf16.msra.mxu0 0
  %1003 = vmatprep.subr.bf16.mxu0 0
  %1004 = vmatpush1.bf16.msra.mxu0 0
  %1005 = vmatprep.mubr.bf16.mxu0 0
  %1006 = vmatmul.mubr.bf16.gmra.mrb[0].mxu0 %v965
  %v1007 = vpop.f32.mrb[0].mxu0
  %v1008 = vadd.f32 0.0, %v1007
  %v1009 = vpop.f32.mrb[0].mxu0
  %v1010 = vpop.f32.mrb[0].mxu0
  %v1011 = vadd.f32 0.0, %v1010
  %v1012 = vpop.f32.mrb[0].mxu0
  %1013 = vmatprep.mubr.bf16.mxu0 0
  %1014 = vmatmul.mubr.bf16.gmra.mrb[0].mxu0 %v968
  %v1015 = vpop.f32.mrb[0].mxu0
  %v1016 = vadd.f32 0.0, %v1015
  %v1017 = vpop.f32.mrb[0].mxu0
  %v1018 = vpop.f32.mrb[0].mxu0
  %v1019 = vadd.f32 0.0, %v1018
  %v1020 = vpop.f32.mrb[0].mxu0
  %1021 = vdwg.mxu0
  %v1022 = vld [vmem:[#allocation2] sm:$0xf0]
  %s1023 = scalar_lea.vmem %s4, 144
  %v1024 = vld [vmem:[%s1023] sm:$0xf]
  %v1025 = vld [vmem:[%s1023 + $0x4] sm:$0xf]
  %v1026 = vld [vmem:[%s1023 + $0x8] sm:$0xf]
  %v1027 = vld [vmem:[%s1023 + $0xc] sm:$0xf]
  %v1028 = vld [vmem:[%s1023 + $0x10] sm:$0xf]
  %v1029 = vld [vmem:[%s1023 + $0x14] sm:$0xf]
  %v1030 = vld [vmem:[%s1023 + $0x18] sm:$0xf]
  %v1031 = vld [vmem:[%s1023 + $0x1c] sm:$0xf]
  %v1032 = vld [vmem:[%s1023 + $0x20] sm:$0x3]
  %v1036 = vrot.slane %v1022, 4
  %v1037 = vrot.slane %v899, 4
  %v1038 = vsel %vm262, %v1036, %v1037
  %v1039 = vrot.slane %v900, 4
  %v1040 = vsel %vm262, %v1037, %v1039
  %v1050 = vunpack.c.l.b16 %v1024
  %v1051 = vunpack.c.l.b16 %v1025
  %v1052 = vunpack.c.l.b16 %v1026
  %v1053 = vunpack.c.l.b16 %v1027
  %v1054 = vunpack.c.l.b16 %v1028
  %v1055 = vunpack.c.l.b16 %v1029
  %v1056 = vunpack.c.l.b16 %v1030
  %v1057 = vunpack.c.l.b16 %v1031
  %v1058 = vunpack.c.l.b16 %v1032
  %v1059 = vpack.c.b16 %v1051, %v1050
  %v1060 = vpack.c.b16 %v1053, %v1052
  %v1061 = vpack.c.b16 %v1055, %v1054
  %v1062 = vpack.c.b16 %v1057, %v1056
  %v1063 = vpack.c.b16 %v1058, %v1058
  %v1069 = vsel %vm188, %v1038, 0
  %v1072 = vsel %vm188, %v1040, 0
  %v1075 = vsel %vm195, %v1063, 0
  %1077 = vmatprep.subr.bf16.mxu0 0
  %1078 = vmatpush1.bf16.msra.mxu0 %v1059
  %1079 = vmatprep.subr.bf16.mxu0 0
  %1080 = vmatpush1.bf16.msra.mxu0 %v1060
  %1081 = vmatprep.subr.bf16.mxu0 0
  %1082 = vmatpush1.bf16.msra.mxu0 %v1061
  %1083 = vmatprep.subr.bf16.mxu0 0
  %1084 = vmatpush1.bf16.msra.mxu0 %v1062
  %1085 = vmatprep.subr.bf16.mxu0 0
  %1086 = vmatpush1.bf16.msra.mxu0 %v1075
  %1087 = vmatprep.subr.bf16.mxu0 0
  %1088 = vmatpush1.bf16.msra.mxu0 0
  %1089 = vmatprep.subr.bf16.mxu0 0
  %1090 = vmatpush1.bf16.msra.mxu0 0
  %1091 = vmatprep.subr.bf16.mxu0 0
  %1092 = vmatpush1.bf16.msra.mxu0 0
  %1093 = vmatprep.subr.bf16.mxu0 0
  %1094 = vmatpush1.bf16.msra.mxu0 0
  %1095 = vmatprep.subr.bf16.mxu0 0
  %1096 = vmatpush1.bf16.msra.mxu0 0
  %1097 = vmatprep.subr.bf16.mxu0 0
  %1098 = vmatpush1.bf16.msra.mxu0 0
  %1099 = vmatprep.subr.bf16.mxu0 0
  %1100 = vmatpush1.bf16.msra.mxu0 0
  %1101 = vmatprep.subr.bf16.mxu0 0
  %1102 = vmatpush1.bf16.msra.mxu0 0
  %1103 = vmatprep.subr.bf16.mxu0 0
  %1104 = vmatpush1.bf16.msra.mxu0 0
  %1105 = vmatprep.subr.bf16.mxu0 0
  %1106 = vmatpush1.bf16.msra.mxu0 0
  %1107 = vmatprep.subr.bf16.mxu0 0
  %1108 = vmatpush1.bf16.msra.mxu0 0
  %1109 = vmatprep.mubr.bf16.mxu0 0
  %1110 = vmatmul.mubr.bf16.gmra.mrb[0].mxu0 %v1069
  %v1111 = vpop.f32.mrb[0].mxu0
  %v1112 = vadd.f32 0.0, %v1111
  %v1113 = vpop.f32.mrb[0].mxu0
  %v1114 = vpop.f32.mrb[0].mxu0
  %v1115 = vadd.f32 0.0, %v1114
  %v1116 = vpop.f32.mrb[0].mxu0
  %1117 = vmatprep.mubr.bf16.mxu0 0
  %1118 = vmatmul.mubr.bf16.gmra.mrb[0].mxu0 %v1072
  %v1119 = vpop.f32.mrb[0].mxu0
  %v1120 = vadd.f32 0.0, %v1119
  %v1121 = vpop.f32.mrb[0].mxu0
  %v1122 = vpop.f32.mrb[0].mxu0
  %v1123 = vadd.f32 0.0, %v1122
  %v1124 = vpop.f32.mrb[0].mxu0
  %1125 = vdwg.mxu0
  %v1126 = vld [vmem:[#allocation2 + $0x10] sm:$0x1f]
  %s1127 = scalar_lea.vmem %s4, 180
  %v1128 = vld [vmem:[%s1127] sm:$0xf]
  %v1129 = vld [vmem:[%s1127 + $0x4] sm:$0xf]
  %v1130 = vld [vmem:[%s1127 + $0x8] sm:$0xf]
  %v1131 = vld [vmem:[%s1127 + $0xc] sm:$0xf]
  %v1132 = vld [vmem:[%s1127 + $0x10] sm:$0xf]
  %v1133 = vld [vmem:[%s1127 + $0x14] sm:$0xf]
  %v1134 = vld [vmem:[%s1127 + $0x18] sm:$0xf]
  %v1135 = vld [vmem:[%s1127 + $0x1c] sm:$0xf]
  %v1136 = vld [vmem:[%s1127 + $0x20] sm:$0x3]
  %v1138 = vshrl.u32 %v1022, 16
  %v1140 = vrot.slane %v1138, 4
  %v1141 = vshll.u32 %v1022, 16
  %v1143 = vrot.slane %v1141, 5
  %v1144 = vor.u32 %v1140, %v1143
  %v1145 = vrot.slane %v920, 4
  %v1146 = vrot.slane %v923, 5
  %v1147 = vor.u32 %v1145, %v1146
  %v1148 = vsel %vm364, %v1144, %v1147
  %v1150 = vshrl.u32 %v1126, 16
  %v1152 = vrot.slane %v1150, 4
  %v1153 = vshll.u32 %v1126, 16
  %v1155 = vrot.slane %v1153, 5
  %v1156 = vor.u32 %v1152, %v1155
  %v1157 = vsel %vm364, %v1147, %v1156
  %v1167 = vunpack.c.l.b16 %v1128
  %v1168 = vunpack.c.l.b16 %v1129
  %v1169 = vunpack.c.l.b16 %v1130
  %v1170 = vunpack.c.l.b16 %v1131
  %v1171 = vunpack.c.l.b16 %v1132
  %v1172 = vunpack.c.l.b16 %v1133
  %v1173 = vunpack.c.l.b16 %v1134
  %v1174 = vunpack.c.l.b16 %v1135
  %v1175 = vunpack.c.l.b16 %v1136
  %v1176 = vpack.c.b16 %v1168, %v1167
  %v1177 = vpack.c.b16 %v1170, %v1169
  %v1178 = vpack.c.b16 %v1172, %v1171
  %v1179 = vpack.c.b16 %v1174, %v1173
  %v1180 = vpack.c.b16 %v1175, %v1175
  %v1186 = vsel %vm188, %v1148, 0
  %v1189 = vsel %vm188, %v1157, 0
  %v1192 = vsel %vm195, %v1180, 0
  %1194 = vmatprep.subr.bf16.mxu0 0
  %1195 = vmatpush1.bf16.msra.mxu0 %v1176
  %1196 = vmatprep.subr.bf16.mxu0 0
  %1197 = vmatpush1.bf16.msra.mxu0 %v1177
  %1198 = vmatprep.subr.bf16.mxu0 0
  %1199 = vmatpush1.bf16.msra.mxu0 %v1178
  %1200 = vmatprep.subr.bf16.mxu0 0
  %1201 = vmatpush1.bf16.msra.mxu0 %v1179
  %1202 = vmatprep.subr.bf16.mxu0 0
  %1203 = vmatpush1.bf16.msra.mxu0 %v1192
  %1204 = vmatprep.subr.bf16.mxu0 0
  %1205 = vmatpush1.bf16.msra.mxu0 0
  %1206 = vmatprep.subr.bf16.mxu0 0
  %1207 = vmatpush1.bf16.msra.mxu0 0
  %1208 = vmatprep.subr.bf16.mxu0 0
  %1209 = vmatpush1.bf16.msra.mxu0 0
  %1210 = vmatprep.subr.bf16.mxu0 0
  %1211 = vmatpush1.bf16.msra.mxu0 0
  %1212 = vmatprep.subr.bf16.mxu0 0
  %1213 = vmatpush1.bf16.msra.mxu0 0
  %1214 = vmatprep.subr.bf16.mxu0 0
  %1215 = vmatpush1.bf16.msra.mxu0 0
  %1216 = vmatprep.subr.bf16.mxu0 0
  %1217 = vmatpush1.bf16.msra.mxu0 0
  %1218 = vmatprep.subr.bf16.mxu0 0
  %1219 = vmatpush1.bf16.msra.mxu0 0
  %1220 = vmatprep.subr.bf16.mxu0 0
  %1221 = vmatpush1.bf16.msra.mxu0 0
  %1222 = vmatprep.subr.bf16.mxu0 0
  %1223 = vmatpush1.bf16.msra.mxu0 0
  %1224 = vmatprep.subr.bf16.mxu0 0
  %1225 = vmatpush1.bf16.msra.mxu0 0
  %1226 = vmatprep.mubr.bf16.mxu0 0
  %1227 = vmatmul.mubr.bf16.gmra.mrb[0].mxu0 %v1186
  %v1228 = vpop.f32.mrb[0].mxu0
  %v1229 = vadd.f32 0.0, %v1228
  %v1230 = vpop.f32.mrb[0].mxu0
  %v1231 = vpop.f32.mrb[0].mxu0
  %v1232 = vadd.f32 0.0, %v1231
  %v1233 = vpop.f32.mrb[0].mxu0
  %1234 = vmatprep.mubr.bf16.mxu0 0
  %1235 = vmatmul.mubr.bf16.gmra.mrb[0].mxu0 %v1189
  %v1236 = vpop.f32.mrb[0].mxu0
  %v1237 = vadd.f32 0.0, %v1236
  %v1238 = vpop.f32.mrb[0].mxu0
  %v1239 = vpop.f32.mrb[0].mxu0
  %v1240 = vadd.f32 0.0, %v1239
  %v1241 = vpop.f32.mrb[0].mxu0
  %1242 = vdwg.mxu0
  %v1243 = vmul.f32 %v102, %v1008
  %v1244 = vmul.f32 %v103, %v1011
  %v1245 = vmul.f32 %v104, %v1016
  %v1246 = vmul.f32 %v105, %v1019
  %v1247 = vadd.f32 %v1243, %v1112
  %v1248 = vadd.f32 %v1244, %v1115
  %v1249 = vadd.f32 %v1245, %v1120
  %v1250 = vadd.f32 %v1246, %v1123
  %v1251 = vmul.f32 %v118, %v1229
  %v1252 = vmul.f32 %v119, %v1232
  %v1253 = vmul.f32 %v120, %v1237
  %v1254 = vmul.f32 %v121, %v1240
  %v1255 = vadd.f32 %v1247, %v1251
  %v1256 = vadd.f32 %v1248, %v1252
  %v1257 = vadd.f32 %v1249, %v1253
  %v1258 = vadd.f32 %v1250, %v1254
  %v1259 = vadd.f32 %v894, %v1255
  %v1260 = vadd.f32 %v895, %v1256
  %v1261 = vadd.f32 %v896, %v1257
  %v1262 = vadd.f32 %v897, %v1258
  %1263 = vst [vmem:[#allocation3] sm:$0xff] %v1259
  %1264 = vst [vmem:[#allocation3 + $0x8] sm:$0xff] %v1260
  %1265 = vst [vmem:[#allocation3 + $0x10] sm:$0xff] %v1261
  %1266 = vst [vmem:[#allocation3 + $0x18] sm:$0xff] %v1262
  %v1267 = vld [vmem:[#allocation2] sm:$0xf8]
  %v1268 = vld [vmem:[#allocation2 + $0x8] sm:$0xff]
  %v1269 = vld [vmem:[#allocation2 + $0x10] sm:$0xf]
  %s1270 = scalar_lea.vmem %s1, 108
  %v1271 = vld [vmem:[%s1270] sm:$0xf]
  %v1272 = vld [vmem:[%s1270 + $0x4] sm:$0xf]
  %v1273 = vld [vmem:[%s1270 + $0x8] sm:$0xf]
  %v1274 = vld [vmem:[%s1270 + $0xc] sm:$0xf]
  %v1275 = vld [vmem:[%s1270 + $0x10] sm:$0xf]
  %v1276 = vld [vmem:[%s1270 + $0x14] sm:$0xf]
  %v1277 = vld [vmem:[%s1270 + $0x18] sm:$0xf]
  %v1278 = vld [vmem:[%s1270 + $0x1c] sm:$0xf]
  %v1279 = vld [vmem:[%s1270 + $0x20] sm:$0x3]
  %v1281 = vshrl.u32 %v1267, 16
  %v1283 = vrot.slane %v1281, 3
  %v1284 = vshll.u32 %v1267, 16
  %v1286 = vrot.slane %v1284, 4
  %v1287 = vor.u32 %v1283, %v1286
  %v1289 = vshrl.u32 %v1268, 16
  %v1291 = vrot.slane %v1289, 3
  %v1292 = vshll.u32 %v1268, 16
  %v1294 = vrot.slane %v1292, 4
  %v1295 = vor.u32 %v1291, %v1294
  %v1296 = vsel %vm134, %v1287, %v1295
  %v1298 = vshrl.u32 %v1269, 16
  %v1300 = vrot.slane %v1298, 3
  %v1301 = vshll.u32 %v1269, 16
  %v1303 = vrot.slane %v1301, 4
  %v1304 = vor.u32 %v1300, %v1303
  %v1305 = vsel %vm134, %v1295, %v1304
  %v1315 = vunpack.c.l.b16 %v1271
  %v1316 = vunpack.c.l.b16 %v1272
  %v1317 = vunpack.c.l.b16 %v1273
  %v1318 = vunpack.c.l.b16 %v1274
  %v1319 = vunpack.c.l.b16 %v1275
  %v1320 = vunpack.c.l.b16 %v1276
  %v1321 = vunpack.c.l.b16 %v1277
  %v1322 = vunpack.c.l.b16 %v1278
  %v1323 = vunpack.c.l.b16 %v1279
  %v1324 = vpack.c.b16 %v1316, %v1315
  %v1325 = vpack.c.b16 %v1318, %v1317
  %v1326 = vpack.c.b16 %v1320, %v1319
  %v1327 = vpack.c.b16 %v1322, %v1321
  %v1328 = vpack.c.b16 %v1323, %v1323
  %v1334 = vsel %vm188, %v1296, 0
  %v1337 = vsel %vm188, %v1305, 0
  %v1340 = vsel %vm195, %v1328, 0
  %1342 = vmatprep.subr.bf16.mxu0 0
  %1343 = vmatpush1.bf16.msra.mxu0 %v1324
  %1344 = vmatprep.subr.bf16.mxu0 0
  %1345 = vmatpush1.bf16.msra.mxu0 %v1325
  %1346 = vmatprep.subr.bf16.mxu0 0
  %1347 = vmatpush1.bf16.msra.mxu0 %v1326
  %1348 = vmatprep.subr.bf16.mxu0 0
  %1349 = vmatpush1.bf16.msra.mxu0 %v1327
  %1350 = vmatprep.subr.bf16.mxu0 0
  %1351 = vmatpush1.bf16.msra.mxu0 %v1340
  %1352 = vmatprep.subr.bf16.mxu0 0
  %1353 = vmatpush1.bf16.msra.mxu0 0
  %1354 = vmatprep.subr.bf16.mxu0 0
  %1355 = vmatpush1.bf16.msra.mxu0 0
  %1356 = vmatprep.subr.bf16.mxu0 0
  %1357 = vmatpush1.bf16.msra.mxu0 0
  %1358 = vmatprep.subr.bf16.mxu0 0
  %1359 = vmatpush1.bf16.msra.mxu0 0
  %1360 = vmatprep.subr.bf16.mxu0 0
  %1361 = vmatpush1.bf16.msra.mxu0 0
  %1362 = vmatprep.subr.bf16.mxu0 0
  %1363 = vmatpush1.bf16.msra.mxu0 0
  %1364 = vmatprep.subr.bf16.mxu0 0
  %1365 = vmatpush1.bf16.msra.mxu0 0
  %1366 = vmatprep.subr.bf16.mxu0 0
  %1367 = vmatpush1.bf16.msra.mxu0 0
  %1368 = vmatprep.subr.bf16.mxu0 0
  %1369 = vmatpush1.bf16.msra.mxu0 0
  %1370 = vmatprep.subr.bf16.mxu0 0
  %1371 = vmatpush1.bf16.msra.mxu0 0
  %1372 = vmatprep.subr.bf16.mxu0 0
  %1373 = vmatpush1.bf16.msra.mxu0 0
  %1374 = vmatprep.mubr.bf16.mxu0 0
  %1375 = vmatmul.mubr.bf16.gmra.mrb[0].mxu0 %v1334
  %v1376 = vpop.f32.mrb[0].mxu0
  %v1377 = vadd.f32 0.0, %v1376
  %v1378 = vpop.f32.mrb[0].mxu0
  %v1379 = vpop.f32.mrb[0].mxu0
  %v1380 = vadd.f32 0.0, %v1379
  %v1381 = vpop.f32.mrb[0].mxu0
  %1382 = vmatprep.mubr.bf16.mxu0 0
  %1383 = vmatmul.mubr.bf16.gmra.mrb[0].mxu0 %v1337
  %v1384 = vpop.f32.mrb[0].mxu0
  %v1385 = vadd.f32 0.0, %v1384
  %v1386 = vpop.f32.mrb[0].mxu0
  %v1387 = vpop.f32.mrb[0].mxu0
  %v1388 = vadd.f32 0.0, %v1387
  %v1389 = vpop.f32.mrb[0].mxu0
  %1390 = vdwg.mxu0
  %v1391 = vld [vmem:[#allocation2] sm:$0xf0]
  %s1392 = scalar_lea.vmem %s1, 144
  %v1393 = vld [vmem:[%s1392] sm:$0xf]
  %v1394 = vld [vmem:[%s1392 + $0x4] sm:$0xf]
  %v1395 = vld [vmem:[%s1392 + $0x8] sm:$0xf]
  %v1396 = vld [vmem:[%s1392 + $0xc] sm:$0xf]
  %v1397 = vld [vmem:[%s1392 + $0x10] sm:$0xf]
  %v1398 = vld [vmem:[%s1392 + $0x14] sm:$0xf]
  %v1399 = vld [vmem:[%s1392 + $0x18] sm:$0xf]
  %v1400 = vld [vmem:[%s1392 + $0x1c] sm:$0xf]
  %v1401 = vld [vmem:[%s1392 + $0x20] sm:$0x3]
  %v1405 = vrot.slane %v1391, 4
  %v1406 = vrot.slane %v1268, 4
  %v1407 = vsel %vm262, %v1405, %v1406
  %v1408 = vrot.slane %v1269, 4
  %v1409 = vsel %vm262, %v1406, %v1408
  %v1419 = vunpack.c.l.b16 %v1393
  %v1420 = vunpack.c.l.b16 %v1394
  %v1421 = vunpack.c.l.b16 %v1395
  %v1422 = vunpack.c.l.b16 %v1396
  %v1423 = vunpack.c.l.b16 %v1397
  %v1424 = vunpack.c.l.b16 %v1398
  %v1425 = vunpack.c.l.b16 %v1399
  %v1426 = vunpack.c.l.b16 %v1400
  %v1427 = vunpack.c.l.b16 %v1401
  %v1428 = vpack.c.b16 %v1420, %v1419
  %v1429 = vpack.c.b16 %v1422, %v1421
  %v1430 = vpack.c.b16 %v1424, %v1423
  %v1431 = vpack.c.b16 %v1426, %v1425
  %v1432 = vpack.c.b16 %v1427, %v1427
  %v1438 = vsel %vm188, %v1407, 0
  %v1441 = vsel %vm188, %v1409, 0
  %v1444 = vsel %vm195, %v1432, 0
  %1446 = vmatprep.subr.bf16.mxu0 0
  %1447 = vmatpush1.bf16.msra.mxu0 %v1428
  %1448 = vmatprep.subr.bf16.mxu0 0
  %1449 = vmatpush1.bf16.msra.mxu0 %v1429
  %1450 = vmatprep.subr.bf16.mxu0 0
  %1451 = vmatpush1.bf16.msra.mxu0 %v1430
  %1452 = vmatprep.subr.bf16.mxu0 0
  %1453 = vmatpush1.bf16.msra.mxu0 %v1431
  %1454 = vmatprep.subr.bf16.mxu0 0
  %1455 = vmatpush1.bf16.msra.mxu0 %v1444
  %1456 = vmatprep.subr.bf16.mxu0 0
  %1457 = vmatpush1.bf16.msra.mxu0 0
  %1458 = vmatprep.subr.bf16.mxu0 0
  %1459 = vmatpush1.bf16.msra.mxu0 0
  %1460 = vmatprep.subr.bf16.mxu0 0
  %1461 = vmatpush1.bf16.msra.mxu0 0
  %1462 = vmatprep.subr.bf16.mxu0 0
  %1463 = vmatpush1.bf16.msra.mxu0 0
  %1464 = vmatprep.subr.bf16.mxu0 0
  %1465 = vmatpush1.bf16.msra.mxu0 0
  %1466 = vmatprep.subr.bf16.mxu0 0
  %1467 = vmatpush1.bf16.msra.mxu0 0
  %1468 = vmatprep.subr.bf16.mxu0 0
  %1469 = vmatpush1.bf16.msra.mxu0 0
  %1470 = vmatprep.subr.bf16.mxu0 0
  %1471 = vmatpush1.bf16.msra.mxu0 0
  %1472 = vmatprep.subr.bf16.mxu0 0
  %1473 = vmatpush1.bf16.msra.mxu0 0
  %1474 = vmatprep.subr.bf16.mxu0 0
  %1475 = vmatpush1.bf16.msra.mxu0 0
  %1476 = vmatprep.subr.bf16.mxu0 0
  %1477 = vmatpush1.bf16.msra.mxu0 0
  %1478 = vmatprep.mubr.bf16.mxu0 0
  %1479 = vmatmul.mubr.bf16.gmra.mrb[0].mxu0 %v1438
  %v1480 = vpop.f32.mrb[0].mxu0
  %v1481 = vadd.f32 0.0, %v1480
  %v1482 = vpop.f32.mrb[0].mxu0
  %v1483 = vpop.f32.mrb[0].mxu0
  %v1484 = vadd.f32 0.0, %v1483
  %v1485 = vpop.f32.mrb[0].mxu0
  %1486 = vmatprep.mubr.bf16.mxu0 0
  %1487 = vmatmul.mubr.bf16.gmra.mrb[0].mxu0 %v1441
  %v1488 = vpop.f32.mrb[0].mxu0
  %v1489 = vadd.f32 0.0, %v1488
  %v1490 = vpop.f32.mrb[0].mxu0
  %v1491 = vpop.f32.mrb[0].mxu0
  %v1492 = vadd.f32 0.0, %v1491
  %v1493 = vpop.f32.mrb[0].mxu0
  %1494 = vdwg.mxu0
  %v1495 = vld [vmem:[#allocation2 + $0x10] sm:$0x1f]
  %s1496 = scalar_lea.vmem %s1, 180
  %v1497 = vld [vmem:[%s1496] sm:$0xf]
  %v1498 = vld [vmem:[%s1496 + $0x4] sm:$0xf]
  %v1499 = vld [vmem:[%s1496 + $0x8] sm:$0xf]
  %v1500 = vld [vmem:[%s1496 + $0xc] sm:$0xf]
  %v1501 = vld [vmem:[%s1496 + $0x10] sm:$0xf]
  %v1502 = vld [vmem:[%s1496 + $0x14] sm:$0xf]
  %v1503 = vld [vmem:[%s1496 + $0x18] sm:$0xf]
  %v1504 = vld [vmem:[%s1496 + $0x1c] sm:$0xf]
  %v1505 = vld [vmem:[%s1496 + $0x20] sm:$0x3]
  %v1507 = vshrl.u32 %v1391, 16
  %v1509 = vrot.slane %v1507, 4
  %v1510 = vshll.u32 %v1391, 16
  %v1512 = vrot.slane %v1510, 5
  %v1513 = vor.u32 %v1509, %v1512
  %v1514 = vrot.slane %v1289, 4
  %v1515 = vrot.slane %v1292, 5
  %v1516 = vor.u32 %v1514, %v1515
  %v1517 = vsel %vm364, %v1513, %v1516
  %v1519 = vshrl.u32 %v1495, 16
  %v1521 = vrot.slane %v1519, 4
  %v1522 = vshll.u32 %v1495, 16
  %v1524 = vrot.slane %v1522, 5
  %v1525 = vor.u32 %v1521, %v1524
  %v1526 = vsel %vm364, %v1516, %v1525
  %v1536 = vunpack.c.l.b16 %v1497
  %v1537 = vunpack.c.l.b16 %v1498
  %v1538 = vunpack.c.l.b16 %v1499
  %v1539 = vunpack.c.l.b16 %v1500
  %v1540 = vunpack.c.l.b16 %v1501
  %v1541 = vunpack.c.l.b16 %v1502
  %v1542 = vunpack.c.l.b16 %v1503
  %v1543 = vunpack.c.l.b16 %v1504
  %v1544 = vunpack.c.l.b16 %v1505
  %v1545 = vpack.c.b16 %v1537, %v1536
  %v1546 = vpack.c.b16 %v1539, %v1538
  %v1547 = vpack.c.b16 %v1541, %v1540
  %v1548 = vpack.c.b16 %v1543, %v1542
  %v1549 = vpack.c.b16 %v1544, %v1544
  %v1555 = vsel %vm188, %v1517, 0
  %v1558 = vsel %vm188, %v1526, 0
  %v1561 = vsel %vm195, %v1549, 0
  %1563 = vmatprep.subr.bf16.mxu0 0
  %1564 = vmatpush1.bf16.msra.mxu0 %v1545
  %1565 = vmatprep.subr.bf16.mxu0 0
  %1566 = vmatpush1.bf16.msra.mxu0 %v1546
  %1567 = vmatprep.subr.bf16.mxu0 0
  %1568 = vmatpush1.bf16.msra.mxu0 %v1547
  %1569 = vmatprep.subr.bf16.mxu0 0
  %1570 = vmatpush1.bf16.msra.mxu0 %v1548
  %1571 = vmatprep.subr.bf16.mxu0 0
  %1572 = vmatpush1.bf16.msra.mxu0 %v1561
  %1573 = vmatprep.subr.bf16.mxu0 0
  %1574 = vmatpush1.bf16.msra.mxu0 0
  %1575 = vmatprep.subr.bf16.mxu0 0
  %1576 = vmatpush1.bf16.msra.mxu0 0
  %1577 = vmatprep.subr.bf16.mxu0 0
  %1578 = vmatpush1.bf16.msra.mxu0 0
  %1579 = vmatprep.subr.bf16.mxu0 0
  %1580 = vmatpush1.bf16.msra.mxu0 0
  %1581 = vmatprep.subr.bf16.mxu0 0
  %1582 = vmatpush1.bf16.msra.mxu0 0
  %1583 = vmatprep.subr.bf16.mxu0 0
  %1584 = vmatpush1.bf16.msra.mxu0 0
  %1585 = vmatprep.subr.bf16.mxu0 0
  %1586 = vmatpush1.bf16.msra.mxu0 0
  %1587 = vmatprep.subr.bf16.mxu0 0
  %1588 = vmatpush1.bf16.msra.mxu0 0
  %1589 = vmatprep.subr.bf16.mxu0 0
  %1590 = vmatpush1.bf16.msra.mxu0 0
  %1591 = vmatprep.subr.bf16.mxu0 0
  %1592 = vmatpush1.bf16.msra.mxu0 0
  %1593 = vmatprep.subr.bf16.mxu0 0
  %1594 = vmatpush1.bf16.msra.mxu0 0
  %1595 = vmatprep.mubr.bf16.mxu0 0
  %1596 = vmatmul.mubr.bf16.gmra.mrb[0].mxu0 %v1555
  %v1597 = vpop.f32.mrb[0].mxu0
  %v1598 = vadd.f32 0.0, %v1597
  %v1599 = vpop.f32.mrb[0].mxu0
  %v1600 = vpop.f32.mrb[0].mxu0
  %v1601 = vadd.f32 0.0, %v1600
  %v1602 = vpop.f32.mrb[0].mxu0
  %1603 = vmatprep.mubr.bf16.mxu0 0
  %1604 = vmatmul.mubr.bf16.gmra.mrb[0].mxu0 %v1558
  %v1605 = vpop.f32.mrb[0].mxu0
  %v1606 = vadd.f32 0.0, %v1605
  %v1607 = vpop.f32.mrb[0].mxu0
  %v1608 = vpop.f32.mrb[0].mxu0
  %v1609 = vadd.f32 0.0, %v1608
  %v1610 = vpop.f32.mrb[0].mxu0
  %1611 = vdwg.mxu0
  %v1612 = vmul.f32 %v102, %v1377
  %v1613 = vmul.f32 %v103, %v1380
  %v1614 = vmul.f32 %v104, %v1385
  %v1615 = vmul.f32 %v105, %v1388
  %v1616 = vadd.f32 %v1612, %v1481
  %v1617 = vadd.f32 %v1613, %v1484
  %v1618 = vadd.f32 %v1614, %v1489
  %v1619 = vadd.f32 %v1615, %v1492
  %v1620 = vmul.f32 %v118, %v1598
  %v1621 = vmul.f32 %v119, %v1601
  %v1622 = vmul.f32 %v120, %v1606
  %v1623 = vmul.f32 %v121, %v1609
  %v1624 = vadd.f32 %v1616, %v1620
  %v1625 = vadd.f32 %v1617, %v1621
  %v1626 = vadd.f32 %v1618, %v1622
  %v1627 = vadd.f32 %v1619, %v1623
  %s1628 = scalar_lea.vmem %s2, 1
  %v1629 = vld [vmem:[%s1628] sm:$0x1]
  %v1631 = vlaneseq
  %v1632 = vshrl.u32 %v1631, 7
  %v1633 = vsub.s32 0, %v1632
  %v1634 = vrot.slane %v1629, %v1633
  %v1636 = vadd.f32 %v1624, %v1634
  %v1637 = vadd.f32 %v1625, %v1634
  %v1638 = vadd.f32 %v1626, %v1634
  %v1639 = vadd.f32 %v1627, %v1634
  %vm1640 = vcmp.ge.f32.partialorder %v1636, 0.0
  %vm1641 = vcmp.ge.f32.partialorder %v1637, 0.0
  %vm1642 = vcmp.ge.f32.partialorder %v1638, 0.0
  %vm1643 = vcmp.ge.f32.partialorder %v1639, 0.0
  %s1644 = scalar_lea.vmem %s3, 1
  %v1645 = vld [vmem:[%s1644] sm:$0x1]
  %v1647 = vlaneseq
  %v1648 = vshrl.u32 %v1647, 7
  %v1649 = vsub.s32 0, %v1648
  %v1650 = vrot.slane %v1645, %v1649
  %v1652 = vmul.f32 %v1650, %v1636
  %v1653 = vmul.f32 %v1650, %v1637
  %v1654 = vmul.f32 %v1650, %v1638
  %v1655 = vmul.f32 %v1650, %v1639
  %v1656 = vsel %vm1640, %v1636, %v1652
  %v1657 = vsel %vm1641, %v1637, %v1653
  %v1658 = vsel %vm1642, %v1638, %v1654
  %v1659 = vsel %vm1643, %v1639, %v1655
  %v1660 = vpack.c.bf16 %v1657, %v1656
  %v1661 = vpack.c.bf16 %v1659, %v1658
  %v1664 = vrot.slane %v1660, 4
  %v1665 = vrot.slane %v1661, 4
  %v1666 = vsel %vm262, %v1664, %v1665
  %1670 = vst.msk [vmem:[#allocation2] sm:$0xf0] %vm55, %v1664
  %1671 = vst.msk [vmem:[#allocation2 + $0x8] sm:$0xff] %vm57, %v1666
  %1672 = vst.msk [vmem:[#allocation2 + $0x10] sm:$0xf] %vm59, %v1665
  %v1673 = vld [vmem:[#allocation3] sm:$0xff]
  %v1674 = vld [vmem:[#allocation3 + $0x8] sm:$0xff]
  %v1675 = vld [vmem:[#allocation3 + $0x10] sm:$0xff]
  %v1676 = vld [vmem:[#allocation3 + $0x18] sm:$0xff]
  %v1677 = vld [vmem:[#allocation2] sm:$0xf8]
  %v1678 = vld [vmem:[#allocation2 + $0x8] sm:$0xff]
  %v1679 = vld [vmem:[#allocation2 + $0x10] sm:$0xf]
  %s1680 = scalar_lea.vmem %s4, 216
  %v1681 = vld [vmem:[%s1680] sm:$0xf]
  %v1682 = vld [vmem:[%s1680 + $0x4] sm:$0xf]
  %v1683 = vld [vmem:[%s1680 + $0x8] sm:$0xf]
  %v1684 = vld [vmem:[%s1680 + $0xc] sm:$0xf]
  %v1685 = vld [vmem:[%s1680 + $0x10] sm:$0xf]
  %v1686 = vld [vmem:[%s1680 + $0x14] sm:$0xf]
  %v1687 = vld [vmem:[%s1680 + $0x18] sm:$0xf]
  %v1688 = vld [vmem:[%s1680 + $0x1c] sm:$0xf]
  %v1689 = vld [vmem:[%s1680 + $0x20] sm:$0x3]
  %v1691 = vshrl.u32 %v1677, 16
  %v1693 = vrot.slane %v1691, 3
  %v1694 = vshll.u32 %v1677, 16
  %v1696 = vrot.slane %v1694, 4
  %v1697 = vor.u32 %v1693, %v1696
  %v1699 = vshrl.u32 %v1678, 16
  %v1701 = vrot.slane %v1699, 3
  %v1702 = vshll.u32 %v1678, 16
  %v1704 = vrot.slane %v1702, 4
  %v1705 = vor.u32 %v1701, %v1704
  %v1706 = vsel %vm134, %v1697, %v1705
  %v1708 = vshrl.u32 %v1679, 16
  %v1710 = vrot.slane %v1708, 3
  %v1711 = vshll.u32 %v1679, 16
  %v1713 = vrot.slane %v1711, 4
  %v1714 = vor.u32 %v1710, %v1713
  %v1715 = vsel %vm134, %v1705, %v1714
  %v1725 = vunpack.c.l.b16 %v1681
  %v1726 = vunpack.c.l.b16 %v1682
  %v1727 = vunpack.c.l.b16 %v1683
  %v1728 = vunpack.c.l.b16 %v1684
  %v1729 = vunpack.c.l.b16 %v1685
  %v1730 = vunpack.c.l.b16 %v1686
  %v1731 = vunpack.c.l.b16 %v1687
  %v1732 = vunpack.c.l.b16 %v1688
  %v1733 = vunpack.c.l.b16 %v1689
  %v1734 = vpack.c.b16 %v1726, %v1725
  %v1735 = vpack.c.b16 %v1728, %v1727
  %v1736 = vpack.c.b16 %v1730, %v1729
  %v1737 = vpack.c.b16 %v1732, %v1731
  %v1738 = vpack.c.b16 %v1733, %v1733
  %v1744 = vsel %vm188, %v1706, 0
  %v1747 = vsel %vm188, %v1715, 0
  %v1750 = vsel %vm195, %v1738, 0
  %1752 = vmatprep.subr.bf16.mxu0 0
  %1753 = vmatpush1.bf16.msra.mxu0 %v1734
  %1754 = vmatprep.subr.bf16.mxu0 0
  %1755 = vmatpush1.bf16.msra.mxu0 %v1735
  %1756 = vmatprep.subr.bf16.mxu0 0
  %1757 = vmatpush1.bf16.msra.mxu0 %v1736
  %1758 = vmatprep.subr.bf16.mxu0 0
  %1759 = vmatpush1.bf16.msra.mxu0 %v1737
  %1760 = vmatprep.subr.bf16.mxu0 0
  %1761 = vmatpush1.bf16.msra.mxu0 %v1750
  %1762 = vmatprep.subr.bf16.mxu0 0
  %1763 = vmatpush1.bf16.msra.mxu0 0
  %1764 = vmatprep.subr.bf16.mxu0 0
  %1765 = vmatpush1.bf16.msra.mxu0 0
  %1766 = vmatprep.subr.bf16.mxu0 0
  %1767 = vmatpush1.bf16.msra.mxu0 0
  %1768 = vmatprep.subr.bf16.mxu0 0
  %1769 = vmatpush1.bf16.msra.mxu0 0
  %1770 = vmatprep.subr.bf16.mxu0 0
  %1771 = vmatpush1.bf16.msra.mxu0 0
  %1772 = vmatprep.subr.bf16.mxu0 0
  %1773 = vmatpush1.bf16.msra.mxu0 0
  %1774 = vmatprep.subr.bf16.mxu0 0
  %1775 = vmatpush1.bf16.msra.mxu0 0
  %1776 = vmatprep.subr.bf16.mxu0 0
  %1777 = vmatpush1.bf16.msra.mxu0 0
  %1778 = vmatprep.subr.bf16.mxu0 0
  %1779 = vmatpush1.bf16.msra.mxu0 0
  %1780 = vmatprep.subr.bf16.mxu0 0
  %1781 = vmatpush1.bf16.msra.mxu0 0
  %1782 = vmatprep.subr.bf16.mxu0 0
  %1783 = vmatpush1.bf16.msra.mxu0 0
  %1784 = vmatprep.mubr.bf16.mxu0 0
  %1785 = vmatmul.mubr.bf16.gmra.mrb[0].mxu0 %v1744
  %v1786 = vpop.f32.mrb[0].mxu0
  %v1787 = vadd.f32 0.0, %v1786
  %v1788 = vpop.f32.mrb[0].mxu0
  %v1789 = vpop.f32.mrb[0].mxu0
  %v1790 = vadd.f32 0.0, %v1789
  %v1791 = vpop.f32.mrb[0].mxu0
  %1792 = vmatprep.mubr.bf16.mxu0 0
  %1793 = vmatmul.mubr.bf16.gmra.mrb[0].mxu0 %v1747
  %v1794 = vpop.f32.mrb[0].mxu0
  %v1795 = vadd.f32 0.0, %v1794
  %v1796 = vpop.f32.mrb[0].mxu0
  %v1797 = vpop.f32.mrb[0].mxu0
  %v1798 = vadd.f32 0.0, %v1797
  %v1799 = vpop.f32.mrb[0].mxu0
  %1800 = vdwg.mxu0
  %v1801 = vld [vmem:[#allocation2] sm:$0xf0]
  %s1802 = scalar_lea.vmem %s4, 252
  %v1803 = vld [vmem:[%s1802] sm:$0xf]
  %v1804 = vld [vmem:[%s1802 + $0x4] sm:$0xf]
  %v1805 = vld [vmem:[%s1802 + $0x8] sm:$0xf]
  %v1806 = vld [vmem:[%s1802 + $0xc] sm:$0xf]
  %v1807 = vld [vmem:[%s1802 + $0x10] sm:$0xf]
  %v1808 = vld [vmem:[%s1802 + $0x14] sm:$0xf]
  %v1809 = vld [vmem:[%s1802 + $0x18] sm:$0xf]
  %v1810 = vld [vmem:[%s1802 + $0x1c] sm:$0xf]
  %v1811 = vld [vmem:[%s1802 + $0x20] sm:$0x3]
  %v1815 = vrot.slane %v1801, 4
  %v1816 = vrot.slane %v1678, 4
  %v1817 = vsel %vm262, %v1815, %v1816
  %v1818 = vrot.slane %v1679, 4
  %v1819 = vsel %vm262, %v1816, %v1818
  %v1829 = vunpack.c.l.b16 %v1803
  %v1830 = vunpack.c.l.b16 %v1804
  %v1831 = vunpack.c.l.b16 %v1805
  %v1832 = vunpack.c.l.b16 %v1806
  %v1833 = vunpack.c.l.b16 %v1807
  %v1834 = vunpack.c.l.b16 %v1808
  %v1835 = vunpack.c.l.b16 %v1809
  %v1836 = vunpack.c.l.b16 %v1810
  %v1837 = vunpack.c.l.b16 %v1811
  %v1838 = vpack.c.b16 %v1830, %v1829
  %v1839 = vpack.c.b16 %v1832, %v1831
  %v1840 = vpack.c.b16 %v1834, %v1833
  %v1841 = vpack.c.b16 %v1836, %v1835
  %v1842 = vpack.c.b16 %v1837, %v1837
  %v1848 = vsel %vm188, %v1817, 0
  %v1851 = vsel %vm188, %v1819, 0
  %v1854 = vsel %vm195, %v1842, 0
  %1856 = vmatprep.subr.bf16.mxu0 0
  %1857 = vmatpush1.bf16.msra.mxu0 %v1838
  %1858 = vmatprep.subr.bf16.mxu0 0
  %1859 = vmatpush1.bf16.msra.mxu0 %v1839
  %1860 = vmatprep.subr.bf16.mxu0 0
  %1861 = vmatpush1.bf16.msra.mxu0 %v1840
  %1862 = vmatprep.subr.bf16.mxu0 0
  %1863 = vmatpush1.bf16.msra.mxu0 %v1841
  %1864 = vmatprep.subr.bf16.mxu0 0
  %1865 = vmatpush1.bf16.msra.mxu0 %v1854
  %1866 = vmatprep.subr.bf16.mxu0 0
  %1867 = vmatpush1.bf16.msra.mxu0 0
  %1868 = vmatprep.subr.bf16.mxu0 0
  %1869 = vmatpush1.bf16.msra.mxu0 0
  %1870 = vmatprep.subr.bf16.mxu0 0
  %1871 = vmatpush1.bf16.msra.mxu0 0
  %1872 = vmatprep.subr.bf16.mxu0 0
  %1873 = vmatpush1.bf16.msra.mxu0 0
  %1874 = vmatprep.subr.bf16.mxu0 0
  %1875 = vmatpush1.bf16.msra.mxu0 0
  %1876 = vmatprep.subr.bf16.mxu0 0
  %1877 = vmatpush1.bf16.msra.mxu0 0
  %1878 = vmatprep.subr.bf16.mxu0 0
  %1879 = vmatpush1.bf16.msra.mxu0 0
  %1880 = vmatprep.subr.bf16.mxu0 0
  %1881 = vmatpush1.bf16.msra.mxu0 0
  %1882 = vmatprep.subr.bf16.mxu0 0
  %1883 = vmatpush1.bf16.msra.mxu0 0
  %1884 = vmatprep.subr.bf16.mxu0 0
  %1885 = vmatpush1.bf16.msra.mxu0 0
  %1886 = vmatprep.subr.bf16.mxu0 0
  %1887 = vmatpush1.bf16.msra.mxu0 0
  %1888 = vmatprep.mubr.bf16.mxu0 0
  %1889 = vmatmul.mubr.bf16.gmra.mrb[0].mxu0 %v1848
  %v1890 = vpop.f32.mrb[0].mxu0
  %v1891 = vadd.f32 0.0, %v1890
  %v1892 = vpop.f32.mrb[0].mxu0
  %v1893 = vpop.f32.mrb[0].mxu0
  %v1894 = vadd.f32 0.0, %v1893
  %v1895 = vpop.f32.mrb[0].mxu0
  %1896 = vmatprep.mubr.bf16.mxu0 0
  %1897 = vmatmul.mubr.bf16.gmra.mrb[0].mxu0 %v1851
  %v1898 = vpop.f32.mrb[0].mxu0
  %v1899 = vadd.f32 0.0, %v1898
  %v1900 = vpop.f32.mrb[0].mxu0
  %v1901 = vpop.f32.mrb[0].mxu0
  %v1902 = vadd.f32 0.0, %v1901
  %v1903 = vpop.f32.mrb[0].mxu0
  %1904 = vdwg.mxu0
  %v1905 = vld [vmem:[#allocation2 + $0x10] sm:$0x1f]
  %s1906 = scalar_lea.vmem %s4, 288
  %v1907 = vld [vmem:[%s1906] sm:$0xf]
  %v1908 = vld [vmem:[%s1906 + $0x4] sm:$0xf]
  %v1909 = vld [vmem:[%s1906 + $0x8] sm:$0xf]
  %v1910 = vld [vmem:[%s1906 + $0xc] sm:$0xf]
  %v1911 = vld [vmem:[%s1906 + $0x10] sm:$0xf]
  %v1912 = vld [vmem:[%s1906 + $0x14] sm:$0xf]
  %v1913 = vld [vmem:[%s1906 + $0x18] sm:$0xf]
  %v1914 = vld [vmem:[%s1906 + $0x1c] sm:$0xf]
  %v1915 = vld [vmem:[%s1906 + $0x20] sm:$0x3]
  %v1917 = vshrl.u32 %v1801, 16
  %v1919 = vrot.slane %v1917, 4
  %v1920 = vshll.u32 %v1801, 16
  %v1922 = vrot.slane %v1920, 5
  %v1923 = vor.u32 %v1919, %v1922
  %v1924 = vrot.slane %v1699, 4
  %v1925 = vrot.slane %v1702, 5
  %v1926 = vor.u32 %v1924, %v1925
  %v1927 = vsel %vm364, %v1923, %v1926
  %v1929 = vshrl.u32 %v1905, 16
  %v1931 = vrot.slane %v1929, 4
  %v1932 = vshll.u32 %v1905, 16
  %v1934 = vrot.slane %v1932, 5
  %v1935 = vor.u32 %v1931, %v1934
  %v1936 = vsel %vm364, %v1926, %v1935
  %v1946 = vunpack.c.l.b16 %v1907
  %v1947 = vunpack.c.l.b16 %v1908
  %v1948 = vunpack.c.l.b16 %v1909
  %v1949 = vunpack.c.l.b16 %v1910
  %v1950 = vunpack.c.l.b16 %v1911
  %v1951 = vunpack.c.l.b16 %v1912
  %v1952 = vunpack.c.l.b16 %v1913
  %v1953 = vunpack.c.l.b16 %v1914
  %v1954 = vunpack.c.l.b16 %v1915
  %v1955 = vpack.c.b16 %v1947, %v1946
  %v1956 = vpack.c.b16 %v1949, %v1948
  %v1957 = vpack.c.b16 %v1951, %v1950
  %v1958 = vpack.c.b16 %v1953, %v1952
  %v1959 = vpack.c.b16 %v1954, %v1954
  %v1965 = vsel %vm188, %v1927, 0
  %v1968 = vsel %vm188, %v1936, 0
  %v1971 = vsel %vm195, %v1959, 0
  %1973 = vmatprep.subr.bf16.mxu0 0
  %1974 = vmatpush1.bf16.msra.mxu0 %v1955
  %1975 = vmatprep.subr.bf16.mxu0 0
  %1976 = vmatpush1.bf16.msra.mxu0 %v1956
  %1977 = vmatprep.subr.bf16.mxu0 0
  %1978 = vmatpush1.bf16.msra.mxu0 %v1957
  %1979 = vmatprep.subr.bf16.mxu0 0
  %1980 = vmatpush1.bf16.msra.mxu0 %v1958
  %1981 = vmatprep.subr.bf16.mxu0 0
  %1982 = vmatpush1.bf16.msra.mxu0 %v1971
  %1983 = vmatprep.subr.bf16.mxu0 0
  %1984 = vmatpush1.bf16.msra.mxu0 0
  %1985 = vmatprep.subr.bf16.mxu0 0
  %1986 = vmatpush1.bf16.msra.mxu0 0
  %1987 = vmatprep.subr.bf16.mxu0 0
  %1988 = vmatpush1.bf16.msra.mxu0 0
  %1989 = vmatprep.subr.bf16.mxu0 0
  %1990 = vmatpush1.bf16.msra.mxu0 0
  %1991 = vmatprep.subr.bf16.mxu0 0
  %1992 = vmatpush1.bf16.msra.mxu0 0
  %1993 = vmatprep.subr.bf16.mxu0 0
  %1994 = vmatpush1.bf16.msra.mxu0 0
  %1995 = vmatprep.subr.bf16.mxu0 0
  %1996 = vmatpush1.bf16.msra.mxu0 0
  %1997 = vmatprep.subr.bf16.mxu0 0
  %1998 = vmatpush1.bf16.msra.mxu0 0
  %1999 = vmatprep.subr.bf16.mxu0 0
  %2000 = vmatpush1.bf16.msra.mxu0 0
  %2001 = vmatprep.subr.bf16.mxu0 0
  %2002 = vmatpush1.bf16.msra.mxu0 0
  %2003 = vmatprep.subr.bf16.mxu0 0
  %2004 = vmatpush1.bf16.msra.mxu0 0
  %2005 = vmatprep.mubr.bf16.mxu0 0
  %2006 = vmatmul.mubr.bf16.gmra.mrb[0].mxu0 %v1965
  %v2007 = vpop.f32.mrb[0].mxu0
  %v2008 = vadd.f32 0.0, %v2007
  %v2009 = vpop.f32.mrb[0].mxu0
  %v2010 = vpop.f32.mrb[0].mxu0
  %v2011 = vadd.f32 0.0, %v2010
  %v2012 = vpop.f32.mrb[0].mxu0
  %2013 = vmatprep.mubr.bf16.mxu0 0
  %2014 = vmatmul.mubr.bf16.gmra.mrb[0].mxu0 %v1968
  %v2015 = vpop.f32.mrb[0].mxu0
  %v2016 = vadd.f32 0.0, %v2015
  %v2017 = vpop.f32.mrb[0].mxu0
  %v2018 = vpop.f32.mrb[0].mxu0
  %v2019 = vadd.f32 0.0, %v2018
  %v2020 = vpop.f32.mrb[0].mxu0
  %2021 = vdwg.mxu0
  %v2022 = vmul.f32 %v102, %v1787
  %v2023 = vmul.f32 %v103, %v1790
  %v2024 = vmul.f32 %v104, %v1795
  %v2025 = vmul.f32 %v105, %v1798
  %v2026 = vadd.f32 %v2022, %v1891
  %v2027 = vadd.f32 %v2023, %v1894
  %v2028 = vadd.f32 %v2024, %v1899
  %v2029 = vadd.f32 %v2025, %v1902
  %v2030 = vmul.f32 %v118, %v2008
  %v2031 = vmul.f32 %v119, %v2011
  %v2032 = vmul.f32 %v120, %v2016
  %v2033 = vmul.f32 %v121, %v2019
  %v2034 = vadd.f32 %v2026, %v2030
  %v2035 = vadd.f32 %v2027, %v2031
  %v2036 = vadd.f32 %v2028, %v2032
  %v2037 = vadd.f32 %v2029, %v2033
  %v2038 = vadd.f32 %v1673, %v2034
  %v2039 = vadd.f32 %v1674, %v2035
  %v2040 = vadd.f32 %v1675, %v2036
  %v2041 = vadd.f32 %v1676, %v2037
  %2042 = vst [vmem:[#allocation3] sm:$0xff] %v2038
  %2043 = vst [vmem:[#allocation3 + $0x8] sm:$0xff] %v2039
  %2044 = vst [vmem:[#allocation3 + $0x10] sm:$0xff] %v2040
  %2045 = vst [vmem:[#allocation3 + $0x18] sm:$0xff] %v2041
  %v2046 = vld [vmem:[#allocation2] sm:$0xf8]
  %v2047 = vld [vmem:[#allocation2 + $0x8] sm:$0xff]
  %v2048 = vld [vmem:[#allocation2 + $0x10] sm:$0xf]
  %s2049 = scalar_lea.vmem %s1, 216
  %v2050 = vld [vmem:[%s2049] sm:$0xf]
  %v2051 = vld [vmem:[%s2049 + $0x4] sm:$0xf]
  %v2052 = vld [vmem:[%s2049 + $0x8] sm:$0xf]
  %v2053 = vld [vmem:[%s2049 + $0xc] sm:$0xf]
  %v2054 = vld [vmem:[%s2049 + $0x10] sm:$0xf]
  %v2055 = vld [vmem:[%s2049 + $0x14] sm:$0xf]
  %v2056 = vld [vmem:[%s2049 + $0x18] sm:$0xf]
  %v2057 = vld [vmem:[%s2049 + $0x1c] sm:$0xf]
  %v2058 = vld [vmem:[%s2049 + $0x20] sm:$0x3]
  %v2060 = vshrl.u32 %v2046, 16
  %v2062 = vrot.slane %v2060, 3
  %v2063 = vshll.u32 %v2046, 16
  %v2065 = vrot.slane %v2063, 4
  %v2066 = vor.u32 %v2062, %v2065
  %v2068 = vshrl.u32 %v2047, 16
  %v2070 = vrot.slane %v2068, 3
  %v2071 = vshll.u32 %v2047, 16
  %v2073 = vrot.slane %v2071, 4
  %v2074 = vor.u32 %v2070, %v2073
  %v2075 = vsel %vm134, %v2066, %v2074
  %v2077 = vshrl.u32 %v2048, 16
  %v2079 = vrot.slane %v2077, 3
  %v2080 = vshll.u32 %v2048, 16
  %v2082 = vrot.slane %v2080, 4
  %v2083 = vor.u32 %v2079, %v2082
  %v2084 = vsel %vm134, %v2074, %v2083
  %v2094 = vunpack.c.l.b16 %v2050
  %v2095 = vunpack.c.l.b16 %v2051
  %v2096 = vunpack.c.l.b16 %v2052
  %v2097 = vunpack.c.l.b16 %v2053
  %v2098 = vunpack.c.l.b16 %v2054
  %v2099 = vunpack.c.l.b16 %v2055
  %v2100 = vunpack.c.l.b16 %v2056
  %v2101 = vunpack.c.l.b16 %v2057
  %v2102 = vunpack.c.l.b16 %v2058
  %v2103 = vpack.c.b16 %v2095, %v2094
  %v2104 = vpack.c.b16 %v2097, %v2096
  %v2105 = vpack.c.b16 %v2099, %v2098
  %v2106 = vpack.c.b16 %v2101, %v2100
  %v2107 = vpack.c.b16 %v2102, %v2102
  %v2113 = vsel %vm188, %v2075, 0
  %v2116 = vsel %vm188, %v2084, 0
  %v2119 = vsel %vm195, %v2107, 0
  %2121 = vmatprep.subr.bf16.mxu0 0
  %2122 = vmatpush1.bf16.msra.mxu0 %v2103
  %2123 = vmatprep.subr.bf16.mxu0 0
  %2124 = vmatpush1.bf16.msra.mxu0 %v2104
  %2125 = vmatprep.subr.bf16.mxu0 0
  %2126 = vmatpush1.bf16.msra.mxu0 %v2105
  %2127 = vmatprep.subr.bf16.mxu0 0
  %2128 = vmatpush1.bf16.msra.mxu0 %v2106
  %2129 = vmatprep.subr.bf16.mxu0 0
  %2130 = vmatpush1.bf16.msra.mxu0 %v2119
  %2131 = vmatprep.subr.bf16.mxu0 0
  %2132 = vmatpush1.bf16.msra.mxu0 0
  %2133 = vmatprep.subr.bf16.mxu0 0
  %2134 = vmatpush1.bf16.msra.mxu0 0
  %2135 = vmatprep.subr.bf16.mxu0 0
  %2136 = vmatpush1.bf16.msra.mxu0 0
  %2137 = vmatprep.subr.bf16.mxu0 0
  %2138 = vmatpush1.bf16.msra.mxu0 0
  %2139 = vmatprep.subr.bf16.mxu0 0
  %2140 = vmatpush1.bf16.msra.mxu0 0
  %2141 = vmatprep.subr.bf16.mxu0 0
  %2142 = vmatpush1.bf16.msra.mxu0 0
  %2143 = vmatprep.subr.bf16.mxu0 0
  %2144 = vmatpush1.bf16.msra.mxu0 0
  %2145 = vmatprep.subr.bf16.mxu0 0
  %2146 = vmatpush1.bf16.msra.mxu0 0
  %2147 = vmatprep.subr.bf16.mxu0 0
  %2148 = vmatpush1.bf16.msra.mxu0 0
  %2149 = vmatprep.subr.bf16.mxu0 0
  %2150 = vmatpush1.bf16.msra.mxu0 0
  %2151 = vmatprep.subr.bf16.mxu0 0
  %2152 = vmatpush1.bf16.msra.mxu0 0
  %2153 = vmatprep.mubr.bf16.mxu0 0
  %2154 = vmatmul.mubr.bf16.gmra.mrb[0].mxu0 %v2113
  %v2155 = vpop.f32.mrb[0].mxu0
  %v2156 = vadd.f32 0.0, %v2155
  %v2157 = vpop.f32.mrb[0].mxu0
  %v2158 = vpop.f32.mrb[0].mxu0
  %v2159 = vadd.f32 0.0, %v2158
  %v2160 = vpop.f32.mrb[0].mxu0
  %2161 = vmatprep.mubr.bf16.mxu0 0
  %2162 = vmatmul.mubr.bf16.gmra.mrb[0].mxu0 %v2116
  %v2163 = vpop.f32.mrb[0].mxu0
  %v2164 = vadd.f32 0.0, %v2163
  %v2165 = vpop.f32.mrb[0].mxu0
  %v2166 = vpop.f32.mrb[0].mxu0
  %v2167 = vadd.f32 0.0, %v2166
  %v2168 = vpop.f32.mrb[0].mxu0
  %2169 = vdwg.mxu0
  %v2170 = vld [vmem:[#allocation2] sm:$0xf0]
  %s2171 = scalar_lea.vmem %s1, 252
  %v2172 = vld [vmem:[%s2171] sm:$0xf]
  %v2173 = vld [vmem:[%s2171 + $0x4] sm:$0xf]
  %v2174 = vld [vmem:[%s2171 + $0x8] sm:$0xf]
  %v2175 = vld [vmem:[%s2171 + $0xc] sm:$0xf]
  %v2176 = vld [vmem:[%s2171 + $0x10] sm:$0xf]
  %v2177 = vld [vmem:[%s2171 + $0x14] sm:$0xf]
  %v2178 = vld [vmem:[%s2171 + $0x18] sm:$0xf]
  %v2179 = vld [vmem:[%s2171 + $0x1c] sm:$0xf]
  %v2180 = vld [vmem:[%s2171 + $0x20] sm:$0x3]
  %v2184 = vrot.slane %v2170, 4
  %v2185 = vrot.slane %v2047, 4
  %v2186 = vsel %vm262, %v2184, %v2185
  %v2187 = vrot.slane %v2048, 4
  %v2188 = vsel %vm262, %v2185, %v2187
  %v2198 = vunpack.c.l.b16 %v2172
  %v2199 = vunpack.c.l.b16 %v2173
  %v2200 = vunpack.c.l.b16 %v2174
  %v2201 = vunpack.c.l.b16 %v2175
  %v2202 = vunpack.c.l.b16 %v2176
  %v2203 = vunpack.c.l.b16 %v2177
  %v2204 = vunpack.c.l.b16 %v2178
  %v2205 = vunpack.c.l.b16 %v2179
  %v2206 = vunpack.c.l.b16 %v2180
  %v2207 = vpack.c.b16 %v2199, %v2198
  %v2208 = vpack.c.b16 %v2201, %v2200
  %v2209 = vpack.c.b16 %v2203, %v2202
  %v2210 = vpack.c.b16 %v2205, %v2204
  %v2211 = vpack.c.b16 %v2206, %v2206
  %v2217 = vsel %vm188, %v2186, 0
  %v2220 = vsel %vm188, %v2188, 0
  %v2223 = vsel %vm195, %v2211, 0
  %2225 = vmatprep.subr.bf16.mxu0 0
  %2226 = vmatpush1.bf16.msra.mxu0 %v2207
  %2227 = vmatprep.subr.bf16.mxu0 0
  %2228 = vmatpush1.bf16.msra.mxu0 %v2208
  %2229 = vmatprep.subr.bf16.mxu0 0
  %2230 = vmatpush1.bf16.msra.mxu0 %v2209
  %2231 = vmatprep.subr.bf16.mxu0 0
  %2232 = vmatpush1.bf16.msra.mxu0 %v2210
  %2233 = vmatprep.subr.bf16.mxu0 0
  %2234 = vmatpush1.bf16.msra.mxu0 %v2223
  %2235 = vmatprep.subr.bf16.mxu0 0
  %2236 = vmatpush1.bf16.msra.mxu0 0
  %2237 = vmatprep.subr.bf16.mxu0 0
  %2238 = vmatpush1.bf16.msra.mxu0 0
  %2239 = vmatprep.subr.bf16.mxu0 0
  %2240 = vmatpush1.bf16.msra.mxu0 0
  %2241 = vmatprep.subr.bf16.mxu0 0
  %2242 = vmatpush1.bf16.msra.mxu0 0
  %2243 = vmatprep.subr.bf16.mxu0 0
  %2244 = vmatpush1.bf16.msra.mxu0 0
  %2245 = vmatprep.subr.bf16.mxu0 0
  %2246 = vmatpush1.bf16.msra.mxu0 0
  %2247 = vmatprep.subr.bf16.mxu0 0
  %2248 = vmatpush1.bf16.msra.mxu0 0
  %2249 = vmatprep.subr.bf16.mxu0 0
  %2250 = vmatpush1.bf16.msra.mxu0 0
  %2251 = vmatprep.subr.bf16.mxu0 0
  %2252 = vmatpush1.bf16.msra.mxu0 0
  %2253 = vmatprep.subr.bf16.mxu0 0
  %2254 = vmatpush1.bf16.msra.mxu0 0
  %2255 = vmatprep.subr.bf16.mxu0 0
  %2256 = vmatpush1.bf16.msra.mxu0 0
  %2257 = vmatprep.mubr.bf16.mxu0 0
  %2258 = vmatmul.mubr.bf16.gmra.mrb[0].mxu0 %v2217
  %v2259 = vpop.f32.mrb[0].mxu0
  %v2260 = vadd.f32 0.0, %v2259
  %v2261 = vpop.f32.mrb[0].mxu0
  %v2262 = vpop.f32.mrb[0].mxu0
  %v2263 = vadd.f32 0.0, %v2262
  %v2264 = vpop.f32.mrb[0].mxu0
  %2265 = vmatprep.mubr.bf16.mxu0 0
  %2266 = vmatmul.mubr.bf16.gmra.mrb[0].mxu0 %v2220
  %v2267 = vpop.f32.mrb[0].mxu0
  %v2268 = vadd.f32 0.0, %v2267
  %v2269 = vpop.f32.mrb[0].mxu0
  %v2270 = vpop.f32.mrb[0].mxu0
  %v2271 = vadd.f32 0.0, %v2270
  %v2272 = vpop.f32.mrb[0].mxu0
  %2273 = vdwg.mxu0
  %v2274 = vld [vmem:[#allocation2 + $0x10] sm:$0x1f]
  %s2275 = scalar_lea.vmem %s1, 288
  %v2276 = vld [vmem:[%s2275] sm:$0xf]
  %v2277 = vld [vmem:[%s2275 + $0x4] sm:$0xf]
  %v2278 = vld [vmem:[%s2275 + $0x8] sm:$0xf]
  %v2279 = vld [vmem:[%s2275 + $0xc] sm:$0xf]
  %v2280 = vld [vmem:[%s2275 + $0x10] sm:$0xf]
  %v2281 = vld [vmem:[%s2275 + $0x14] sm:$0xf]
  %v2282 = vld [vmem:[%s2275 + $0x18] sm:$0xf]
  %v2283 = vld [vmem:[%s2275 + $0x1c] sm:$0xf]
  %v2284 = vld [vmem:[%s2275 + $0x20] sm:$0x3]
  %v2286 = vshrl.u32 %v2170, 16
  %v2288 = vrot.slane %v2286, 4
  %v2289 = vshll.u32 %v2170, 16
  %v2291 = vrot.slane %v2289, 5
  %v2292 = vor.u32 %v2288, %v2291
  %v2293 = vrot.slane %v2068, 4
  %v2294 = vrot.slane %v2071, 5
  %v2295 = vor.u32 %v2293, %v2294
  %v2296 = vsel %vm364, %v2292, %v2295
  %v2298 = vshrl.u32 %v2274, 16
  %v2300 = vrot.slane %v2298, 4
  %v2301 = vshll.u32 %v2274, 16
  %v2303 = vrot.slane %v2301, 5
  %v2304 = vor.u32 %v2300, %v2303
  %v2305 = vsel %vm364, %v2295, %v2304
  %v2315 = vunpack.c.l.b16 %v2276
  %v2316 = vunpack.c.l.b16 %v2277
  %v2317 = vunpack.c.l.b16 %v2278
  %v2318 = vunpack.c.l.b16 %v2279
  %v2319 = vunpack.c.l.b16 %v2280
  %v2320 = vunpack.c.l.b16 %v2281
  %v2321 = vunpack.c.l.b16 %v2282
  %v2322 = vunpack.c.l.b16 %v2283
  %v2323 = vunpack.c.l.b16 %v2284
  %v2324 = vpack.c.b16 %v2316, %v2315
  %v2325 = vpack.c.b16 %v2318, %v2317
  %v2326 = vpack.c.b16 %v2320, %v2319
  %v2327 = vpack.c.b16 %v2322, %v2321
  %v2328 = vpack.c.b16 %v2323, %v2323
  %v2334 = vsel %vm188, %v2296, 0
  %v2337 = vsel %vm188, %v2305, 0
  %v2340 = vsel %vm195, %v2328, 0
  %2342 = vmatprep.subr.bf16.mxu0 0
  %2343 = vmatpush1.bf16.msra.mxu0 %v2324
  %2344 = vmatprep.subr.bf16.mxu0 0
  %2345 = vmatpush1.bf16.msra.mxu0 %v2325
  %2346 = vmatprep.subr.bf16.mxu0 0
  %2347 = vmatpush1.bf16.msra.mxu0 %v2326
  %2348 = vmatprep.subr.bf16.mxu0 0
  %2349 = vmatpush1.bf16.msra.mxu0 %v2327
  %2350 = vmatprep.subr.bf16.mxu0 0
  %2351 = vmatpush1.bf16.msra.mxu0 %v2340
  %2352 = vmatprep.subr.bf16.mxu0 0
  %2353 = vmatpush1.bf16.msra.mxu0 0
  %2354 = vmatprep.subr.bf16.mxu0 0
  %2355 = vmatpush1.bf16.msra.mxu0 0
  %2356 = vmatprep.subr.bf16.mxu0 0
  %2357 = vmatpush1.bf16.msra.mxu0 0
  %2358 = vmatprep.subr.bf16.mxu0 0
  %2359 = vmatpush1.bf16.msra.mxu0 0
  %2360 = vmatprep.subr.bf16.mxu0 0
  %2361 = vmatpush1.bf16.msra.mxu0 0
  %2362 = vmatprep.subr.bf16.mxu0 0
  %2363 = vmatpush1.bf16.msra.mxu0 0
  %2364 = vmatprep.subr.bf16.mxu0 0
  %2365 = vmatpush1.bf16.msra.mxu0 0
  %2366 = vmatprep.subr.bf16.mxu0 0
  %2367 = vmatpush1.bf16.msra.mxu0 0
  %2368 = vmatprep.subr.bf16.mxu0 0
  %2369 = vmatpush1.bf16.msra.mxu0 0
  %2370 = vmatprep.subr.bf16.mxu0 0
  %2371 = vmatpush1.bf16.msra.mxu0 0
  %2372 = vmatprep.subr.bf16.mxu0 0
  %2373 = vmatpush1.bf16.msra.mxu0 0
  %2374 = vmatprep.mubr.bf16.mxu0 0
  %2375 = vmatmul.mubr.bf16.gmra.mrb[0].mxu0 %v2334
  %v2376 = vpop.f32.mrb[0].mxu0
  %v2377 = vadd.f32 0.0, %v2376
  %v2378 = vpop.f32.mrb[0].mxu0
  %v2379 = vpop.f32.mrb[0].mxu0
  %v2380 = vadd.f32 0.0, %v2379
  %v2381 = vpop.f32.mrb[0].mxu0
  %2382 = vmatprep.mubr.bf16.mxu0 0
  %2383 = vmatmul.mubr.bf16.gmra.mrb[0].mxu0 %v2337
  %v2384 = vpop.f32.mrb[0].mxu0
  %v2385 = vadd.f32 0.0, %v2384
  %v2386 = vpop.f32.mrb[0].mxu0
  %v2387 = vpop.f32.mrb[0].mxu0
  %v2388 = vadd.f32 0.0, %v2387
  %v2389 = vpop.f32.mrb[0].mxu0
  %2390 = vdwg.mxu0
  %v2391 = vmul.f32 %v102, %v2156
  %v2392 = vmul.f32 %v103, %v2159
  %v2393 = vmul.f32 %v104, %v2164
  %v2394 = vmul.f32 %v105, %v2167
  %v2395 = vadd.f32 %v2391, %v2260
  %v2396 = vadd.f32 %v2392, %v2263
  %v2397 = vadd.f32 %v2393, %v2268
  %v2398 = vadd.f32 %v2394, %v2271
  %v2399 = vmul.f32 %v118, %v2377
  %v2400 = vmul.f32 %v119, %v2380
  %v2401 = vmul.f32 %v120, %v2385
  %v2402 = vmul.f32 %v121, %v2388
  %v2403 = vadd.f32 %v2395, %v2399
  %v2404 = vadd.f32 %v2396, %v2400
  %v2405 = vadd.f32 %v2397, %v2401
  %v2406 = vadd.f32 %v2398, %v2402
  %s2407 = scalar_lea.vmem %s2, 2
  %v2408 = vld [vmem:[%s2407] sm:$0x1]
  %v2410 = vlaneseq
  %v2411 = vshrl.u32 %v2410, 7
  %v2412 = vsub.s32 0, %v2411
  %v2413 = vrot.slane %v2408, %v2412
  %v2415 = vadd.f32 %v2403, %v2413
  %v2416 = vadd.f32 %v2404, %v2413
  %v2417 = vadd.f32 %v2405, %v2413
  %v2418 = vadd.f32 %v2406, %v2413
  %vm2419 = vcmp.ge.f32.partialorder %v2415, 0.0
  %vm2420 = vcmp.ge.f32.partialorder %v2416, 0.0
  %vm2421 = vcmp.ge.f32.partialorder %v2417, 0.0
  %vm2422 = vcmp.ge.f32.partialorder %v2418, 0.0
  %s2423 = scalar_lea.vmem %s3, 2
  %v2424 = vld [vmem:[%s2423] sm:$0x1]
  %v2426 = vlaneseq
  %v2427 = vshrl.u32 %v2426, 7
  %v2428 = vsub.s32 0, %v2427
  %v2429 = vrot.slane %v2424, %v2428
  %v2431 = vmul.f32 %v2429, %v2415
  %v2432 = vmul.f32 %v2429, %v2416
  %v2433 = vmul.f32 %v2429, %v2417
  %v2434 = vmul.f32 %v2429, %v2418
  %v2435 = vsel %vm2419, %v2415, %v2431
  %v2436 = vsel %vm2420, %v2416, %v2432
  %v2437 = vsel %vm2421, %v2417, %v2433
  %v2438 = vsel %vm2422, %v2418, %v2434
  %v2439 = vpack.c.bf16 %v2436, %v2435
  %v2440 = vpack.c.bf16 %v2438, %v2437
  %v2443 = vrot.slane %v2439, 4
  %v2444 = vrot.slane %v2440, 4
  %v2445 = vsel %vm262, %v2443, %v2444
  %2449 = vst.msk [vmem:[#allocation2] sm:$0xf0] %vm55, %v2443
  %2450 = vst.msk [vmem:[#allocation2 + $0x8] sm:$0xff] %vm57, %v2445
  %2451 = vst.msk [vmem:[#allocation2 + $0x10] sm:$0xf] %vm59, %v2444
  %v2452 = vld [vmem:[#allocation3] sm:$0xff]
  %v2453 = vld [vmem:[#allocation3 + $0x8] sm:$0xff]
  %v2454 = vld [vmem:[#allocation3 + $0x10] sm:$0xff]
  %v2455 = vld [vmem:[#allocation3 + $0x18] sm:$0xff]
  %v2456 = vld [vmem:[#allocation2] sm:$0xf8]
  %v2457 = vld [vmem:[#allocation2 + $0x8] sm:$0xff]
  %v2458 = vld [vmem:[#allocation2 + $0x10] sm:$0xf]
  %s2459 = scalar_lea.vmem %s4, 324
  %v2460 = vld [vmem:[%s2459] sm:$0xf]
  %v2461 = vld [vmem:[%s2459 + $0x4] sm:$0xf]
  %v2462 = vld [vmem:[%s2459 + $0x8] sm:$0xf]
  %v2463 = vld [vmem:[%s2459 + $0xc] sm:$0xf]
  %v2464 = vld [vmem:[%s2459 + $0x10] sm:$0xf]
  %v2465 = vld [vmem:[%s2459 + $0x14] sm:$0xf]
  %v2466 = vld [vmem:[%s2459 + $0x18] sm:$0xf]
  %v2467 = vld [vmem:[%s2459 + $0x1c] sm:$0xf]
  %v2468 = vld [vmem:[%s2459 + $0x20] sm:$0x3]
  %v2470 = vshrl.u32 %v2456, 16
  %v2472 = vrot.slane %v2470, 3
  %v2473 = vshll.u32 %v2456, 16
  %v2475 = vrot.slane %v2473, 4
  %v2476 = vor.u32 %v2472, %v2475
  %v2478 = vshrl.u32 %v2457, 16
  %v2480 = vrot.slane %v2478, 3
  %v2481 = vshll.u32 %v2457, 16
  %v2483 = vrot.slane %v2481, 4
  %v2484 = vor.u32 %v2480, %v2483
  %v2485 = vsel %vm134, %v2476, %v2484
  %v2487 = vshrl.u32 %v2458, 16
  %v2489 = vrot.slane %v2487, 3
  %v2490 = vshll.u32 %v2458, 16
  %v2492 = vrot.slane %v2490, 4
  %v2493 = vor.u32 %v2489, %v2492
  %v2494 = vsel %vm134, %v2484, %v2493
  %v2504 = vunpack.c.l.b16 %v2460
  %v2505 = vunpack.c.l.b16 %v2461
  %v2506 = vunpack.c.l.b16 %v2462
  %v2507 = vunpack.c.l.b16 %v2463
  %v2508 = vunpack.c.l.b16 %v2464
  %v2509 = vunpack.c.l.b16 %v2465
  %v2510 = vunpack.c.l.b16 %v2466
  %v2511 = vunpack.c.l.b16 %v2467
  %v2512 = vunpack.c.l.b16 %v2468
  %v2513 = vpack.c.b16 %v2505, %v2504
  %v2514 = vpack.c.b16 %v2507, %v2506
  %v2515 = vpack.c.b16 %v2509, %v2508
  %v2516 = vpack.c.b16 %v2511, %v2510
  %v2517 = vpack.c.b16 %v2512, %v2512
  %v2523 = vsel %vm188, %v2485, 0
  %v2526 = vsel %vm188, %v2494, 0
  %v2529 = vsel %vm195, %v2517, 0
  %2531 = vmatprep.subr.bf16.mxu0 0
  %2532 = vmatpush1.bf16.msra.mxu0 %v2513
  %2533 = vmatprep.subr.bf16.mxu0 0
  %2534 = vmatpush1.bf16.msra.mxu0 %v2514
  %2535 = vmatprep.subr.bf16.mxu0 0
  %2536 = vmatpush1.bf16.msra.mxu0 %v2515
  %2537 = vmatprep.subr.bf16.mxu0 0
  %2538 = vmatpush1.bf16.msra.mxu0 %v2516
  %2539 = vmatprep.subr.bf16.mxu0 0
  %2540 = vmatpush1.bf16.msra.mxu0 %v2529
  %2541 = vmatprep.subr.bf16.mxu0 0
  %2542 = vmatpush1.bf16.msra.mxu0 0
  %2543 = vmatprep.subr.bf16.mxu0 0
  %2544 = vmatpush1.bf16.msra.mxu0 0
  %2545 = vmatprep.subr.bf16.mxu0 0
  %2546 = vmatpush1.bf16.msra.mxu0 0
  %2547 = vmatprep.subr.bf16.mxu0 0
  %2548 = vmatpush1.bf16.msra.mxu0 0
  %2549 = vmatprep.subr.bf16.mxu0 0
  %2550 = vmatpush1.bf16.msra.mxu0 0
  %2551 = vmatprep.subr.bf16.mxu0 0
  %2552 = vmatpush1.bf16.msra.mxu0 0
  %2553 = vmatprep.subr.bf16.mxu0 0
  %2554 = vmatpush1.bf16.msra.mxu0 0
  %2555 = vmatprep.subr.bf16.mxu0 0
  %2556 = vmatpush1.bf16.msra.mxu0 0
  %2557 = vmatprep.subr.bf16.mxu0 0
  %2558 = vmatpush1.bf16.msra.mxu0 0
  %2559 = vmatprep.subr.bf16.mxu0 0
  %2560 = vmatpush1.bf16.msra.mxu0 0
  %2561 = vmatprep.subr.bf16.mxu0 0
  %2562 = vmatpush1.bf16.msra.mxu0 0
  %2563 = vmatprep.mubr.bf16.mxu0 0
  %2564 = vmatmul.mubr.bf16.gmra.mrb[0].mxu0 %v2523
  %v2565 = vpop.f32.mrb[0].mxu0
  %v2566 = vadd.f32 0.0, %v2565
  %v2567 = vpop.f32.mrb[0].mxu0
  %v2568 = vpop.f32.mrb[0].mxu0
  %v2569 = vadd.f32 0.0, %v2568
  %v2570 = vpop.f32.mrb[0].mxu0
  %2571 = vmatprep.mubr.bf16.mxu0 0
  %2572 = vmatmul.mubr.bf16.gmra.mrb[0].mxu0 %v2526
  %v2573 = vpop.f32.mrb[0].mxu0
  %v2574 = vadd.f32 0.0, %v2573
  %v2575 = vpop.f32.mrb[0].mxu0
  %v2576 = vpop.f32.mrb[0].mxu0
  %v2577 = vadd.f32 0.0, %v2576
  %v2578 = vpop.f32.mrb[0].mxu0
  %2579 = vdwg.mxu0
  %v2580 = vld [vmem:[#allocation2] sm:$0xf0]
  %s2581 = scalar_lea.vmem %s4, 360
  %v2582 = vld [vmem:[%s2581] sm:$0xf]
  %v2583 = vld [vmem:[%s2581 + $0x4] sm:$0xf]
  %v2584 = vld [vmem:[%s2581 + $0x8] sm:$0xf]
  %v2585 = vld [vmem:[%s2581 + $0xc] sm:$0xf]
  %v2586 = vld [vmem:[%s2581 + $0x10] sm:$0xf]
  %v2587 = vld [vmem:[%s2581 + $0x14] sm:$0xf]
  %v2588 = vld [vmem:[%s2581 + $0x18] sm:$0xf]
  %v2589 = vld [vmem:[%s2581 + $0x1c] sm:$0xf]
  %v2590 = vld [vmem:[%s2581 + $0x20] sm:$0x3]
  %v2594 = vrot.slane %v2580, 4
  %v2595 = vrot.slane %v2457, 4
  %v2596 = vsel %vm262, %v2594, %v2595
  %v2597 = vrot.slane %v2458, 4
  %v2598 = vsel %vm262, %v2595, %v2597
  %v2608 = vunpack.c.l.b16 %v2582
  %v2609 = vunpack.c.l.b16 %v2583
  %v2610 = vunpack.c.l.b16 %v2584
  %v2611 = vunpack.c.l.b16 %v2585
  %v2612 = vunpack.c.l.b16 %v2586
  %v2613 = vunpack.c.l.b16 %v2587
  %v2614 = vunpack.c.l.b16 %v2588
  %v2615 = vunpack.c.l.b16 %v2589
  %v2616 = vunpack.c.l.b16 %v2590
  %v2617 = vpack.c.b16 %v2609, %v2608
  %v2618 = vpack.c.b16 %v2611, %v2610
  %v2619 = vpack.c.b16 %v2613, %v2612
  %v2620 = vpack.c.b16 %v2615, %v2614
  %v2621 = vpack.c.b16 %v2616, %v2616
  %v2627 = vsel %vm188, %v2596, 0
  %v2630 = vsel %vm188, %v2598, 0
  %v2633 = vsel %vm195, %v2621, 0
  %2635 = vmatprep.subr.bf16.mxu0 0
  %2636 = vmatpush1.bf16.msra.mxu0 %v2617
  %2637 = vmatprep.subr.bf16.mxu0 0
  %2638 = vmatpush1.bf16.msra.mxu0 %v2618
  %2639 = vmatprep.subr.bf16.mxu0 0
  %2640 = vmatpush1.bf16.msra.mxu0 %v2619
  %2641 = vmatprep.subr.bf16.mxu0 0
  %2642 = vmatpush1.bf16.msra.mxu0 %v2620
  %2643 = vmatprep.subr.bf16.mxu0 0
  %2644 = vmatpush1.bf16.msra.mxu0 %v2633
  %2645 = vmatprep.subr.bf16.mxu0 0
  %2646 = vmatpush1.bf16.msra.mxu0 0
  %2647 = vmatprep.subr.bf16.mxu0 0
  %2648 = vmatpush1.bf16.msra.mxu0 0
  %2649 = vmatprep.subr.bf16.mxu0 0
  %2650 = vmatpush1.bf16.msra.mxu0 0
  %2651 = vmatprep.subr.bf16.mxu0 0
  %2652 = vmatpush1.bf16.msra.mxu0 0
  %2653 = vmatprep.subr.bf16.mxu0 0
  %2654 = vmatpush1.bf16.msra.mxu0 0
  %2655 = vmatprep.subr.bf16.mxu0 0
  %2656 = vmatpush1.bf16.msra.mxu0 0
  %2657 = vmatprep.subr.bf16.mxu0 0
  %2658 = vmatpush1.bf16.msra.mxu0 0
  %2659 = vmatprep.subr.bf16.mxu0 0
  %2660 = vmatpush1.bf16.msra.mxu0 0
  %2661 = vmatprep.subr.bf16.mxu0 0
  %2662 = vmatpush1.bf16.msra.mxu0 0
  %2663 = vmatprep.subr.bf16.mxu0 0
  %2664 = vmatpush1.bf16.msra.mxu0 0
  %2665 = vmatprep.subr.bf16.mxu0 0
  %2666 = vmatpush1.bf16.msra.mxu0 0
  %2667 = vmatprep.mubr.bf16.mxu0 0
  %2668 = vmatmul.mubr.bf16.gmra.mrb[0].mxu0 %v2627
  %v2669 = vpop.f32.mrb[0].mxu0
  %v2670 = vadd.f32 0.0, %v2669
  %v2671 = vpop.f32.mrb[0].mxu0
  %v2672 = vpop.f32.mrb[0].mxu0
  %v2673 = vadd.f32 0.0, %v2672
  %v2674 = vpop.f32.mrb[0].mxu0
  %2675 = vmatprep.mubr.bf16.mxu0 0
  %2676 = vmatmul.mubr.bf16.gmra.mrb[0].mxu0 %v2630
  %v2677 = vpop.f32.mrb[0].mxu0
  %v2678 = vadd.f32 0.0, %v2677
  %v2679 = vpop.f32.mrb[0].mxu0
  %v2680 = vpop.f32.mrb[0].mxu0
  %v2681 = vadd.f32 0.0, %v2680
  %v2682 = vpop.f32.mrb[0].mxu0
  %2683 = vdwg.mxu0
  %v2684 = vld [vmem:[#allocation2 + $0x10] sm:$0x1f]
  %s2685 = scalar_lea.vmem %s4, 396
  %v2686 = vld [vmem:[%s2685] sm:$0xf]
  %v2687 = vld [vmem:[%s2685 + $0x4] sm:$0xf]
  %v2688 = vld [vmem:[%s2685 + $0x8] sm:$0xf]
  %v2689 = vld [vmem:[%s2685 + $0xc] sm:$0xf]
  %v2690 = vld [vmem:[%s2685 + $0x10] sm:$0xf]
  %v2691 = vld [vmem:[%s2685 + $0x14] sm:$0xf]
  %v2692 = vld [vmem:[%s2685 + $0x18] sm:$0xf]
  %v2693 = vld [vmem:[%s2685 + $0x1c] sm:$0xf]
  %v2694 = vld [vmem:[%s2685 + $0x20] sm:$0x3]
  %v2696 = vshrl.u32 %v2580, 16
  %v2698 = vrot.slane %v2696, 4
  %v2699 = vshll.u32 %v2580, 16
  %v2701 = vrot.slane %v2699, 5
  %v2702 = vor.u32 %v2698, %v2701
  %v2703 = vrot.slane %v2478, 4
  %v2704 = vrot.slane %v2481, 5
  %v2705 = vor.u32 %v2703, %v2704
  %v2706 = vsel %vm364, %v2702, %v2705
  %v2708 = vshrl.u32 %v2684, 16
  %v2710 = vrot.slane %v2708, 4
  %v2711 = vshll.u32 %v2684, 16
  %v2713 = vrot.slane %v2711, 5
  %v2714 = vor.u32 %v2710, %v2713
  %v2715 = vsel %vm364, %v2705, %v2714
  %v2725 = vunpack.c.l.b16 %v2686
  %v2726 = vunpack.c.l.b16 %v2687
  %v2727 = vunpack.c.l.b16 %v2688
  %v2728 = vunpack.c.l.b16 %v2689
  %v2729 = vunpack.c.l.b16 %v2690
  %v2730 = vunpack.c.l.b16 %v2691
  %v2731 = vunpack.c.l.b16 %v2692
  %v2732 = vunpack.c.l.b16 %v2693
  %v2733 = vunpack.c.l.b16 %v2694
  %v2734 = vpack.c.b16 %v2726, %v2725
  %v2735 = vpack.c.b16 %v2728, %v2727
  %v2736 = vpack.c.b16 %v2730, %v2729
  %v2737 = vpack.c.b16 %v2732, %v2731
  %v2738 = vpack.c.b16 %v2733, %v2733
  %v2744 = vsel %vm188, %v2706, 0
  %v2747 = vsel %vm188, %v2715, 0
  %v2750 = vsel %vm195, %v2738, 0
  %2752 = vmatprep.subr.bf16.mxu0 0
  %2753 = vmatpush1.bf16.msra.mxu0 %v2734
  %2754 = vmatprep.subr.bf16.mxu0 0
  %2755 = vmatpush1.bf16.msra.mxu0 %v2735
  %2756 = vmatprep.subr.bf16.mxu0 0
  %2757 = vmatpush1.bf16.msra.mxu0 %v2736
  %2758 = vmatprep.subr.bf16.mxu0 0
  %2759 = vmatpush1.bf16.msra.mxu0 %v2737
  %2760 = vmatprep.subr.bf16.mxu0 0
  %2761 = vmatpush1.bf16.msra.mxu0 %v2750
  %2762 = vmatprep.subr.bf16.mxu0 0
  %2763 = vmatpush1.bf16.msra.mxu0 0
  %2764 = vmatprep.subr.bf16.mxu0 0
  %2765 = vmatpush1.bf16.msra.mxu0 0
  %2766 = vmatprep.subr.bf16.mxu0 0
  %2767 = vmatpush1.bf16.msra.mxu0 0
  %2768 = vmatprep.subr.bf16.mxu0 0
  %2769 = vmatpush1.bf16.msra.mxu0 0
  %2770 = vmatprep.subr.bf16.mxu0 0
  %2771 = vmatpush1.bf16.msra.mxu0 0
  %2772 = vmatprep.subr.bf16.mxu0 0
  %2773 = vmatpush1.bf16.msra.mxu0 0
  %2774 = vmatprep.subr.bf16.mxu0 0
  %2775 = vmatpush1.bf16.msra.mxu0 0
  %2776 = vmatprep.subr.bf16.mxu0 0
  %2777 = vmatpush1.bf16.msra.mxu0 0
  %2778 = vmatprep.subr.bf16.mxu0 0
  %2779 = vmatpush1.bf16.msra.mxu0 0
  %2780 = vmatprep.subr.bf16.mxu0 0
  %2781 = vmatpush1.bf16.msra.mxu0 0
  %2782 = vmatprep.subr.bf16.mxu0 0
  %2783 = vmatpush1.bf16.msra.mxu0 0
  %2784 = vmatprep.mubr.bf16.mxu0 0
  %2785 = vmatmul.mubr.bf16.gmra.mrb[0].mxu0 %v2744
  %v2786 = vpop.f32.mrb[0].mxu0
  %v2787 = vadd.f32 0.0, %v2786
  %v2788 = vpop.f32.mrb[0].mxu0
  %v2789 = vpop.f32.mrb[0].mxu0
  %v2790 = vadd.f32 0.0, %v2789
  %v2791 = vpop.f32.mrb[0].mxu0
  %2792 = vmatprep.mubr.bf16.mxu0 0
  %2793 = vmatmul.mubr.bf16.gmra.mrb[0].mxu0 %v2747
  %v2794 = vpop.f32.mrb[0].mxu0
  %v2795 = vadd.f32 0.0, %v2794
  %v2796 = vpop.f32.mrb[0].mxu0
  %v2797 = vpop.f32.mrb[0].mxu0
  %v2798 = vadd.f32 0.0, %v2797
  %v2799 = vpop.f32.mrb[0].mxu0
  %2800 = vdwg.mxu0
  %v2801 = vmul.f32 %v102, %v2566
  %v2802 = vmul.f32 %v103, %v2569
  %v2803 = vmul.f32 %v104, %v2574
  %v2804 = vmul.f32 %v105, %v2577
  %v2805 = vadd.f32 %v2801, %v2670
  %v2806 = vadd.f32 %v2802, %v2673
  %v2807 = vadd.f32 %v2803, %v2678
  %v2808 = vadd.f32 %v2804, %v2681
  %v2809 = vmul.f32 %v118, %v2787
  %v2810 = vmul.f32 %v119, %v2790
  %v2811 = vmul.f32 %v120, %v2795
  %v2812 = vmul.f32 %v121, %v2798
  %v2813 = vadd.f32 %v2805, %v2809
  %v2814 = vadd.f32 %v2806, %v2810
  %v2815 = vadd.f32 %v2807, %v2811
  %v2816 = vadd.f32 %v2808, %v2812
  %v2817 = vadd.f32 %v2452, %v2813
  %v2818 = vadd.f32 %v2453, %v2814
  %v2819 = vadd.f32 %v2454, %v2815
  %v2820 = vadd.f32 %v2455, %v2816
  %2821 = vst [vmem:[#allocation3] sm:$0xff] %v2817
  %2822 = vst [vmem:[#allocation3 + $0x8] sm:$0xff] %v2818
  %2823 = vst [vmem:[#allocation3 + $0x10] sm:$0xff] %v2819
  %2824 = vst [vmem:[#allocation3 + $0x18] sm:$0xff] %v2820
  %v2825 = vld [vmem:[#allocation3] sm:$0xff]
  %v2826 = vld [vmem:[#allocation3 + $0x8] sm:$0xff]
  %v2827 = vld [vmem:[#allocation3 + $0x10] sm:$0xff]
  %v2828 = vld [vmem:[#allocation3 + $0x18] sm:$0xff]
  %v2829 = vld [vmem:[%s5] sm:$0x1]
  %v2831 = vlaneseq
  %v2832 = vshrl.u32 %v2831, 7
  %v2833 = vsub.s32 0, %v2832
  %v2834 = vrot.slane %v2829, %v2833
  %v2836 = vadd.f32 %v2825, %v2834
  %v2837 = vadd.f32 %v2826, %v2834
  %v2838 = vadd.f32 %v2827, %v2834
  %v2839 = vadd.f32 %v2828, %v2834
  %vm2840 = vcmp.ge.f32.partialorder %v2836, 0.0
  %vm2841 = vcmp.ge.f32.partialorder %v2837, 0.0
  %vm2842 = vcmp.ge.f32.partialorder %v2838, 0.0
  %vm2843 = vcmp.ge.f32.partialorder %v2839, 0.0
  %v2844 = vld [vmem:[%s6] sm:$0x1]
  %v2846 = vlaneseq
  %v2847 = vshrl.u32 %v2846, 7
  %v2848 = vsub.s32 0, %v2847
  %v2849 = vrot.slane %v2844, %v2848
  %v2851 = vmul.f32 %v2849, %v2836
  %v2852 = vmul.f32 %v2849, %v2837
  %v2853 = vmul.f32 %v2849, %v2838
  %v2854 = vmul.f32 %v2849, %v2839
  %v2855 = vsel %vm2840, %v2836, %v2851
  %v2856 = vsel %vm2841, %v2837, %v2852
  %v2857 = vsel %vm2842, %v2838, %v2853
  %v2858 = vsel %vm2843, %v2839, %v2854
  %2859 = vst [vmem:[%s7] sm:$0xff] %v2855
  %2860 = vst [vmem:[%s7 + $0x8] sm:$0xff] %v2856
  %2861 = vst [vmem:[%s7 + $0x10] sm:$0xff] %v2857
  %2862 = vst [vmem:[%s7 + $0x18] sm:$0xff] %v2858
  // Predicated region
  $region30: #{basic_block_forward.1} parent=0 // pred_check
    _
  $region31: #{basic_block_forward.1} parent=0 // pred_check_branch
    %2864 = sbr.rel (0) target = $region33
  $region32: #{basic_block_forward.1} parent=0 // pred_region
    _
  $region33: #{basic_block_forward.1} parent=0 // pred_fallthru
    _
  // Predicated region
  $region34: #{basic_block_forward.1} parent=0 // pred_check
    _
  $region35: #{basic_block_forward.1} parent=0 // pred_check_branch
    %2866 = sbr.rel (0) target = $region37
  $region36: #{basic_block_forward.1} parent=0 // pred_region
    _
  $region37: #{basic_block_forward.1} parent=0 // pred_fallthru
    _

</llo_original>
